<compile_context>
chip_gen: v7x
topology: tpu7x:2x2x1
jax: 0.10.0
libtpu: 0.0.40
codegen_flags: <defaults>
</compile_context>

<pallas_src>
import jax
import jax.numpy as jnp
from jax import lax
from jax.experimental import pallas as pl
from jax.experimental.pallas import tpu as pltpu

C_IN, C_OUT, KH, KW = 3, 3, 3, 3


def _hint8(i):
    """pl.multiple_of hint for traced row offsets; pass ints through."""
    if isinstance(i, int):
        return i
    return pl.multiple_of(i, 8)


def _maybe_fori(n, body, unroll_limit=4):
    """Run body(i) for i in [0, n): Python-unrolled if short, else fori_loop."""
    if n <= unroll_limit:
        for i in range(n):
            body(i)
    else:
        def wrapped(i, carry):
            body(i)
            return carry
        lax.fori_loop(0, n, wrapped, 0)


def conv3x3_tanh_kernel(w_ref, b_ref, xm_ref, xt_ref, xb_ref, o_ref,
                        tap_l, tap_c, tap_r):
    # w_ref  : SMEM (81,) f32, OIHW-flattened weights
    # b_ref  : SMEM (3,)  f32
    # xm_ref : VMEM (1, C_IN, TH, W)  main input tile (rows [h*TH, h*TH+TH))
    # xt_ref : VMEM (1, C_IN, 8, W)   8-row block just above the tile (clamped)
    # xb_ref : VMEM (1, C_IN, 8, W)   8-row block just below the tile (clamped)
    # o_ref  : VMEM (1, C_OUT, TH, W)
    # tap_l/tap_c/tap_r : VMEM (C_IN, TH+16, W) scratch slabs holding the
    #     kw = 0 / 1 / 2 column taps of the H-haloed tile.  Interior rows live
    #     at [8, TH+8); the top halo row is at 7, the bottom halo at TH+8.
    TH, W = o_ref.shape[2], o_ref.shape[3]
    n_strips = TH // 8
    h = pl.program_id(1)
    nh = pl.num_programs(1)

    f32 = jnp.float32
    zcol8 = jnp.zeros((8, 1), f32)
    zcol1 = jnp.zeros((1, 1), f32)

    def shifted(x, zc):
        # x: (rows, W).  Left tap[x] = in[x-1] (0 at col 0);
        #                right tap[x] = in[x+1] (0 at col W-1).
        xl = jnp.concatenate([zc, x[:, :W - 1]], axis=1)
        xr = jnp.concatenate([x[:, 1:], zc], axis=1)
        return xl, xr

    # ---------------- prologue: build the three column-tap slabs -------------
    def build_block(b):
        r0 = _hint8(b * 8)
        for ci in range(C_IN):
            xc = xm_ref[0, ci, pl.ds(r0, 8), :].astype(f32)
            xl, xr = shifted(xc, zcol8)
            tap_c[ci, pl.ds(r0 + 8, 8), :] = xc
            tap_l[ci, pl.ds(r0 + 8, 8), :] = xl
            tap_r[ci, pl.ds(r0 + 8, 8), :] = xr

    _maybe_fori(n_strips, build_block)

    # Top halo row (pad row 7): last row of the block above, or zeros at h==0.
    @pl.when(h > 0)
    def _():
        for ci in range(C_IN):
            xc = xt_ref[0, ci, 7:8, :].astype(f32)
            xl, xr = shifted(xc, zcol1)
            tap_c[ci, 7:8, :] = xc
            tap_l[ci, 7:8, :] = xl
            tap_r[ci, 7:8, :] = xr

    @pl.when(h == 0)
    def _():
        z = jnp.zeros((C_IN, 1, W), f32)
        tap_c[:, 7:8, :] = z
        tap_l[:, 7:8, :] = z
        tap_r[:, 7:8, :] = z

    # Bottom halo row (pad row TH+8): first row of the block below, or zeros.
    @pl.when(h < nh - 1)
    def _():
        for ci in range(C_IN):
            xc = xb_ref[0, ci, 0:1, :].astype(f32)
            xl, xr = shifted(xc, zcol1)
            tap_c[ci, TH + 8:TH + 9, :] = xc
            tap_l[ci, TH + 8:TH + 9, :] = xl
            tap_r[ci, TH + 8:TH + 9, :] = xr

    @pl.when(h == nh - 1)
    def _():
        z = jnp.zeros((C_IN, 1, W), f32)
        tap_c[:, TH + 8:TH + 9, :] = z
        tap_l[:, TH + 8:TH + 9, :] = z
        tap_r[:, TH + 8:TH + 9, :] = z

    # ---------------- hoisted constants (bias planes, scalar weights) --------
    wv = [w_ref[i] for i in range(C_OUT * C_IN * KH * KW)]        # SMEM scalars
    bias_plane = [jnp.full((8, W), b_ref[co], f32) for co in range(C_OUT)]
    taps = (tap_l, tap_c, tap_r)                                   # kw = 0,1,2

    # ---------------- main loop: 27-tap VPU conv + tanh, 8-row strips --------
    def do_strip(s):
        r0 = _hint8(s * 8)
        acc = [bias_plane[co] for co in range(C_OUT)]
        for ci in range(C_IN):
            for kh in range(KH):
                row = r0 + 7 + kh       # pad-row of the first tap row for kh
                for kw in range(KW):
                    t = taps[kw][ci, pl.ds(row, 8), :]
                    for co in range(C_OUT):
                        widx = ((co * C_IN + ci) * KH + kh) * KW + kw
                        acc[co] = acc[co] + t * wv[widx]
        for co in range(C_OUT):
            o_ref[0, co, pl.ds(r0, 8), :] = jnp.tanh(acc[co]).astype(o_ref.dtype)

    _maybe_fori(n_strips, do_strip)


def _pick_tile_h(H):
    # Prefer the largest tile that still gives >= 2 grid steps along H
    # (double-buffered DMA; v7x dual-TC / megacore friendly).  For 512x512
    # this picks 128; sweep 128 vs 256 on v6e/v5e.
    for th in (128, 64, 32, 16, 8):
        if H % th == 0 and H // th >= 2:
            return th
    return H


def conv_tanh(x, weight, bias, *, tile_h=None):
    """tanh(conv2d(x, weight, bias, stride=1, padding=1)).

    x: (N, 3, H, W); weight: (3, 3, 3, 3) OIHW; bias: (3,).
    H must be a multiple of 8 and W a multiple of 128 (lane-dense stores)."""
    N, C, H, W = x.shape
    assert C == C_IN
    assert H % 8 == 0, "H must be a multiple of 8"
    assert W % 128 == 0, "W must be a multiple of 128 (lane-dense output)"
    if tile_h is None:
        tile_h = _pick_tile_h(H)
    assert H % tile_h == 0 and tile_h % 8 == 0
    nh = H // tile_h
    thb = tile_h // 8          # tile height in 8-row blocks
    nhb = H // 8               # image height in 8-row blocks

    w_flat = weight.astype(jnp.float32).reshape(-1)
    b = bias.astype(jnp.float32)

    return pl.pallas_call(
        conv3x3_tanh_kernel,
        out_shape=jax.ShapeDtypeStruct((N, C_OUT, H, W), x.dtype),
        grid=(N, nh),
        in_specs=[
            pl.BlockSpec(memory_space=pltpu.MemorySpace.SMEM),      # weights
            pl.BlockSpec(memory_space=pltpu.MemorySpace.SMEM),      # bias
            # main tile
            pl.BlockSpec((1, C_IN, tile_h, W), lambda n, h: (n, 0, h, 0)),
            # 8-row block just above the tile (clamped at the top edge;
            # replaced by zeros inside the kernel when h == 0)
            pl.BlockSpec((1, C_IN, 8, W),
                         lambda n, h: (n, 0, jnp.maximum(h * thb - 1, 0), 0)),
            # 8-row block just below the tile (clamped at the bottom edge;
            # replaced by zeros inside the kernel when h == nh - 1)
            pl.BlockSpec((1, C_IN, 8, W),
                         lambda n, h: (n, 0, jnp.minimum((h + 1) * thb, nhb - 1), 0)),
        ],
        out_specs=pl.BlockSpec((1, C_OUT, tile_h, W), lambda n, h: (n, 0, h, 0)),
        scratch_shapes=[pltpu.VMEM((C_IN, tile_h + 16, W), jnp.float32)
                        for _ in range(3)],
        compiler_params=pltpu.CompilerParams(
            dimension_semantics=("parallel", "parallel")),
    )(w_flat, b, x, x, x)


if __name__ == "__main__":
    key = jax.random.PRNGKey(0)
    kx, kw_, kb = jax.random.split(key, 3)

    # Deterministic Conv2d-style init: uniform(-1/sqrt(fan_in), +1/sqrt(fan_in)).
    fan_in = C_IN * KH * KW
    bound = 1.0 / (fan_in ** 0.5)
    weight = jax.random.uniform(kw_, (C_OUT, C_IN, KH, KW), jnp.float32,
                                minval=-bound, maxval=bound)
    bias = jax.random.uniform(kb, (C_OUT,), jnp.float32,
                              minval=-bound, maxval=bound)

    # Small shapes consistent with the module (original was 1x3x512x512).
    #  - config 1: grid (2, 2), 2 strips/tile  -> Python-unrolled strip path.
    #  - config 2: grid (1, 1), 6 strips/tile  -> fori_loop strip path + both
    #    image-edge halo branches in the same tile.
    configs = [
        dict(N=2, H=32, W=128, tile_h=16),
        dict(N=1, H=48, W=128, tile_h=48),
    ]
    for i, cfg in enumerate(configs):
        kxi = jax.random.fold_in(kx, i)
        x = jax.random.normal(kxi, (cfg["N"], C_IN, cfg["H"], cfg["W"]),
                              dtype=jnp.float32)
        out = jax.block_until_ready(
            conv_tanh(x, weight, bias, tile_h=cfg["tile_h"]))

        # Reference check against XLA conv.
        ref = jnp.tanh(
            jax.lax.conv_general_dilated(
                x, weight, window_strides=(1, 1), padding=((1, 1), (1, 1)),
                dimension_numbers=("NCHW", "OIHW", "NCHW"))
            + bias[None, :, None, None])
        assert out.shape == (cfg["N"], C_OUT, cfg["H"], cfg["W"])
        err = float(jnp.max(jnp.abs(out - ref)))
        assert jnp.allclose(out, ref, atol=1e-5, rtol=1e-4), err

    print("KERNEL_OK")
</pallas_src>

<mosaic_0001>
module attributes {stable_mosaic.version = 11 : i64} {
  func.func @conv3x3_tanh_kernel(%arg0: i32, %arg1: i32, %arg2: memref<81xf32, #tpu.memory_space<smem>>, %arg3: memref<3xf32, #tpu.memory_space<smem>>, %arg4: memref<1x3x16x128xf32, #tpu.memory_space<vmem>>, %arg5: memref<1x3x8x128xf32, #tpu.memory_space<vmem>>, %arg6: memref<1x3x8x128xf32, #tpu.memory_space<vmem>>, %arg7: memref<1x3x16x128xf32, #tpu.memory_space<vmem>>, %arg8: memref<3x32x128xf32, #tpu.memory_space<vmem>>, %arg9: memref<3x32x128xf32, #tpu.memory_space<vmem>>, %arg10: memref<3x32x128xf32, #tpu.memory_space<vmem>>) attributes {dimension_semantics = [#tpu.dimension_semantics<parallel>, #tpu.dimension_semantics<parallel>], iteration_bounds = array<i64: 2, 2>, scalar_prefetch = 0 : i64, scratch_operands = 3 : i64, tpu.core_type = #tpu.core_type<tc>, window_params = [{transform_indices = @transform_0, window_bounds = array<i64: 81>}, {transform_indices = @transform_1, window_bounds = array<i64: 3>}, {transform_indices = @transform_2, window_bounds = array<i64: 1, 3, 16, 128>}, {transform_indices = @transform_3, window_bounds = array<i64: 1, 3, 8, 128>}, {transform_indices = @transform_4, window_bounds = array<i64: 1, 3, 8, 128>}, {transform_indices = @transform_5, window_bounds = array<i64: 1, 3, 16, 128>}]} {
    %cst = arith.constant 0.000000e+00 : f32
    %0 = vector.broadcast %cst : f32 to vector<8x1xf32>
    %cst_0 = arith.constant 0.000000e+00 : f32
    %1 = vector.broadcast %cst_0 : f32 to vector<1x1xf32>
    %c0 = arith.constant 0 : index
    %c0_1 = arith.constant 0 : index
    %c0_2 = arith.constant 0 : index
    %c0_3 = arith.constant 0 : index
    %2 = vector.load %arg4[%c0, %c0_1, %c0_2, %c0_3] : memref<1x3x16x128xf32, #tpu.memory_space<vmem>>, vector<1x1x8x128xf32>
    %3 = vector.shape_cast %2 : vector<1x1x8x128xf32> to vector<8x128xf32>
    %4 = vector.extract_strided_slice %3 {offsets = [0, 0], sizes = [8, 127], strides = [1, 1]} : vector<8x128xf32> to vector<8x127xf32>
    %5 = tpu.concatenate %0, %4 in 1 : vector<8x1xf32>, vector<8x127xf32> -> vector<8x128xf32>
    %6 = vector.extract_strided_slice %3 {offsets = [0, 1], sizes = [8, 127], strides = [1, 1]} : vector<8x128xf32> to vector<8x127xf32>
    %7 = tpu.concatenate %6, %0 in 1 : vector<8x127xf32>, vector<8x1xf32> -> vector<8x128xf32>
    %c0_4 = arith.constant 0 : index
    %c8 = arith.constant 8 : index
    %c0_5 = arith.constant 0 : index
    %8 = vector.load %arg9[%c0_4, %c8, %c0_5] : memref<3x32x128xf32, #tpu.memory_space<vmem>>, vector<1x8x128xf32>
    %9 = vector.shape_cast %8 : vector<1x8x128xf32> to vector<8x128xf32>
    %10 = vector.shape_cast %3 : vector<8x128xf32> to vector<1x8x128xf32>
    tpu.vector_store %arg9[%c0_4, %c8, %c0_5], %10 {strides = array<i32>} : memref<3x32x128xf32, #tpu.memory_space<vmem>>, vector<1x8x128xf32>,
    %c0_6 = arith.constant 0 : index
    %c8_7 = arith.constant 8 : index
    %c0_8 = arith.constant 0 : index
    %11 = vector.load %arg8[%c0_6, %c8_7, %c0_8] : memref<3x32x128xf32, #tpu.memory_space<vmem>>, vector<1x8x128xf32>
    %12 = vector.shape_cast %11 : vector<1x8x128xf32> to vector<8x128xf32>
    %13 = vector.shape_cast %5 : vector<8x128xf32> to vector<1x8x128xf32>
    tpu.vector_store %arg8[%c0_6, %c8_7, %c0_8], %13 {strides = array<i32>} : memref<3x32x128xf32, #tpu.memory_space<vmem>>, vector<1x8x128xf32>,
    %c0_9 = arith.constant 0 : index
    %c8_10 = arith.constant 8 : index
    %c0_11 = arith.constant 0 : index
    %14 = vector.load %arg10[%c0_9, %c8_10, %c0_11] : memref<3x32x128xf32, #tpu.memory_space<vmem>>, vector<1x8x128xf32>
    %15 = vector.shape_cast %14 : vector<1x8x128xf32> to vector<8x128xf32>
    %16 = vector.shape_cast %7 : vector<8x128xf32> to vector<1x8x128xf32>
    tpu.vector_store %arg10[%c0_9, %c8_10, %c0_11], %16 {strides = array<i32>} : memref<3x32x128xf32, #tpu.memory_space<vmem>>, vector<1x8x128xf32>,
    %c0_12 = arith.constant 0 : index
    %c1 = arith.constant 1 : index
    %c0_13 = arith.constant 0 : index
    %c0_14 = arith.constant 0 : index
    %17 = vector.load %arg4[%c0_12, %c1, %c0_13, %c0_14] : memref<1x3x16x128xf32, #tpu.memory_space<vmem>>, vector<1x1x8x128xf32>
    %18 = vector.shape_cast %17 : vector<1x1x8x128xf32> to vector<8x128xf32>
    %19 = vector.extract_strided_slice %18 {offsets = [0, 0], sizes = [8, 127], strides = [1, 1]} : vector<8x128xf32> to vector<8x127xf32>
    %20 = tpu.concatenate %0, %19 in 1 : vector<8x1xf32>, vector<8x127xf32> -> vector<8x128xf32>
    %21 = vector.extract_strided_slice %18 {offsets = [0, 1], sizes = [8, 127], strides = [1, 1]} : vector<8x128xf32> to vector<8x127xf32>
    %22 = tpu.concatenate %21, %0 in 1 : vector<8x127xf32>, vector<8x1xf32> -> vector<8x128xf32>
    %c1_15 = arith.constant 1 : index
    %c8_16 = arith.constant 8 : index
    %c0_17 = arith.constant 0 : index
    %23 = vector.load %arg9[%c1_15, %c8_16, %c0_17] : memref<3x32x128xf32, #tpu.memory_space<vmem>>, vector<1x8x128xf32>
    %24 = vector.shape_cast %23 : vector<1x8x128xf32> to vector<8x128xf32>
    %25 = vector.shape_cast %18 : vector<8x128xf32> to vector<1x8x128xf32>
    tpu.vector_store %arg9[%c1_15, %c8_16, %c0_17], %25 {strides = array<i32>} : memref<3x32x128xf32, #tpu.memory_space<vmem>>, vector<1x8x128xf32>,
    %c1_18 = arith.constant 1 : index
    %c8_19 = arith.constant 8 : index
    %c0_20 = arith.constant 0 : index
    %26 = vector.load %arg8[%c1_18, %c8_19, %c0_20] : memref<3x32x128xf32, #tpu.memory_space<vmem>>, vector<1x8x128xf32>
    %27 = vector.shape_cast %26 : vector<1x8x128xf32> to vector<8x128xf32>
    %28 = vector.shape_cast %20 : vector<8x128xf32> to vector<1x8x128xf32>
    tpu.vector_store %arg8[%c1_18, %c8_19, %c0_20], %28 {strides = array<i32>} : memref<3x32x128xf32, #tpu.memory_space<vmem>>, vector<1x8x128xf32>,
    %c1_21 = arith.constant 1 : index
    %c8_22 = arith.constant 8 : index
    %c0_23 = arith.constant 0 : index
    %29 = vector.load %arg10[%c1_21, %c8_22, %c0_23] : memref<3x32x128xf32, #tpu.memory_space<vmem>>, vector<1x8x128xf32>
    %30 = vector.shape_cast %29 : vector<1x8x128xf32> to vector<8x128xf32>
    %31 = vector.shape_cast %22 : vector<8x128xf32> to vector<1x8x128xf32>
    tpu.vector_store %arg10[%c1_21, %c8_22, %c0_23], %31 {strides = array<i32>} : memref<3x32x128xf32, #tpu.memory_space<vmem>>, vector<1x8x128xf32>,
    %c0_24 = arith.constant 0 : index
    %c2 = arith.constant 2 : index
    %c0_25 = arith.constant 0 : index
    %c0_26 = arith.constant 0 : index
    %32 = vector.load %arg4[%c0_24, %c2, %c0_25, %c0_26] : memref<1x3x16x128xf32, #tpu.memory_space<vmem>>, vector<1x1x8x128xf32>
    %33 = vector.shape_cast %32 : vector<1x1x8x128xf32> to vector<8x128xf32>
    %34 = vector.extract_strided_slice %33 {offsets = [0, 0], sizes = [8, 127], strides = [1, 1]} : vector<8x128xf32> to vector<8x127xf32>
    %35 = tpu.concatenate %0, %34 in 1 : vector<8x1xf32>, vector<8x127xf32> -> vector<8x128xf32>
    %36 = vector.extract_strided_slice %33 {offsets = [0, 1], sizes = [8, 127], strides = [1, 1]} : vector<8x128xf32> to vector<8x127xf32>
    %37 = tpu.concatenate %36, %0 in 1 : vector<8x127xf32>, vector<8x1xf32> -> vector<8x128xf32>
    %c2_27 = arith.constant 2 : index
    %c8_28 = arith.constant 8 : index
    %c0_29 = arith.constant 0 : index
    %38 = vector.load %arg9[%c2_27, %c8_28, %c0_29] : memref<3x32x128xf32, #tpu.memory_space<vmem>>, vector<1x8x128xf32>
    %39 = vector.shape_cast %38 : vector<1x8x128xf32> to vector<8x128xf32>
    %40 = vector.shape_cast %33 : vector<8x128xf32> to vector<1x8x128xf32>
    tpu.vector_store %arg9[%c2_27, %c8_28, %c0_29], %40 {strides = array<i32>} : memref<3x32x128xf32, #tpu.memory_space<vmem>>, vector<1x8x128xf32>,
    %c2_30 = arith.constant 2 : index
    %c8_31 = arith.constant 8 : index
    %c0_32 = arith.constant 0 : index
    %41 = vector.load %arg8[%c2_30, %c8_31, %c0_32] : memref<3x32x128xf32, #tpu.memory_space<vmem>>, vector<1x8x128xf32>
    %42 = vector.shape_cast %41 : vector<1x8x128xf32> to vector<8x128xf32>
    %43 = vector.shape_cast %35 : vector<8x128xf32> to vector<1x8x128xf32>
    tpu.vector_store %arg8[%c2_30, %c8_31, %c0_32], %43 {strides = array<i32>} : memref<3x32x128xf32, #tpu.memory_space<vmem>>, vector<1x8x128xf32>,
    %c2_33 = arith.constant 2 : index
    %c8_34 = arith.constant 8 : index
    %c0_35 = arith.constant 0 : index
    %44 = vector.load %arg10[%c2_33, %c8_34, %c0_35] : memref<3x32x128xf32, #tpu.memory_space<vmem>>, vector<1x8x128xf32>
    %45 = vector.shape_cast %44 : vector<1x8x128xf32> to vector<8x128xf32>
    %46 = vector.shape_cast %37 : vector<8x128xf32> to vector<1x8x128xf32>
    tpu.vector_store %arg10[%c2_33, %c8_34, %c0_35], %46 {strides = array<i32>} : memref<3x32x128xf32, #tpu.memory_space<vmem>>, vector<1x8x128xf32>,
    %c0_36 = arith.constant 0 : index
    %c0_37 = arith.constant 0 : index
    %c8_38 = arith.constant 8 : index
    %c0_39 = arith.constant 0 : index
    %47 = vector.load %arg4[%c0_36, %c0_37, %c8_38, %c0_39] : memref<1x3x16x128xf32, #tpu.memory_space<vmem>>, vector<1x1x8x128xf32>
    %48 = vector.shape_cast %47 : vector<1x1x8x128xf32> to vector<8x128xf32>
    %49 = vector.extract_strided_slice %48 {offsets = [0, 0], sizes = [8, 127], strides = [1, 1]} : vector<8x128xf32> to vector<8x127xf32>
    %50 = tpu.concatenate %0, %49 in 1 : vector<8x1xf32>, vector<8x127xf32> -> vector<8x128xf32>
    %51 = vector.extract_strided_slice %48 {offsets = [0, 1], sizes = [8, 127], strides = [1, 1]} : vector<8x128xf32> to vector<8x127xf32>
    %52 = tpu.concatenate %51, %0 in 1 : vector<8x127xf32>, vector<8x1xf32> -> vector<8x128xf32>
    %c0_40 = arith.constant 0 : index
    %c16 = arith.constant 16 : index
    %c0_41 = arith.constant 0 : index
    %53 = vector.load %arg9[%c0_40, %c16, %c0_41] : memref<3x32x128xf32, #tpu.memory_space<vmem>>, vector<1x8x128xf32>
    %54 = vector.shape_cast %53 : vector<1x8x128xf32> to vector<8x128xf32>
    %55 = vector.shape_cast %48 : vector<8x128xf32> to vector<1x8x128xf32>
    tpu.vector_store %arg9[%c0_40, %c16, %c0_41], %55 {strides = array<i32>} : memref<3x32x128xf32, #tpu.memory_space<vmem>>, vector<1x8x128xf32>,
    %c0_42 = arith.constant 0 : index
    %c16_43 = arith.constant 16 : index
    %c0_44 = arith.constant 0 : index
    %56 = vector.load %arg8[%c0_42, %c16_43, %c0_44] : memref<3x32x128xf32, #tpu.memory_space<vmem>>, vector<1x8x128xf32>
    %57 = vector.shape_cast %56 : vector<1x8x128xf32> to vector<8x128xf32>
    %58 = vector.shape_cast %50 : vector<8x128xf32> to vector<1x8x128xf32>
    tpu.vector_store %arg8[%c0_42, %c16_43, %c0_44], %58 {strides = array<i32>} : memref<3x32x128xf32, #tpu.memory_space<vmem>>, vector<1x8x128xf32>,
    %c0_45 = arith.constant 0 : index
    %c16_46 = arith.constant 16 : index
    %c0_47 = arith.constant 0 : index
    %59 = vector.load %arg10[%c0_45, %c16_46, %c0_47] : memref<3x32x128xf32, #tpu.memory_space<vmem>>, vector<1x8x128xf32>
    %60 = vector.shape_cast %59 : vector<1x8x128xf32> to vector<8x128xf32>
    %61 = vector.shape_cast %52 : vector<8x128xf32> to vector<1x8x128xf32>
    tpu.vector_store %arg10[%c0_45, %c16_46, %c0_47], %61 {strides = array<i32>} : memref<3x32x128xf32, #tpu.memory_space<vmem>>, vector<1x8x128xf32>,
    %c0_48 = arith.constant 0 : index
    %c1_49 = arith.constant 1 : index
    %c8_50 = arith.constant 8 : index
    %c0_51 = arith.constant 0 : index
    %62 = vector.load %arg4[%c0_48, %c1_49, %c8_50, %c0_51] : memref<1x3x16x128xf32, #tpu.memory_space<vmem>>, vector<1x1x8x128xf32>
    %63 = vector.shape_cast %62 : vector<1x1x8x128xf32> to vector<8x128xf32>
    %64 = vector.extract_strided_slice %63 {offsets = [0, 0], sizes = [8, 127], strides = [1, 1]} : vector<8x128xf32> to vector<8x127xf32>
    %65 = tpu.concatenate %0, %64 in 1 : vector<8x1xf32>, vector<8x127xf32> -> vector<8x128xf32>
    %66 = vector.extract_strided_slice %63 {offsets = [0, 1], sizes = [8, 127], strides = [1, 1]} : vector<8x128xf32> to vector<8x127xf32>
    %67 = tpu.concatenate %66, %0 in 1 : vector<8x127xf32>, vector<8x1xf32> -> vector<8x128xf32>
    %c1_52 = arith.constant 1 : index
    %c16_53 = arith.constant 16 : index
    %c0_54 = arith.constant 0 : index
    %68 = vector.load %arg9[%c1_52, %c16_53, %c0_54] : memref<3x32x128xf32, #tpu.memory_space<vmem>>, vector<1x8x128xf32>
    %69 = vector.shape_cast %68 : vector<1x8x128xf32> to vector<8x128xf32>
    %70 = vector.shape_cast %63 : vector<8x128xf32> to vector<1x8x128xf32>
    tpu.vector_store %arg9[%c1_52, %c16_53, %c0_54], %70 {strides = array<i32>} : memref<3x32x128xf32, #tpu.memory_space<vmem>>, vector<1x8x128xf32>,
    %c1_55 = arith.constant 1 : index
    %c16_56 = arith.constant 16 : index
    %c0_57 = arith.constant 0 : index
    %71 = vector.load %arg8[%c1_55, %c16_56, %c0_57] : memref<3x32x128xf32, #tpu.memory_space<vmem>>, vector<1x8x128xf32>
    %72 = vector.shape_cast %71 : vector<1x8x128xf32> to vector<8x128xf32>
    %73 = vector.shape_cast %65 : vector<8x128xf32> to vector<1x8x128xf32>
    tpu.vector_store %arg8[%c1_55, %c16_56, %c0_57], %73 {strides = array<i32>} : memref<3x32x128xf32, #tpu.memory_space<vmem>>, vector<1x8x128xf32>,
    %c1_58 = arith.constant 1 : index
    %c16_59 = arith.constant 16 : index
    %c0_60 = arith.constant 0 : index
    %74 = vector.load %arg10[%c1_58, %c16_59, %c0_60] : memref<3x32x128xf32, #tpu.memory_space<vmem>>, vector<1x8x128xf32>
    %75 = vector.shape_cast %74 : vector<1x8x128xf32> to vector<8x128xf32>
    %76 = vector.shape_cast %67 : vector<8x128xf32> to vector<1x8x128xf32>
    tpu.vector_store %arg10[%c1_58, %c16_59, %c0_60], %76 {strides = array<i32>} : memref<3x32x128xf32, #tpu.memory_space<vmem>>, vector<1x8x128xf32>,
    %c0_61 = arith.constant 0 : index
    %c2_62 = arith.constant 2 : index
    %c8_63 = arith.constant 8 : index
    %c0_64 = arith.constant 0 : index
    %77 = vector.load %arg4[%c0_61, %c2_62, %c8_63, %c0_64] : memref<1x3x16x128xf32, #tpu.memory_space<vmem>>, vector<1x1x8x128xf32>
    %78 = vector.shape_cast %77 : vector<1x1x8x128xf32> to vector<8x128xf32>
    %79 = vector.extract_strided_slice %78 {offsets = [0, 0], sizes = [8, 127], strides = [1, 1]} : vector<8x128xf32> to vector<8x127xf32>
    %80 = tpu.concatenate %0, %79 in 1 : vector<8x1xf32>, vector<8x127xf32> -> vector<8x128xf32>
    %81 = vector.extract_strided_slice %78 {offsets = [0, 1], sizes = [8, 127], strides = [1, 1]} : vector<8x128xf32> to vector<8x127xf32>
    %82 = tpu.concatenate %81, %0 in 1 : vector<8x127xf32>, vector<8x1xf32> -> vector<8x128xf32>
    %c2_65 = arith.constant 2 : index
    %c16_66 = arith.constant 16 : index
    %c0_67 = arith.constant 0 : index
    %83 = vector.load %arg9[%c2_65, %c16_66, %c0_67] : memref<3x32x128xf32, #tpu.memory_space<vmem>>, vector<1x8x128xf32>
    %84 = vector.shape_cast %83 : vector<1x8x128xf32> to vector<8x128xf32>
    %85 = vector.shape_cast %78 : vector<8x128xf32> to vector<1x8x128xf32>
    tpu.vector_store %arg9[%c2_65, %c16_66, %c0_67], %85 {strides = array<i32>} : memref<3x32x128xf32, #tpu.memory_space<vmem>>, vector<1x8x128xf32>,
    %c2_68 = arith.constant 2 : index
    %c16_69 = arith.constant 16 : index
    %c0_70 = arith.constant 0 : index
    %86 = vector.load %arg8[%c2_68, %c16_69, %c0_70] : memref<3x32x128xf32, #tpu.memory_space<vmem>>, vector<1x8x128xf32>
    %87 = vector.shape_cast %86 : vector<1x8x128xf32> to vector<8x128xf32>
    %88 = vector.shape_cast %80 : vector<8x128xf32> to vector<1x8x128xf32>
    tpu.vector_store %arg8[%c2_68, %c16_69, %c0_70], %88 {strides = array<i32>} : memref<3x32x128xf32, #tpu.memory_space<vmem>>, vector<1x8x128xf32>,
    %c2_71 = arith.constant 2 : index
    %c16_72 = arith.constant 16 : index
    %c0_73 = arith.constant 0 : index
    %89 = vector.load %arg10[%c2_71, %c16_72, %c0_73] : memref<3x32x128xf32, #tpu.memory_space<vmem>>, vector<1x8x128xf32>
    %90 = vector.shape_cast %89 : vector<1x8x128xf32> to vector<8x128xf32>
    %91 = vector.shape_cast %82 : vector<8x128xf32> to vector<1x8x128xf32>
    tpu.vector_store %arg10[%c2_71, %c16_72, %c0_73], %91 {strides = array<i32>} : memref<3x32x128xf32, #tpu.memory_space<vmem>>, vector<1x8x128xf32>,
    %c0_i32 = arith.constant 0 : i32
    %92 = arith.cmpi sgt, %arg1, %c0_i32 : i32
    %93 = arith.extui %92 : i1 to i32
    %c0_i32_74 = arith.constant 0 : i32
    %94 = arith.cmpi ne, %93, %c0_i32_74 : i32
    scf.if %94 {
      %c0_274 = arith.constant 0 : index
      %c0_275 = arith.constant 0 : index
      %c7_276 = arith.constant 7 : index
      %c0_277 = arith.constant 0 : index
      %809 = vector.load %arg5[%c0_274, %c0_275, %c7_276, %c0_277] : memref<1x3x8x128xf32, #tpu.memory_space<vmem>>, vector<1x1x1x128xf32>
      %810 = vector.shape_cast %809 : vector<1x1x1x128xf32> to vector<1x128xf32>
      %811 = vector.extract_strided_slice %810 {offsets = [0, 0], sizes = [1, 127], strides = [1, 1]} : vector<1x128xf32> to vector<1x127xf32>
      %812 = tpu.concatenate %1, %811 in 1 : vector<1x1xf32>, vector<1x127xf32> -> vector<1x128xf32>
      %813 = vector.extract_strided_slice %810 {offsets = [0, 1], sizes = [1, 127], strides = [1, 1]} : vector<1x128xf32> to vector<1x127xf32>
      %814 = tpu.concatenate %813, %1 in 1 : vector<1x127xf32>, vector<1x1xf32> -> vector<1x128xf32>
      %c0_278 = arith.constant 0 : index
      %c7_279 = arith.constant 7 : index
      %c0_280 = arith.constant 0 : index
      %815 = vector.load %arg9[%c0_278, %c7_279, %c0_280] : memref<3x32x128xf32, #tpu.memory_space<vmem>>, vector<1x1x128xf32>
      %816 = vector.shape_cast %815 : vector<1x1x128xf32> to vector<1x128xf32>
      %817 = vector.shape_cast %810 : vector<1x128xf32> to vector<1x1x128xf32>
      tpu.vector_store %arg9[%c0_278, %c7_279, %c0_280], %817 {strides = array<i32>} : memref<3x32x128xf32, #tpu.memory_space<vmem>>, vector<1x1x128xf32>,
      %c0_281 = arith.constant 0 : index
      %c7_282 = arith.constant 7 : index
      %c0_283 = arith.constant 0 : index
      %818 = vector.load %arg8[%c0_281, %c7_282, %c0_283] : memref<3x32x128xf32, #tpu.memory_space<vmem>>, vector<1x1x128xf32>
      %819 = vector.shape_cast %818 : vector<1x1x128xf32> to vector<1x128xf32>
      %820 = vector.shape_cast %812 : vector<1x128xf32> to vector<1x1x128xf32>
      tpu.vector_store %arg8[%c0_281, %c7_282, %c0_283], %820 {strides = array<i32>} : memref<3x32x128xf32, #tpu.memory_space<vmem>>, vector<1x1x128xf32>,
      %c0_284 = arith.constant 0 : index
      %c7_285 = arith.constant 7 : index
      %c0_286 = arith.constant 0 : index
      %821 = vector.load %arg10[%c0_284, %c7_285, %c0_286] : memref<3x32x128xf32, #tpu.memory_space<vmem>>, vector<1x1x128xf32>
      %822 = vector.shape_cast %821 : vector<1x1x128xf32> to vector<1x128xf32>
      %823 = vector.shape_cast %814 : vector<1x128xf32> to vector<1x1x128xf32>
      tpu.vector_store %arg10[%c0_284, %c7_285, %c0_286], %823 {strides = array<i32>} : memref<3x32x128xf32, #tpu.memory_space<vmem>>, vector<1x1x128xf32>,
      %c0_287 = arith.constant 0 : index
      %c1_288 = arith.constant 1 : index
      %c7_289 = arith.constant 7 : index
      %c0_290 = arith.constant 0 : index
      %824 = vector.load %arg5[%c0_287, %c1_288, %c7_289, %c0_290] : memref<1x3x8x128xf32, #tpu.memory_space<vmem>>, vector<1x1x1x128xf32>
      %825 = vector.shape_cast %824 : vector<1x1x1x128xf32> to vector<1x128xf32>
      %826 = vector.extract_strided_slice %825 {offsets = [0, 0], sizes = [1, 127], strides = [1, 1]} : vector<1x128xf32> to vector<1x127xf32>
      %827 = tpu.concatenate %1, %826 in 1 : vector<1x1xf32>, vector<1x127xf32> -> vector<1x128xf32>
      %828 = vector.extract_strided_slice %825 {offsets = [0, 1], sizes = [1, 127], strides = [1, 1]} : vector<1x128xf32> to vector<1x127xf32>
      %829 = tpu.concatenate %828, %1 in 1 : vector<1x127xf32>, vector<1x1xf32> -> vector<1x128xf32>
      %c1_291 = arith.constant 1 : index
      %c7_292 = arith.constant 7 : index
      %c0_293 = arith.constant 0 : index
      %830 = vector.load %arg9[%c1_291, %c7_292, %c0_293] : memref<3x32x128xf32, #tpu.memory_space<vmem>>, vector<1x1x128xf32>
      %831 = vector.shape_cast %830 : vector<1x1x128xf32> to vector<1x128xf32>
      %832 = vector.shape_cast %825 : vector<1x128xf32> to vector<1x1x128xf32>
      tpu.vector_store %arg9[%c1_291, %c7_292, %c0_293], %832 {strides = array<i32>} : memref<3x32x128xf32, #tpu.memory_space<vmem>>, vector<1x1x128xf32>,
      %c1_294 = arith.constant 1 : index
      %c7_295 = arith.constant 7 : index
      %c0_296 = arith.constant 0 : index
      %833 = vector.load %arg8[%c1_294, %c7_295, %c0_296] : memref<3x32x128xf32, #tpu.memory_space<vmem>>, vector<1x1x128xf32>
      %834 = vector.shape_cast %833 : vector<1x1x128xf32> to vector<1x128xf32>
      %835 = vector.shape_cast %827 : vector<1x128xf32> to vector<1x1x128xf32>
      tpu.vector_store %arg8[%c1_294, %c7_295, %c0_296], %835 {strides = array<i32>} : memref<3x32x128xf32, #tpu.memory_space<vmem>>, vector<1x1x128xf32>,
      %c1_297 = arith.constant 1 : index
      %c7_298 = arith.constant 7 : index
      %c0_299 = arith.constant 0 : index
      %836 = vector.load %arg10[%c1_297, %c7_298, %c0_299] : memref<3x32x128xf32, #tpu.memory_space<vmem>>, vector<1x1x128xf32>
      %837 = vector.shape_cast %836 : vector<1x1x128xf32> to vector<1x128xf32>
      %838 = vector.shape_cast %829 : vector<1x128xf32> to vector<1x1x128xf32>
      tpu.vector_store %arg10[%c1_297, %c7_298, %c0_299], %838 {strides = array<i32>} : memref<3x32x128xf32, #tpu.memory_space<vmem>>, vector<1x1x128xf32>,
      %c0_300 = arith.constant 0 : index
      %c2_301 = arith.constant 2 : index
      %c7_302 = arith.constant 7 : index
      %c0_303 = arith.constant 0 : index
      %839 = vector.load %arg5[%c0_300, %c2_301, %c7_302, %c0_303] : memref<1x3x8x128xf32, #tpu.memory_space<vmem>>, vector<1x1x1x128xf32>
      %840 = vector.shape_cast %839 : vector<1x1x1x128xf32> to vector<1x128xf32>
      %841 = vector.extract_strided_slice %840 {offsets = [0, 0], sizes = [1, 127], strides = [1, 1]} : vector<1x128xf32> to vector<1x127xf32>
      %842 = tpu.concatenate %1, %841 in 1 : vector<1x1xf32>, vector<1x127xf32> -> vector<1x128xf32>
      %843 = vector.extract_strided_slice %840 {offsets = [0, 1], sizes = [1, 127], strides = [1, 1]} : vector<1x128xf32> to vector<1x127xf32>
      %844 = tpu.concatenate %843, %1 in 1 : vector<1x127xf32>, vector<1x1xf32> -> vector<1x128xf32>
      %c2_304 = arith.constant 2 : index
      %c7_305 = arith.constant 7 : index
      %c0_306 = arith.constant 0 : index
      %845 = vector.load %arg9[%c2_304, %c7_305, %c0_306] : memref<3x32x128xf32, #tpu.memory_space<vmem>>, vector<1x1x128xf32>
      %846 = vector.shape_cast %845 : vector<1x1x128xf32> to vector<1x128xf32>
      %847 = vector.shape_cast %840 : vector<1x128xf32> to vector<1x1x128xf32>
      tpu.vector_store %arg9[%c2_304, %c7_305, %c0_306], %847 {strides = array<i32>} : memref<3x32x128xf32, #tpu.memory_space<vmem>>, vector<1x1x128xf32>,
      %c2_307 = arith.constant 2 : index
      %c7_308 = arith.constant 7 : index
      %c0_309 = arith.constant 0 : index
      %848 = vector.load %arg8[%c2_307, %c7_308, %c0_309] : memref<3x32x128xf32, #tpu.memory_space<vmem>>, vector<1x1x128xf32>
      %849 = vector.shape_cast %848 : vector<1x1x128xf32> to vector<1x128xf32>
      %850 = vector.shape_cast %842 : vector<1x128xf32> to vector<1x1x128xf32>
      tpu.vector_store %arg8[%c2_307, %c7_308, %c0_309], %850 {strides = array<i32>} : memref<3x32x128xf32, #tpu.memory_space<vmem>>, vector<1x1x128xf32>,
      %c2_310 = arith.constant 2 : index
      %c7_311 = arith.constant 7 : index
      %c0_312 = arith.constant 0 : index
      %851 = vector.load %arg10[%c2_310, %c7_311, %c0_312] : memref<3x32x128xf32, #tpu.memory_space<vmem>>, vector<1x1x128xf32>
      %852 = vector.shape_cast %851 : vector<1x1x128xf32> to vector<1x128xf32>
      %853 = vector.shape_cast %844 : vector<1x128xf32> to vector<1x1x128xf32>
      tpu.vector_store %arg10[%c2_310, %c7_311, %c0_312], %853 {strides = array<i32>} : memref<3x32x128xf32, #tpu.memory_space<vmem>>, vector<1x1x128xf32>,
    } else {
    }
    %c0_i32_75 = arith.constant 0 : i32
    %95 = arith.cmpi eq, %arg1, %c0_i32_75 : i32
    %96 = arith.extui %95 : i1 to i32
    %c0_i32_76 = arith.constant 0 : i32
    %97 = arith.cmpi ne, %96, %c0_i32_76 : i32
    scf.if %97 {
      %cst_274 = arith.constant 0.000000e+00 : f32
      %809 = vector.broadcast %cst_274 : f32 to vector<3x1x128xf32>
      %c0_275 = arith.constant 0 : index
      %c7_276 = arith.constant 7 : index
      %c0_277 = arith.constant 0 : index
      %810 = vector.load %arg9[%c0_275, %c7_276, %c0_277] : memref<3x32x128xf32, #tpu.memory_space<vmem>>, vector<3x1x128xf32>
      tpu.vector_store %arg9[%c0_275, %c7_276, %c0_277], %809 {strides = array<i32>} : memref<3x32x128xf32, #tpu.memory_space<vmem>>, vector<3x1x128xf32>,
      %c0_278 = arith.constant 0 : index
      %c7_279 = arith.constant 7 : index
      %c0_280 = arith.constant 0 : index
      %811 = vector.load %arg8[%c0_278, %c7_279, %c0_280] : memref<3x32x128xf32, #tpu.memory_space<vmem>>, vector<3x1x128xf32>
      tpu.vector_store %arg8[%c0_278, %c7_279, %c0_280], %809 {strides = array<i32>} : memref<3x32x128xf32, #tpu.memory_space<vmem>>, vector<3x1x128xf32>,
      %c0_281 = arith.constant 0 : index
      %c7_282 = arith.constant 7 : index
      %c0_283 = arith.constant 0 : index
      %812 = vector.load %arg10[%c0_281, %c7_282, %c0_283] : memref<3x32x128xf32, #tpu.memory_space<vmem>>, vector<3x1x128xf32>
      tpu.vector_store %arg10[%c0_281, %c7_282, %c0_283], %809 {strides = array<i32>} : memref<3x32x128xf32, #tpu.memory_space<vmem>>, vector<3x1x128xf32>,
    } else {
    }
    %c1_i32 = arith.constant 1 : i32
    %98 = arith.cmpi slt, %arg1, %c1_i32 : i32
    %99 = arith.extui %98 : i1 to i32
    %c0_i32_77 = arith.constant 0 : i32
    %100 = arith.cmpi ne, %99, %c0_i32_77 : i32
    scf.if %100 {
      %c0_274 = arith.constant 0 : index
      %c0_275 = arith.constant 0 : index
      %c0_276 = arith.constant 0 : index
      %c0_277 = arith.constant 0 : index
      %809 = vector.load %arg6[%c0_274, %c0_275, %c0_276, %c0_277] : memref<1x3x8x128xf32, #tpu.memory_space<vmem>>, vector<1x1x1x128xf32>
      %810 = vector.shape_cast %809 : vector<1x1x1x128xf32> to vector<1x128xf32>
      %811 = vector.extract_strided_slice %810 {offsets = [0, 0], sizes = [1, 127], strides = [1, 1]} : vector<1x128xf32> to vector<1x127xf32>
      %812 = tpu.concatenate %1, %811 in 1 : vector<1x1xf32>, vector<1x127xf32> -> vector<1x128xf32>
      %813 = vector.extract_strided_slice %810 {offsets = [0, 1], sizes = [1, 127], strides = [1, 1]} : vector<1x128xf32> to vector<1x127xf32>
      %814 = tpu.concatenate %813, %1 in 1 : vector<1x127xf32>, vector<1x1xf32> -> vector<1x128xf32>
      %c0_278 = arith.constant 0 : index
      %c24_279 = arith.constant 24 : index
      %c0_280 = arith.constant 0 : index
      %815 = vector.load %arg9[%c0_278, %c24_279, %c0_280] : memref<3x32x128xf32, #tpu.memory_space<vmem>>, vector<1x1x128xf32>
      %816 = vector.shape_cast %815 : vector<1x1x128xf32> to vector<1x128xf32>
      %817 = vector.shape_cast %810 : vector<1x128xf32> to vector<1x1x128xf32>
      tpu.vector_store %arg9[%c0_278, %c24_279, %c0_280], %817 {strides = array<i32>} : memref<3x32x128xf32, #tpu.memory_space<vmem>>, vector<1x1x128xf32>,
      %c0_281 = arith.constant 0 : index
      %c24_282 = arith.constant 24 : index
      %c0_283 = arith.constant 0 : index
      %818 = vector.load %arg8[%c0_281, %c24_282, %c0_283] : memref<3x32x128xf32, #tpu.memory_space<vmem>>, vector<1x1x128xf32>
      %819 = vector.shape_cast %818 : vector<1x1x128xf32> to vector<1x128xf32>
      %820 = vector.shape_cast %812 : vector<1x128xf32> to vector<1x1x128xf32>
      tpu.vector_store %arg8[%c0_281, %c24_282, %c0_283], %820 {strides = array<i32>} : memref<3x32x128xf32, #tpu.memory_space<vmem>>, vector<1x1x128xf32>,
      %c0_284 = arith.constant 0 : index
      %c24_285 = arith.constant 24 : index
      %c0_286 = arith.constant 0 : index
      %821 = vector.load %arg10[%c0_284, %c24_285, %c0_286] : memref<3x32x128xf32, #tpu.memory_space<vmem>>, vector<1x1x128xf32>
      %822 = vector.shape_cast %821 : vector<1x1x128xf32> to vector<1x128xf32>
      %823 = vector.shape_cast %814 : vector<1x128xf32> to vector<1x1x128xf32>
      tpu.vector_store %arg10[%c0_284, %c24_285, %c0_286], %823 {strides = array<i32>} : memref<3x32x128xf32, #tpu.memory_space<vmem>>, vector<1x1x128xf32>,
      %c0_287 = arith.constant 0 : index
      %c1_288 = arith.constant 1 : index
      %c0_289 = arith.constant 0 : index
      %c0_290 = arith.constant 0 : index
      %824 = vector.load %arg6[%c0_287, %c1_288, %c0_289, %c0_290] : memref<1x3x8x128xf32, #tpu.memory_space<vmem>>, vector<1x1x1x128xf32>
      %825 = vector.shape_cast %824 : vector<1x1x1x128xf32> to vector<1x128xf32>
      %826 = vector.extract_strided_slice %825 {offsets = [0, 0], sizes = [1, 127], strides = [1, 1]} : vector<1x128xf32> to vector<1x127xf32>
      %827 = tpu.concatenate %1, %826 in 1 : vector<1x1xf32>, vector<1x127xf32> -> vector<1x128xf32>
      %828 = vector.extract_strided_slice %825 {offsets = [0, 1], sizes = [1, 127], strides = [1, 1]} : vector<1x128xf32> to vector<1x127xf32>
      %829 = tpu.concatenate %828, %1 in 1 : vector<1x127xf32>, vector<1x1xf32> -> vector<1x128xf32>
      %c1_291 = arith.constant 1 : index
      %c24_292 = arith.constant 24 : index
      %c0_293 = arith.constant 0 : index
      %830 = vector.load %arg9[%c1_291, %c24_292, %c0_293] : memref<3x32x128xf32, #tpu.memory_space<vmem>>, vector<1x1x128xf32>
      %831 = vector.shape_cast %830 : vector<1x1x128xf32> to vector<1x128xf32>
      %832 = vector.shape_cast %825 : vector<1x128xf32> to vector<1x1x128xf32>
      tpu.vector_store %arg9[%c1_291, %c24_292, %c0_293], %832 {strides = array<i32>} : memref<3x32x128xf32, #tpu.memory_space<vmem>>, vector<1x1x128xf32>,
      %c1_294 = arith.constant 1 : index
      %c24_295 = arith.constant 24 : index
      %c0_296 = arith.constant 0 : index
      %833 = vector.load %arg8[%c1_294, %c24_295, %c0_296] : memref<3x32x128xf32, #tpu.memory_space<vmem>>, vector<1x1x128xf32>
      %834 = vector.shape_cast %833 : vector<1x1x128xf32> to vector<1x128xf32>
      %835 = vector.shape_cast %827 : vector<1x128xf32> to vector<1x1x128xf32>
      tpu.vector_store %arg8[%c1_294, %c24_295, %c0_296], %835 {strides = array<i32>} : memref<3x32x128xf32, #tpu.memory_space<vmem>>, vector<1x1x128xf32>,
      %c1_297 = arith.constant 1 : index
      %c24_298 = arith.constant 24 : index
      %c0_299 = arith.constant 0 : index
      %836 = vector.load %arg10[%c1_297, %c24_298, %c0_299] : memref<3x32x128xf32, #tpu.memory_space<vmem>>, vector<1x1x128xf32>
      %837 = vector.shape_cast %836 : vector<1x1x128xf32> to vector<1x128xf32>
      %838 = vector.shape_cast %829 : vector<1x128xf32> to vector<1x1x128xf32>
      tpu.vector_store %arg10[%c1_297, %c24_298, %c0_299], %838 {strides = array<i32>} : memref<3x32x128xf32, #tpu.memory_space<vmem>>, vector<1x1x128xf32>,
      %c0_300 = arith.constant 0 : index
      %c2_301 = arith.constant 2 : index
      %c0_302 = arith.constant 0 : index
      %c0_303 = arith.constant 0 : index
      %839 = vector.load %arg6[%c0_300, %c2_301, %c0_302, %c0_303] : memref<1x3x8x128xf32, #tpu.memory_space<vmem>>, vector<1x1x1x128xf32>
      %840 = vector.shape_cast %839 : vector<1x1x1x128xf32> to vector<1x128xf32>
      %841 = vector.extract_strided_slice %840 {offsets = [0, 0], sizes = [1, 127], strides = [1, 1]} : vector<1x128xf32> to vector<1x127xf32>
      %842 = tpu.concatenate %1, %841 in 1 : vector<1x1xf32>, vector<1x127xf32> -> vector<1x128xf32>
      %843 = vector.extract_strided_slice %840 {offsets = [0, 1], sizes = [1, 127], strides = [1, 1]} : vector<1x128xf32> to vector<1x127xf32>
      %844 = tpu.concatenate %843, %1 in 1 : vector<1x127xf32>, vector<1x1xf32> -> vector<1x128xf32>
      %c2_304 = arith.constant 2 : index
      %c24_305 = arith.constant 24 : index
      %c0_306 = arith.constant 0 : index
      %845 = vector.load %arg9[%c2_304, %c24_305, %c0_306] : memref<3x32x128xf32, #tpu.memory_space<vmem>>, vector<1x1x128xf32>
      %846 = vector.shape_cast %845 : vector<1x1x128xf32> to vector<1x128xf32>
      %847 = vector.shape_cast %840 : vector<1x128xf32> to vector<1x1x128xf32>
      tpu.vector_store %arg9[%c2_304, %c24_305, %c0_306], %847 {strides = array<i32>} : memref<3x32x128xf32, #tpu.memory_space<vmem>>, vector<1x1x128xf32>,
      %c2_307 = arith.constant 2 : index
      %c24_308 = arith.constant 24 : index
      %c0_309 = arith.constant 0 : index
      %848 = vector.load %arg8[%c2_307, %c24_308, %c0_309] : memref<3x32x128xf32, #tpu.memory_space<vmem>>, vector<1x1x128xf32>
      %849 = vector.shape_cast %848 : vector<1x1x128xf32> to vector<1x128xf32>
      %850 = vector.shape_cast %842 : vector<1x128xf32> to vector<1x1x128xf32>
      tpu.vector_store %arg8[%c2_307, %c24_308, %c0_309], %850 {strides = array<i32>} : memref<3x32x128xf32, #tpu.memory_space<vmem>>, vector<1x1x128xf32>,
      %c2_310 = arith.constant 2 : index
      %c24_311 = arith.constant 24 : index
      %c0_312 = arith.constant 0 : index
      %851 = vector.load %arg10[%c2_310, %c24_311, %c0_312] : memref<3x32x128xf32, #tpu.memory_space<vmem>>, vector<1x1x128xf32>
      %852 = vector.shape_cast %851 : vector<1x1x128xf32> to vector<1x128xf32>
      %853 = vector.shape_cast %844 : vector<1x128xf32> to vector<1x1x128xf32>
      tpu.vector_store %arg10[%c2_310, %c24_311, %c0_312], %853 {strides = array<i32>} : memref<3x32x128xf32, #tpu.memory_space<vmem>>, vector<1x1x128xf32>,
    } else {
    }
    %c1_i32_78 = arith.constant 1 : i32
    %101 = arith.cmpi eq, %arg1, %c1_i32_78 : i32
    %102 = arith.extui %101 : i1 to i32
    %c0_i32_79 = arith.constant 0 : i32
    %103 = arith.cmpi ne, %102, %c0_i32_79 : i32
    scf.if %103 {
      %cst_274 = arith.constant 0.000000e+00 : f32
      %809 = vector.broadcast %cst_274 : f32 to vector<3x1x128xf32>
      %c0_275 = arith.constant 0 : index
      %c24_276 = arith.constant 24 : index
      %c0_277 = arith.constant 0 : index
      %810 = vector.load %arg9[%c0_275, %c24_276, %c0_277] : memref<3x32x128xf32, #tpu.memory_space<vmem>>, vector<3x1x128xf32>
      tpu.vector_store %arg9[%c0_275, %c24_276, %c0_277], %809 {strides = array<i32>} : memref<3x32x128xf32, #tpu.memory_space<vmem>>, vector<3x1x128xf32>,
      %c0_278 = arith.constant 0 : index
      %c24_279 = arith.constant 24 : index
      %c0_280 = arith.constant 0 : index
      %811 = vector.load %arg8[%c0_278, %c24_279, %c0_280] : memref<3x32x128xf32, #tpu.memory_space<vmem>>, vector<3x1x128xf32>
      tpu.vector_store %arg8[%c0_278, %c24_279, %c0_280], %809 {strides = array<i32>} : memref<3x32x128xf32, #tpu.memory_space<vmem>>, vector<3x1x128xf32>,
      %c0_281 = arith.constant 0 : index
      %c24_282 = arith.constant 24 : index
      %c0_283 = arith.constant 0 : index
      %812 = vector.load %arg10[%c0_281, %c24_282, %c0_283] : memref<3x32x128xf32, #tpu.memory_space<vmem>>, vector<3x1x128xf32>
      tpu.vector_store %arg10[%c0_281, %c24_282, %c0_283], %809 {strides = array<i32>} : memref<3x32x128xf32, #tpu.memory_space<vmem>>, vector<3x1x128xf32>,
    } else {
    }
    %c0_80 = arith.constant 0 : index
    %104 = memref.load %arg2[%c0_80] : memref<81xf32, #tpu.memory_space<smem>>
    %c1_81 = arith.constant 1 : index
    %105 = memref.load %arg2[%c1_81] : memref<81xf32, #tpu.memory_space<smem>>
    %c2_82 = arith.constant 2 : index
    %106 = memref.load %arg2[%c2_82] : memref<81xf32, #tpu.memory_space<smem>>
    %c3 = arith.constant 3 : index
    %107 = memref.load %arg2[%c3] : memref<81xf32, #tpu.memory_space<smem>>
    %c4 = arith.constant 4 : index
    %108 = memref.load %arg2[%c4] : memref<81xf32, #tpu.memory_space<smem>>
    %c5 = arith.constant 5 : index
    %109 = memref.load %arg2[%c5] : memref<81xf32, #tpu.memory_space<smem>>
    %c6 = arith.constant 6 : index
    %110 = memref.load %arg2[%c6] : memref<81xf32, #tpu.memory_space<smem>>
    %c7 = arith.constant 7 : index
    %111 = memref.load %arg2[%c7] : memref<81xf32, #tpu.memory_space<smem>>
    %c8_83 = arith.constant 8 : index
    %112 = memref.load %arg2[%c8_83] : memref<81xf32, #tpu.memory_space<smem>>
    %c9 = arith.constant 9 : index
    %113 = memref.load %arg2[%c9] : memref<81xf32, #tpu.memory_space<smem>>
    %c10 = arith.constant 10 : index
    %114 = memref.load %arg2[%c10] : memref<81xf32, #tpu.memory_space<smem>>
    %c11 = arith.constant 11 : index
    %115 = memref.load %arg2[%c11] : memref<81xf32, #tpu.memory_space<smem>>
    %c12 = arith.constant 12 : index
    %116 = memref.load %arg2[%c12] : memref<81xf32, #tpu.memory_space<smem>>
    %c13 = arith.constant 13 : index
    %117 = memref.load %arg2[%c13] : memref<81xf32, #tpu.memory_space<smem>>
    %c14 = arith.constant 14 : index
    %118 = memref.load %arg2[%c14] : memref<81xf32, #tpu.memory_space<smem>>
    %c15 = arith.constant 15 : index
    %119 = memref.load %arg2[%c15] : memref<81xf32, #tpu.memory_space<smem>>
    %c16_84 = arith.constant 16 : index
    %120 = memref.load %arg2[%c16_84] : memref<81xf32, #tpu.memory_space<smem>>
    %c17 = arith.constant 17 : index
    %121 = memref.load %arg2[%c17] : memref<81xf32, #tpu.memory_space<smem>>
    %c18 = arith.constant 18 : index
    %122 = memref.load %arg2[%c18] : memref<81xf32, #tpu.memory_space<smem>>
    %c19 = arith.constant 19 : index
    %123 = memref.load %arg2[%c19] : memref<81xf32, #tpu.memory_space<smem>>
    %c20 = arith.constant 20 : index
    %124 = memref.load %arg2[%c20] : memref<81xf32, #tpu.memory_space<smem>>
    %c21 = arith.constant 21 : index
    %125 = memref.load %arg2[%c21] : memref<81xf32, #tpu.memory_space<smem>>
    %c22 = arith.constant 22 : index
    %126 = memref.load %arg2[%c22] : memref<81xf32, #tpu.memory_space<smem>>
    %c23 = arith.constant 23 : index
    %127 = memref.load %arg2[%c23] : memref<81xf32, #tpu.memory_space<smem>>
    %c24 = arith.constant 24 : index
    %128 = memref.load %arg2[%c24] : memref<81xf32, #tpu.memory_space<smem>>
    %c25 = arith.constant 25 : index
    %129 = memref.load %arg2[%c25] : memref<81xf32, #tpu.memory_space<smem>>
    %c26 = arith.constant 26 : index
    %130 = memref.load %arg2[%c26] : memref<81xf32, #tpu.memory_space<smem>>
    %c27 = arith.constant 27 : index
    %131 = memref.load %arg2[%c27] : memref<81xf32, #tpu.memory_space<smem>>
    %c28 = arith.constant 28 : index
    %132 = memref.load %arg2[%c28] : memref<81xf32, #tpu.memory_space<smem>>
    %c29 = arith.constant 29 : index
    %133 = memref.load %arg2[%c29] : memref<81xf32, #tpu.memory_space<smem>>
    %c30 = arith.constant 30 : index
    %134 = memref.load %arg2[%c30] : memref<81xf32, #tpu.memory_space<smem>>
    %c31 = arith.constant 31 : index
    %135 = memref.load %arg2[%c31] : memref<81xf32, #tpu.memory_space<smem>>
    %c32 = arith.constant 32 : index
    %136 = memref.load %arg2[%c32] : memref<81xf32, #tpu.memory_space<smem>>
    %c33 = arith.constant 33 : index
    %137 = memref.load %arg2[%c33] : memref<81xf32, #tpu.memory_space<smem>>
    %c34 = arith.constant 34 : index
    %138 = memref.load %arg2[%c34] : memref<81xf32, #tpu.memory_space<smem>>
    %c35 = arith.constant 35 : index
    %139 = memref.load %arg2[%c35] : memref<81xf32, #tpu.memory_space<smem>>
    %c36 = arith.constant 36 : index
    %140 = memref.load %arg2[%c36] : memref<81xf32, #tpu.memory_space<smem>>
    %c37 = arith.constant 37 : index
    %141 = memref.load %arg2[%c37] : memref<81xf32, #tpu.memory_space<smem>>
    %c38 = arith.constant 38 : index
    %142 = memref.load %arg2[%c38] : memref<81xf32, #tpu.memory_space<smem>>
    %c39 = arith.constant 39 : index
    %143 = memref.load %arg2[%c39] : memref<81xf32, #tpu.memory_space<smem>>
    %c40 = arith.constant 40 : index
    %144 = memref.load %arg2[%c40] : memref<81xf32, #tpu.memory_space<smem>>
    %c41 = arith.constant 41 : index
    %145 = memref.load %arg2[%c41] : memref<81xf32, #tpu.memory_space<smem>>
    %c42 = arith.constant 42 : index
    %146 = memref.load %arg2[%c42] : memref<81xf32, #tpu.memory_space<smem>>
    %c43 = arith.constant 43 : index
    %147 = memref.load %arg2[%c43] : memref<81xf32, #tpu.memory_space<smem>>
    %c44 = arith.constant 44 : index
    %148 = memref.load %arg2[%c44] : memref<81xf32, #tpu.memory_space<smem>>
    %c45 = arith.constant 45 : index
    %149 = memref.load %arg2[%c45] : memref<81xf32, #tpu.memory_space<smem>>
    %c46 = arith.constant 46 : index
    %150 = memref.load %arg2[%c46] : memref<81xf32, #tpu.memory_space<smem>>
    %c47 = arith.constant 47 : index
    %151 = memref.load %arg2[%c47] : memref<81xf32, #tpu.memory_space<smem>>
    %c48 = arith.constant 48 : index
    %152 = memref.load %arg2[%c48] : memref<81xf32, #tpu.memory_space<smem>>
    %c49 = arith.constant 49 : index
    %153 = memref.load %arg2[%c49] : memref<81xf32, #tpu.memory_space<smem>>
    %c50 = arith.constant 50 : index
    %154 = memref.load %arg2[%c50] : memref<81xf32, #tpu.memory_space<smem>>
    %c51 = arith.constant 51 : index
    %155 = memref.load %arg2[%c51] : memref<81xf32, #tpu.memory_space<smem>>
    %c52 = arith.constant 52 : index
    %156 = memref.load %arg2[%c52] : memref<81xf32, #tpu.memory_space<smem>>
    %c53 = arith.constant 53 : index
    %157 = memref.load %arg2[%c53] : memref<81xf32, #tpu.memory_space<smem>>
    %c54 = arith.constant 54 : index
    %158 = memref.load %arg2[%c54] : memref<81xf32, #tpu.memory_space<smem>>
    %c55 = arith.constant 55 : index
    %159 = memref.load %arg2[%c55] : memref<81xf32, #tpu.memory_space<smem>>
    %c56 = arith.constant 56 : index
    %160 = memref.load %arg2[%c56] : memref<81xf32, #tpu.memory_space<smem>>
    %c57 = arith.constant 57 : index
    %161 = memref.load %arg2[%c57] : memref<81xf32, #tpu.memory_space<smem>>
    %c58 = arith.constant 58 : index
    %162 = memref.load %arg2[%c58] : memref<81xf32, #tpu.memory_space<smem>>
    %c59 = arith.constant 59 : index
    %163 = memref.load %arg2[%c59] : memref<81xf32, #tpu.memory_space<smem>>
    %c60 = arith.constant 60 : index
    %164 = memref.load %arg2[%c60] : memref<81xf32, #tpu.memory_space<smem>>
    %c61 = arith.constant 61 : index
    %165 = memref.load %arg2[%c61] : memref<81xf32, #tpu.memory_space<smem>>
    %c62 = arith.constant 62 : index
    %166 = memref.load %arg2[%c62] : memref<81xf32, #tpu.memory_space<smem>>
    %c63 = arith.constant 63 : index
    %167 = memref.load %arg2[%c63] : memref<81xf32, #tpu.memory_space<smem>>
    %c64 = arith.constant 64 : index
    %168 = memref.load %arg2[%c64] : memref<81xf32, #tpu.memory_space<smem>>
    %c65 = arith.constant 65 : index
    %169 = memref.load %arg2[%c65] : memref<81xf32, #tpu.memory_space<smem>>
    %c66 = arith.constant 66 : index
    %170 = memref.load %arg2[%c66] : memref<81xf32, #tpu.memory_space<smem>>
    %c67 = arith.constant 67 : index
    %171 = memref.load %arg2[%c67] : memref<81xf32, #tpu.memory_space<smem>>
    %c68 = arith.constant 68 : index
    %172 = memref.load %arg2[%c68] : memref<81xf32, #tpu.memory_space<smem>>
    %c69 = arith.constant 69 : index
    %173 = memref.load %arg2[%c69] : memref<81xf32, #tpu.memory_space<smem>>
    %c70 = arith.constant 70 : index
    %174 = memref.load %arg2[%c70] : memref<81xf32, #tpu.memory_space<smem>>
    %c71 = arith.constant 71 : index
    %175 = memref.load %arg2[%c71] : memref<81xf32, #tpu.memory_space<smem>>
    %c72 = arith.constant 72 : index
    %176 = memref.load %arg2[%c72] : memref<81xf32, #tpu.memory_space<smem>>
    %c73 = arith.constant 73 : index
    %177 = memref.load %arg2[%c73] : memref<81xf32, #tpu.memory_space<smem>>
    %c74 = arith.constant 74 : index
    %178 = memref.load %arg2[%c74] : memref<81xf32, #tpu.memory_space<smem>>
    %c75 = arith.constant 75 : index
    %179 = memref.load %arg2[%c75] : memref<81xf32, #tpu.memory_space<smem>>
    %c76 = arith.constant 76 : index
    %180 = memref.load %arg2[%c76] : memref<81xf32, #tpu.memory_space<smem>>
    %c77 = arith.constant 77 : index
    %181 = memref.load %arg2[%c77] : memref<81xf32, #tpu.memory_space<smem>>
    %c78 = arith.constant 78 : index
    %182 = memref.load %arg2[%c78] : memref<81xf32, #tpu.memory_space<smem>>
    %c79 = arith.constant 79 : index
    %183 = memref.load %arg2[%c79] : memref<81xf32, #tpu.memory_space<smem>>
    %c80 = arith.constant 80 : index
    %184 = memref.load %arg2[%c80] : memref<81xf32, #tpu.memory_space<smem>>
    %c0_85 = arith.constant 0 : index
    %185 = memref.load %arg3[%c0_85] : memref<3xf32, #tpu.memory_space<smem>>
    %186 = vector.broadcast %185 : f32 to vector<8x128xf32>
    %c1_86 = arith.constant 1 : index
    %187 = memref.load %arg3[%c1_86] : memref<3xf32, #tpu.memory_space<smem>>
    %188 = vector.broadcast %187 : f32 to vector<8x128xf32>
    %c2_87 = arith.constant 2 : index
    %189 = memref.load %arg3[%c2_87] : memref<3xf32, #tpu.memory_space<smem>>
    %190 = vector.broadcast %189 : f32 to vector<8x128xf32>
    %c0_88 = arith.constant 0 : index
    %c7_89 = arith.constant 7 : index
    %c0_90 = arith.constant 0 : index
    %191 = vector.load %arg8[%c0_88, %c7_89, %c0_90] : memref<3x32x128xf32, #tpu.memory_space<vmem>>, vector<1x8x128xf32>
    %192 = vector.shape_cast %191 : vector<1x8x128xf32> to vector<8x128xf32>
    %193 = vector.broadcast %104 : f32 to vector<8x128xf32>
    %194 = arith.mulf %192, %193 : vector<8x128xf32>
    %195 = arith.addf %186, %194 : vector<8x128xf32>
    %196 = vector.broadcast %131 : f32 to vector<8x128xf32>
    %197 = arith.mulf %192, %196 : vector<8x128xf32>
    %198 = arith.addf %188, %197 : vector<8x128xf32>
    %199 = vector.broadcast %158 : f32 to vector<8x128xf32>
    %200 = arith.mulf %192, %199 : vector<8x128xf32>
    %201 = arith.addf %190, %200 : vector<8x128xf32>
    %c0_91 = arith.constant 0 : index
    %c7_92 = arith.constant 7 : index
    %c0_93 = arith.constant 0 : index
    %202 = vector.load %arg9[%c0_91, %c7_92, %c0_93] : memref<3x32x128xf32, #tpu.memory_space<vmem>>, vector<1x8x128xf32>
    %203 = vector.shape_cast %202 : vector<1x8x128xf32> to vector<8x128xf32>
    %204 = vector.broadcast %105 : f32 to vector<8x128xf32>
    %205 = arith.mulf %203, %204 : vector<8x128xf32>
    %206 = arith.addf %195, %205 : vector<8x128xf32>
    %207 = vector.broadcast %132 : f32 to vector<8x128xf32>
    %208 = arith.mulf %203, %207 : vector<8x128xf32>
    %209 = arith.addf %198, %208 : vector<8x128xf32>
    %210 = vector.broadcast %159 : f32 to vector<8x128xf32>
    %211 = arith.mulf %203, %210 : vector<8x128xf32>
    %212 = arith.addf %201, %211 : vector<8x128xf32>
    %c0_94 = arith.constant 0 : index
    %c7_95 = arith.constant 7 : index
    %c0_96 = arith.constant 0 : index
    %213 = vector.load %arg10[%c0_94, %c7_95, %c0_96] : memref<3x32x128xf32, #tpu.memory_space<vmem>>, vector<1x8x128xf32>
    %214 = vector.shape_cast %213 : vector<1x8x128xf32> to vector<8x128xf32>
    %215 = vector.broadcast %106 : f32 to vector<8x128xf32>
    %216 = arith.mulf %214, %215 : vector<8x128xf32>
    %217 = arith.addf %206, %216 : vector<8x128xf32>
    %218 = vector.broadcast %133 : f32 to vector<8x128xf32>
    %219 = arith.mulf %214, %218 : vector<8x128xf32>
    %220 = arith.addf %209, %219 : vector<8x128xf32>
    %221 = vector.broadcast %160 : f32 to vector<8x128xf32>
    %222 = arith.mulf %214, %221 : vector<8x128xf32>
    %223 = arith.addf %212, %222 : vector<8x128xf32>
    %c0_97 = arith.constant 0 : index
    %c8_98 = arith.constant 8 : index
    %c0_99 = arith.constant 0 : index
    %224 = vector.load %arg8[%c0_97, %c8_98, %c0_99] : memref<3x32x128xf32, #tpu.memory_space<vmem>>, vector<1x8x128xf32>
    %225 = vector.shape_cast %224 : vector<1x8x128xf32> to vector<8x128xf32>
    %226 = vector.broadcast %107 : f32 to vector<8x128xf32>
    %227 = arith.mulf %225, %226 : vector<8x128xf32>
    %228 = arith.addf %217, %227 : vector<8x128xf32>
    %229 = vector.broadcast %134 : f32 to vector<8x128xf32>
    %230 = arith.mulf %225, %229 : vector<8x128xf32>
    %231 = arith.addf %220, %230 : vector<8x128xf32>
    %232 = vector.broadcast %161 : f32 to vector<8x128xf32>
    %233 = arith.mulf %225, %232 : vector<8x128xf32>
    %234 = arith.addf %223, %233 : vector<8x128xf32>
    %c0_100 = arith.constant 0 : index
    %c8_101 = arith.constant 8 : index
    %c0_102 = arith.constant 0 : index
    %235 = vector.load %arg9[%c0_100, %c8_101, %c0_102] : memref<3x32x128xf32, #tpu.memory_space<vmem>>, vector<1x8x128xf32>
    %236 = vector.shape_cast %235 : vector<1x8x128xf32> to vector<8x128xf32>
    %237 = vector.broadcast %108 : f32 to vector<8x128xf32>
    %238 = arith.mulf %236, %237 : vector<8x128xf32>
    %239 = arith.addf %228, %238 : vector<8x128xf32>
    %240 = vector.broadcast %135 : f32 to vector<8x128xf32>
    %241 = arith.mulf %236, %240 : vector<8x128xf32>
    %242 = arith.addf %231, %241 : vector<8x128xf32>
    %243 = vector.broadcast %162 : f32 to vector<8x128xf32>
    %244 = arith.mulf %236, %243 : vector<8x128xf32>
    %245 = arith.addf %234, %244 : vector<8x128xf32>
    %c0_103 = arith.constant 0 : index
    %c8_104 = arith.constant 8 : index
    %c0_105 = arith.constant 0 : index
    %246 = vector.load %arg10[%c0_103, %c8_104, %c0_105] : memref<3x32x128xf32, #tpu.memory_space<vmem>>, vector<1x8x128xf32>
    %247 = vector.shape_cast %246 : vector<1x8x128xf32> to vector<8x128xf32>
    %248 = vector.broadcast %109 : f32 to vector<8x128xf32>
    %249 = arith.mulf %247, %248 : vector<8x128xf32>
    %250 = arith.addf %239, %249 : vector<8x128xf32>
    %251 = vector.broadcast %136 : f32 to vector<8x128xf32>
    %252 = arith.mulf %247, %251 : vector<8x128xf32>
    %253 = arith.addf %242, %252 : vector<8x128xf32>
    %254 = vector.broadcast %163 : f32 to vector<8x128xf32>
    %255 = arith.mulf %247, %254 : vector<8x128xf32>
    %256 = arith.addf %245, %255 : vector<8x128xf32>
    %c0_106 = arith.constant 0 : index
    %c9_107 = arith.constant 9 : index
    %c0_108 = arith.constant 0 : index
    %257 = vector.load %arg8[%c0_106, %c9_107, %c0_108] : memref<3x32x128xf32, #tpu.memory_space<vmem>>, vector<1x8x128xf32>
    %258 = vector.shape_cast %257 : vector<1x8x128xf32> to vector<8x128xf32>
    %259 = vector.broadcast %110 : f32 to vector<8x128xf32>
    %260 = arith.mulf %258, %259 : vector<8x128xf32>
    %261 = arith.addf %250, %260 : vector<8x128xf32>
    %262 = vector.broadcast %137 : f32 to vector<8x128xf32>
    %263 = arith.mulf %258, %262 : vector<8x128xf32>
    %264 = arith.addf %253, %263 : vector<8x128xf32>
    %265 = vector.broadcast %164 : f32 to vector<8x128xf32>
    %266 = arith.mulf %258, %265 : vector<8x128xf32>
    %267 = arith.addf %256, %266 : vector<8x128xf32>
    %c0_109 = arith.constant 0 : index
    %c9_110 = arith.constant 9 : index
    %c0_111 = arith.constant 0 : index
    %268 = vector.load %arg9[%c0_109, %c9_110, %c0_111] : memref<3x32x128xf32, #tpu.memory_space<vmem>>, vector<1x8x128xf32>
    %269 = vector.shape_cast %268 : vector<1x8x128xf32> to vector<8x128xf32>
    %270 = vector.broadcast %111 : f32 to vector<8x128xf32>
    %271 = arith.mulf %269, %270 : vector<8x128xf32>
    %272 = arith.addf %261, %271 : vector<8x128xf32>
    %273 = vector.broadcast %138 : f32 to vector<8x128xf32>
    %274 = arith.mulf %269, %273 : vector<8x128xf32>
    %275 = arith.addf %264, %274 : vector<8x128xf32>
    %276 = vector.broadcast %165 : f32 to vector<8x128xf32>
    %277 = arith.mulf %269, %276 : vector<8x128xf32>
    %278 = arith.addf %267, %277 : vector<8x128xf32>
    %c0_112 = arith.constant 0 : index
    %c9_113 = arith.constant 9 : index
    %c0_114 = arith.constant 0 : index
    %279 = vector.load %arg10[%c0_112, %c9_113, %c0_114] : memref<3x32x128xf32, #tpu.memory_space<vmem>>, vector<1x8x128xf32>
    %280 = vector.shape_cast %279 : vector<1x8x128xf32> to vector<8x128xf32>
    %281 = vector.broadcast %112 : f32 to vector<8x128xf32>
    %282 = arith.mulf %280, %281 : vector<8x128xf32>
    %283 = arith.addf %272, %282 : vector<8x128xf32>
    %284 = vector.broadcast %139 : f32 to vector<8x128xf32>
    %285 = arith.mulf %280, %284 : vector<8x128xf32>
    %286 = arith.addf %275, %285 : vector<8x128xf32>
    %287 = vector.broadcast %166 : f32 to vector<8x128xf32>
    %288 = arith.mulf %280, %287 : vector<8x128xf32>
    %289 = arith.addf %278, %288 : vector<8x128xf32>
    %c1_115 = arith.constant 1 : index
    %c7_116 = arith.constant 7 : index
    %c0_117 = arith.constant 0 : index
    %290 = vector.load %arg8[%c1_115, %c7_116, %c0_117] : memref<3x32x128xf32, #tpu.memory_space<vmem>>, vector<1x8x128xf32>
    %291 = vector.shape_cast %290 : vector<1x8x128xf32> to vector<8x128xf32>
    %292 = vector.broadcast %113 : f32 to vector<8x128xf32>
    %293 = arith.mulf %291, %292 : vector<8x128xf32>
    %294 = arith.addf %283, %293 : vector<8x128xf32>
    %295 = vector.broadcast %140 : f32 to vector<8x128xf32>
    %296 = arith.mulf %291, %295 : vector<8x128xf32>
    %297 = arith.addf %286, %296 : vector<8x128xf32>
    %298 = vector.broadcast %167 : f32 to vector<8x128xf32>
    %299 = arith.mulf %291, %298 : vector<8x128xf32>
    %300 = arith.addf %289, %299 : vector<8x128xf32>
    %c1_118 = arith.constant 1 : index
    %c7_119 = arith.constant 7 : index
    %c0_120 = arith.constant 0 : index
    %301 = vector.load %arg9[%c1_118, %c7_119, %c0_120] : memref<3x32x128xf32, #tpu.memory_space<vmem>>, vector<1x8x128xf32>
    %302 = vector.shape_cast %301 : vector<1x8x128xf32> to vector<8x128xf32>
    %303 = vector.broadcast %114 : f32 to vector<8x128xf32>
    %304 = arith.mulf %302, %303 : vector<8x128xf32>
    %305 = arith.addf %294, %304 : vector<8x128xf32>
    %306 = vector.broadcast %141 : f32 to vector<8x128xf32>
    %307 = arith.mulf %302, %306 : vector<8x128xf32>
    %308 = arith.addf %297, %307 : vector<8x128xf32>
    %309 = vector.broadcast %168 : f32 to vector<8x128xf32>
    %310 = arith.mulf %302, %309 : vector<8x128xf32>
    %311 = arith.addf %300, %310 : vector<8x128xf32>
    %c1_121 = arith.constant 1 : index
    %c7_122 = arith.constant 7 : index
    %c0_123 = arith.constant 0 : index
    %312 = vector.load %arg10[%c1_121, %c7_122, %c0_123] : memref<3x32x128xf32, #tpu.memory_space<vmem>>, vector<1x8x128xf32>
    %313 = vector.shape_cast %312 : vector<1x8x128xf32> to vector<8x128xf32>
    %314 = vector.broadcast %115 : f32 to vector<8x128xf32>
    %315 = arith.mulf %313, %314 : vector<8x128xf32>
    %316 = arith.addf %305, %315 : vector<8x128xf32>
    %317 = vector.broadcast %142 : f32 to vector<8x128xf32>
    %318 = arith.mulf %313, %317 : vector<8x128xf32>
    %319 = arith.addf %308, %318 : vector<8x128xf32>
    %320 = vector.broadcast %169 : f32 to vector<8x128xf32>
    %321 = arith.mulf %313, %320 : vector<8x128xf32>
    %322 = arith.addf %311, %321 : vector<8x128xf32>
    %c1_124 = arith.constant 1 : index
    %c8_125 = arith.constant 8 : index
    %c0_126 = arith.constant 0 : index
    %323 = vector.load %arg8[%c1_124, %c8_125, %c0_126] : memref<3x32x128xf32, #tpu.memory_space<vmem>>, vector<1x8x128xf32>
    %324 = vector.shape_cast %323 : vector<1x8x128xf32> to vector<8x128xf32>
    %325 = vector.broadcast %116 : f32 to vector<8x128xf32>
    %326 = arith.mulf %324, %325 : vector<8x128xf32>
    %327 = arith.addf %316, %326 : vector<8x128xf32>
    %328 = vector.broadcast %143 : f32 to vector<8x128xf32>
    %329 = arith.mulf %324, %328 : vector<8x128xf32>
    %330 = arith.addf %319, %329 : vector<8x128xf32>
    %331 = vector.broadcast %170 : f32 to vector<8x128xf32>
    %332 = arith.mulf %324, %331 : vector<8x128xf32>
    %333 = arith.addf %322, %332 : vector<8x128xf32>
    %c1_127 = arith.constant 1 : index
    %c8_128 = arith.constant 8 : index
    %c0_129 = arith.constant 0 : index
    %334 = vector.load %arg9[%c1_127, %c8_128, %c0_129] : memref<3x32x128xf32, #tpu.memory_space<vmem>>, vector<1x8x128xf32>
    %335 = vector.shape_cast %334 : vector<1x8x128xf32> to vector<8x128xf32>
    %336 = vector.broadcast %117 : f32 to vector<8x128xf32>
    %337 = arith.mulf %335, %336 : vector<8x128xf32>
    %338 = arith.addf %327, %337 : vector<8x128xf32>
    %339 = vector.broadcast %144 : f32 to vector<8x128xf32>
    %340 = arith.mulf %335, %339 : vector<8x128xf32>
    %341 = arith.addf %330, %340 : vector<8x128xf32>
    %342 = vector.broadcast %171 : f32 to vector<8x128xf32>
    %343 = arith.mulf %335, %342 : vector<8x128xf32>
    %344 = arith.addf %333, %343 : vector<8x128xf32>
    %c1_130 = arith.constant 1 : index
    %c8_131 = arith.constant 8 : index
    %c0_132 = arith.constant 0 : index
    %345 = vector.load %arg10[%c1_130, %c8_131, %c0_132] : memref<3x32x128xf32, #tpu.memory_space<vmem>>, vector<1x8x128xf32>
    %346 = vector.shape_cast %345 : vector<1x8x128xf32> to vector<8x128xf32>
    %347 = vector.broadcast %118 : f32 to vector<8x128xf32>
    %348 = arith.mulf %346, %347 : vector<8x128xf32>
    %349 = arith.addf %338, %348 : vector<8x128xf32>
    %350 = vector.broadcast %145 : f32 to vector<8x128xf32>
    %351 = arith.mulf %346, %350 : vector<8x128xf32>
    %352 = arith.addf %341, %351 : vector<8x128xf32>
    %353 = vector.broadcast %172 : f32 to vector<8x128xf32>
    %354 = arith.mulf %346, %353 : vector<8x128xf32>
    %355 = arith.addf %344, %354 : vector<8x128xf32>
    %c1_133 = arith.constant 1 : index
    %c9_134 = arith.constant 9 : index
    %c0_135 = arith.constant 0 : index
    %356 = vector.load %arg8[%c1_133, %c9_134, %c0_135] : memref<3x32x128xf32, #tpu.memory_space<vmem>>, vector<1x8x128xf32>
    %357 = vector.shape_cast %356 : vector<1x8x128xf32> to vector<8x128xf32>
    %358 = vector.broadcast %119 : f32 to vector<8x128xf32>
    %359 = arith.mulf %357, %358 : vector<8x128xf32>
    %360 = arith.addf %349, %359 : vector<8x128xf32>
    %361 = vector.broadcast %146 : f32 to vector<8x128xf32>
    %362 = arith.mulf %357, %361 : vector<8x128xf32>
    %363 = arith.addf %352, %362 : vector<8x128xf32>
    %364 = vector.broadcast %173 : f32 to vector<8x128xf32>
    %365 = arith.mulf %357, %364 : vector<8x128xf32>
    %366 = arith.addf %355, %365 : vector<8x128xf32>
    %c1_136 = arith.constant 1 : index
    %c9_137 = arith.constant 9 : index
    %c0_138 = arith.constant 0 : index
    %367 = vector.load %arg9[%c1_136, %c9_137, %c0_138] : memref<3x32x128xf32, #tpu.memory_space<vmem>>, vector<1x8x128xf32>
    %368 = vector.shape_cast %367 : vector<1x8x128xf32> to vector<8x128xf32>
    %369 = vector.broadcast %120 : f32 to vector<8x128xf32>
    %370 = arith.mulf %368, %369 : vector<8x128xf32>
    %371 = arith.addf %360, %370 : vector<8x128xf32>
    %372 = vector.broadcast %147 : f32 to vector<8x128xf32>
    %373 = arith.mulf %368, %372 : vector<8x128xf32>
    %374 = arith.addf %363, %373 : vector<8x128xf32>
    %375 = vector.broadcast %174 : f32 to vector<8x128xf32>
    %376 = arith.mulf %368, %375 : vector<8x128xf32>
    %377 = arith.addf %366, %376 : vector<8x128xf32>
    %c1_139 = arith.constant 1 : index
    %c9_140 = arith.constant 9 : index
    %c0_141 = arith.constant 0 : index
    %378 = vector.load %arg10[%c1_139, %c9_140, %c0_141] : memref<3x32x128xf32, #tpu.memory_space<vmem>>, vector<1x8x128xf32>
    %379 = vector.shape_cast %378 : vector<1x8x128xf32> to vector<8x128xf32>
    %380 = vector.broadcast %121 : f32 to vector<8x128xf32>
    %381 = arith.mulf %379, %380 : vector<8x128xf32>
    %382 = arith.addf %371, %381 : vector<8x128xf32>
    %383 = vector.broadcast %148 : f32 to vector<8x128xf32>
    %384 = arith.mulf %379, %383 : vector<8x128xf32>
    %385 = arith.addf %374, %384 : vector<8x128xf32>
    %386 = vector.broadcast %175 : f32 to vector<8x128xf32>
    %387 = arith.mulf %379, %386 : vector<8x128xf32>
    %388 = arith.addf %377, %387 : vector<8x128xf32>
    %c2_142 = arith.constant 2 : index
    %c7_143 = arith.constant 7 : index
    %c0_144 = arith.constant 0 : index
    %389 = vector.load %arg8[%c2_142, %c7_143, %c0_144] : memref<3x32x128xf32, #tpu.memory_space<vmem>>, vector<1x8x128xf32>
    %390 = vector.shape_cast %389 : vector<1x8x128xf32> to vector<8x128xf32>
    %391 = vector.broadcast %122 : f32 to vector<8x128xf32>
    %392 = arith.mulf %390, %391 : vector<8x128xf32>
    %393 = arith.addf %382, %392 : vector<8x128xf32>
    %394 = vector.broadcast %149 : f32 to vector<8x128xf32>
    %395 = arith.mulf %390, %394 : vector<8x128xf32>
    %396 = arith.addf %385, %395 : vector<8x128xf32>
    %397 = vector.broadcast %176 : f32 to vector<8x128xf32>
    %398 = arith.mulf %390, %397 : vector<8x128xf32>
    %399 = arith.addf %388, %398 : vector<8x128xf32>
    %c2_145 = arith.constant 2 : index
    %c7_146 = arith.constant 7 : index
    %c0_147 = arith.constant 0 : index
    %400 = vector.load %arg9[%c2_145, %c7_146, %c0_147] : memref<3x32x128xf32, #tpu.memory_space<vmem>>, vector<1x8x128xf32>
    %401 = vector.shape_cast %400 : vector<1x8x128xf32> to vector<8x128xf32>
    %402 = vector.broadcast %123 : f32 to vector<8x128xf32>
    %403 = arith.mulf %401, %402 : vector<8x128xf32>
    %404 = arith.addf %393, %403 : vector<8x128xf32>
    %405 = vector.broadcast %150 : f32 to vector<8x128xf32>
    %406 = arith.mulf %401, %405 : vector<8x128xf32>
    %407 = arith.addf %396, %406 : vector<8x128xf32>
    %408 = vector.broadcast %177 : f32 to vector<8x128xf32>
    %409 = arith.mulf %401, %408 : vector<8x128xf32>
    %410 = arith.addf %399, %409 : vector<8x128xf32>
    %c2_148 = arith.constant 2 : index
    %c7_149 = arith.constant 7 : index
    %c0_150 = arith.constant 0 : index
    %411 = vector.load %arg10[%c2_148, %c7_149, %c0_150] : memref<3x32x128xf32, #tpu.memory_space<vmem>>, vector<1x8x128xf32>
    %412 = vector.shape_cast %411 : vector<1x8x128xf32> to vector<8x128xf32>
    %413 = vector.broadcast %124 : f32 to vector<8x128xf32>
    %414 = arith.mulf %412, %413 : vector<8x128xf32>
    %415 = arith.addf %404, %414 : vector<8x128xf32>
    %416 = vector.broadcast %151 : f32 to vector<8x128xf32>
    %417 = arith.mulf %412, %416 : vector<8x128xf32>
    %418 = arith.addf %407, %417 : vector<8x128xf32>
    %419 = vector.broadcast %178 : f32 to vector<8x128xf32>
    %420 = arith.mulf %412, %419 : vector<8x128xf32>
    %421 = arith.addf %410, %420 : vector<8x128xf32>
    %c2_151 = arith.constant 2 : index
    %c8_152 = arith.constant 8 : index
    %c0_153 = arith.constant 0 : index
    %422 = vector.load %arg8[%c2_151, %c8_152, %c0_153] : memref<3x32x128xf32, #tpu.memory_space<vmem>>, vector<1x8x128xf32>
    %423 = vector.shape_cast %422 : vector<1x8x128xf32> to vector<8x128xf32>
    %424 = vector.broadcast %125 : f32 to vector<8x128xf32>
    %425 = arith.mulf %423, %424 : vector<8x128xf32>
    %426 = arith.addf %415, %425 : vector<8x128xf32>
    %427 = vector.broadcast %152 : f32 to vector<8x128xf32>
    %428 = arith.mulf %423, %427 : vector<8x128xf32>
    %429 = arith.addf %418, %428 : vector<8x128xf32>
    %430 = vector.broadcast %179 : f32 to vector<8x128xf32>
    %431 = arith.mulf %423, %430 : vector<8x128xf32>
    %432 = arith.addf %421, %431 : vector<8x128xf32>
    %c2_154 = arith.constant 2 : index
    %c8_155 = arith.constant 8 : index
    %c0_156 = arith.constant 0 : index
    %433 = vector.load %arg9[%c2_154, %c8_155, %c0_156] : memref<3x32x128xf32, #tpu.memory_space<vmem>>, vector<1x8x128xf32>
    %434 = vector.shape_cast %433 : vector<1x8x128xf32> to vector<8x128xf32>
    %435 = vector.broadcast %126 : f32 to vector<8x128xf32>
    %436 = arith.mulf %434, %435 : vector<8x128xf32>
    %437 = arith.addf %426, %436 : vector<8x128xf32>
    %438 = vector.broadcast %153 : f32 to vector<8x128xf32>
    %439 = arith.mulf %434, %438 : vector<8x128xf32>
    %440 = arith.addf %429, %439 : vector<8x128xf32>
    %441 = vector.broadcast %180 : f32 to vector<8x128xf32>
    %442 = arith.mulf %434, %441 : vector<8x128xf32>
    %443 = arith.addf %432, %442 : vector<8x128xf32>
    %c2_157 = arith.constant 2 : index
    %c8_158 = arith.constant 8 : index
    %c0_159 = arith.constant 0 : index
    %444 = vector.load %arg10[%c2_157, %c8_158, %c0_159] : memref<3x32x128xf32, #tpu.memory_space<vmem>>, vector<1x8x128xf32>
    %445 = vector.shape_cast %444 : vector<1x8x128xf32> to vector<8x128xf32>
    %446 = vector.broadcast %127 : f32 to vector<8x128xf32>
    %447 = arith.mulf %445, %446 : vector<8x128xf32>
    %448 = arith.addf %437, %447 : vector<8x128xf32>
    %449 = vector.broadcast %154 : f32 to vector<8x128xf32>
    %450 = arith.mulf %445, %449 : vector<8x128xf32>
    %451 = arith.addf %440, %450 : vector<8x128xf32>
    %452 = vector.broadcast %181 : f32 to vector<8x128xf32>
    %453 = arith.mulf %445, %452 : vector<8x128xf32>
    %454 = arith.addf %443, %453 : vector<8x128xf32>
    %c2_160 = arith.constant 2 : index
    %c9_161 = arith.constant 9 : index
    %c0_162 = arith.constant 0 : index
    %455 = vector.load %arg8[%c2_160, %c9_161, %c0_162] : memref<3x32x128xf32, #tpu.memory_space<vmem>>, vector<1x8x128xf32>
    %456 = vector.shape_cast %455 : vector<1x8x128xf32> to vector<8x128xf32>
    %457 = vector.broadcast %128 : f32 to vector<8x128xf32>
    %458 = arith.mulf %456, %457 : vector<8x128xf32>
    %459 = arith.addf %448, %458 : vector<8x128xf32>
    %460 = vector.broadcast %155 : f32 to vector<8x128xf32>
    %461 = arith.mulf %456, %460 : vector<8x128xf32>
    %462 = arith.addf %451, %461 : vector<8x128xf32>
    %463 = vector.broadcast %182 : f32 to vector<8x128xf32>
    %464 = arith.mulf %456, %463 : vector<8x128xf32>
    %465 = arith.addf %454, %464 : vector<8x128xf32>
    %c2_163 = arith.constant 2 : index
    %c9_164 = arith.constant 9 : index
    %c0_165 = arith.constant 0 : index
    %466 = vector.load %arg9[%c2_163, %c9_164, %c0_165] : memref<3x32x128xf32, #tpu.memory_space<vmem>>, vector<1x8x128xf32>
    %467 = vector.shape_cast %466 : vector<1x8x128xf32> to vector<8x128xf32>
    %468 = vector.broadcast %129 : f32 to vector<8x128xf32>
    %469 = arith.mulf %467, %468 : vector<8x128xf32>
    %470 = arith.addf %459, %469 : vector<8x128xf32>
    %471 = vector.broadcast %156 : f32 to vector<8x128xf32>
    %472 = arith.mulf %467, %471 : vector<8x128xf32>
    %473 = arith.addf %462, %472 : vector<8x128xf32>
    %474 = vector.broadcast %183 : f32 to vector<8x128xf32>
    %475 = arith.mulf %467, %474 : vector<8x128xf32>
    %476 = arith.addf %465, %475 : vector<8x128xf32>
    %c2_166 = arith.constant 2 : index
    %c9_167 = arith.constant 9 : index
    %c0_168 = arith.constant 0 : index
    %477 = vector.load %arg10[%c2_166, %c9_167, %c0_168] : memref<3x32x128xf32, #tpu.memory_space<vmem>>, vector<1x8x128xf32>
    %478 = vector.shape_cast %477 : vector<1x8x128xf32> to vector<8x128xf32>
    %479 = vector.broadcast %130 : f32 to vector<8x128xf32>
    %480 = arith.mulf %478, %479 : vector<8x128xf32>
    %481 = arith.addf %470, %480 : vector<8x128xf32>
    %482 = vector.broadcast %157 : f32 to vector<8x128xf32>
    %483 = arith.mulf %478, %482 : vector<8x128xf32>
    %484 = arith.addf %473, %483 : vector<8x128xf32>
    %485 = vector.broadcast %184 : f32 to vector<8x128xf32>
    %486 = arith.mulf %478, %485 : vector<8x128xf32>
    %487 = arith.addf %476, %486 : vector<8x128xf32>
    %488 = math.tanh %481 : vector<8x128xf32>
    %c0_169 = arith.constant 0 : index
    %c0_170 = arith.constant 0 : index
    %c0_171 = arith.constant 0 : index
    %c0_172 = arith.constant 0 : index
    %489 = vector.load %arg7[%c0_169, %c0_170, %c0_171, %c0_172] : memref<1x3x16x128xf32, #tpu.memory_space<vmem>>, vector<1x1x8x128xf32>
    %490 = vector.shape_cast %489 : vector<1x1x8x128xf32> to vector<8x128xf32>
    %491 = vector.shape_cast %488 : vector<8x128xf32> to vector<1x1x8x128xf32>
    tpu.vector_store %arg7[%c0_169, %c0_170, %c0_171, %c0_172], %491 {strides = array<i32>} : memref<1x3x16x128xf32, #tpu.memory_space<vmem>>, vector<1x1x8x128xf32>,
    %492 = math.tanh %484 : vector<8x128xf32>
    %c0_173 = arith.constant 0 : index
    %c1_174 = arith.constant 1 : index
    %c0_175 = arith.constant 0 : index
    %c0_176 = arith.constant 0 : index
    %493 = vector.load %arg7[%c0_173, %c1_174, %c0_175, %c0_176] : memref<1x3x16x128xf32, #tpu.memory_space<vmem>>, vector<1x1x8x128xf32>
    %494 = vector.shape_cast %493 : vector<1x1x8x128xf32> to vector<8x128xf32>
    %495 = vector.shape_cast %492 : vector<8x128xf32> to vector<1x1x8x128xf32>
    tpu.vector_store %arg7[%c0_173, %c1_174, %c0_175, %c0_176], %495 {strides = array<i32>} : memref<1x3x16x128xf32, #tpu.memory_space<vmem>>, vector<1x1x8x128xf32>,
    %496 = math.tanh %487 : vector<8x128xf32>
    %c0_177 = arith.constant 0 : index
    %c2_178 = arith.constant 2 : index
    %c0_179 = arith.constant 0 : index
    %c0_180 = arith.constant 0 : index
    %497 = vector.load %arg7[%c0_177, %c2_178, %c0_179, %c0_180] : memref<1x3x16x128xf32, #tpu.memory_space<vmem>>, vector<1x1x8x128xf32>
    %498 = vector.shape_cast %497 : vector<1x1x8x128xf32> to vector<8x128xf32>
    %499 = vector.shape_cast %496 : vector<8x128xf32> to vector<1x1x8x128xf32>
    tpu.vector_store %arg7[%c0_177, %c2_178, %c0_179, %c0_180], %499 {strides = array<i32>} : memref<1x3x16x128xf32, #tpu.memory_space<vmem>>, vector<1x1x8x128xf32>,
    %c0_181 = arith.constant 0 : index
    %c15_182 = arith.constant 15 : index
    %c0_183 = arith.constant 0 : index
    %500 = vector.load %arg8[%c0_181, %c15_182, %c0_183] : memref<3x32x128xf32, #tpu.memory_space<vmem>>, vector<1x8x128xf32>
    %501 = vector.shape_cast %500 : vector<1x8x128xf32> to vector<8x128xf32>
    %502 = vector.broadcast %104 : f32 to vector<8x128xf32>
    %503 = arith.mulf %501, %502 : vector<8x128xf32>
    %504 = arith.addf %186, %503 : vector<8x128xf32>
    %505 = vector.broadcast %131 : f32 to vector<8x128xf32>
    %506 = arith.mulf %501, %505 : vector<8x128xf32>
    %507 = arith.addf %188, %506 : vector<8x128xf32>
    %508 = vector.broadcast %158 : f32 to vector<8x128xf32>
    %509 = arith.mulf %501, %508 : vector<8x128xf32>
    %510 = arith.addf %190, %509 : vector<8x128xf32>
    %c0_184 = arith.constant 0 : index
    %c15_185 = arith.constant 15 : index
    %c0_186 = arith.constant 0 : index
    %511 = vector.load %arg9[%c0_184, %c15_185, %c0_186] : memref<3x32x128xf32, #tpu.memory_space<vmem>>, vector<1x8x128xf32>
    %512 = vector.shape_cast %511 : vector<1x8x128xf32> to vector<8x128xf32>
    %513 = vector.broadcast %105 : f32 to vector<8x128xf32>
    %514 = arith.mulf %512, %513 : vector<8x128xf32>
    %515 = arith.addf %504, %514 : vector<8x128xf32>
    %516 = vector.broadcast %132 : f32 to vector<8x128xf32>
    %517 = arith.mulf %512, %516 : vector<8x128xf32>
    %518 = arith.addf %507, %517 : vector<8x128xf32>
    %519 = vector.broadcast %159 : f32 to vector<8x128xf32>
    %520 = arith.mulf %512, %519 : vector<8x128xf32>
    %521 = arith.addf %510, %520 : vector<8x128xf32>
    %c0_187 = arith.constant 0 : index
    %c15_188 = arith.constant 15 : index
    %c0_189 = arith.constant 0 : index
    %522 = vector.load %arg10[%c0_187, %c15_188, %c0_189] : memref<3x32x128xf32, #tpu.memory_space<vmem>>, vector<1x8x128xf32>
    %523 = vector.shape_cast %522 : vector<1x8x128xf32> to vector<8x128xf32>
    %524 = vector.broadcast %106 : f32 to vector<8x128xf32>
    %525 = arith.mulf %523, %524 : vector<8x128xf32>
    %526 = arith.addf %515, %525 : vector<8x128xf32>
    %527 = vector.broadcast %133 : f32 to vector<8x128xf32>
    %528 = arith.mulf %523, %527 : vector<8x128xf32>
    %529 = arith.addf %518, %528 : vector<8x128xf32>
    %530 = vector.broadcast %160 : f32 to vector<8x128xf32>
    %531 = arith.mulf %523, %530 : vector<8x128xf32>
    %532 = arith.addf %521, %531 : vector<8x128xf32>
    %c0_190 = arith.constant 0 : index
    %c16_191 = arith.constant 16 : index
    %c0_192 = arith.constant 0 : index
    %533 = vector.load %arg8[%c0_190, %c16_191, %c0_192] : memref<3x32x128xf32, #tpu.memory_space<vmem>>, vector<1x8x128xf32>
    %534 = vector.shape_cast %533 : vector<1x8x128xf32> to vector<8x128xf32>
    %535 = vector.broadcast %107 : f32 to vector<8x128xf32>
    %536 = arith.mulf %534, %535 : vector<8x128xf32>
    %537 = arith.addf %526, %536 : vector<8x128xf32>
    %538 = vector.broadcast %134 : f32 to vector<8x128xf32>
    %539 = arith.mulf %534, %538 : vector<8x128xf32>
    %540 = arith.addf %529, %539 : vector<8x128xf32>
    %541 = vector.broadcast %161 : f32 to vector<8x128xf32>
    %542 = arith.mulf %534, %541 : vector<8x128xf32>
    %543 = arith.addf %532, %542 : vector<8x128xf32>
    %c0_193 = arith.constant 0 : index
    %c16_194 = arith.constant 16 : index
    %c0_195 = arith.constant 0 : index
    %544 = vector.load %arg9[%c0_193, %c16_194, %c0_195] : memref<3x32x128xf32, #tpu.memory_space<vmem>>, vector<1x8x128xf32>
    %545 = vector.shape_cast %544 : vector<1x8x128xf32> to vector<8x128xf32>
    %546 = vector.broadcast %108 : f32 to vector<8x128xf32>
    %547 = arith.mulf %545, %546 : vector<8x128xf32>
    %548 = arith.addf %537, %547 : vector<8x128xf32>
    %549 = vector.broadcast %135 : f32 to vector<8x128xf32>
    %550 = arith.mulf %545, %549 : vector<8x128xf32>
    %551 = arith.addf %540, %550 : vector<8x128xf32>
    %552 = vector.broadcast %162 : f32 to vector<8x128xf32>
    %553 = arith.mulf %545, %552 : vector<8x128xf32>
    %554 = arith.addf %543, %553 : vector<8x128xf32>
    %c0_196 = arith.constant 0 : index
    %c16_197 = arith.constant 16 : index
    %c0_198 = arith.constant 0 : index
    %555 = vector.load %arg10[%c0_196, %c16_197, %c0_198] : memref<3x32x128xf32, #tpu.memory_space<vmem>>, vector<1x8x128xf32>
    %556 = vector.shape_cast %555 : vector<1x8x128xf32> to vector<8x128xf32>
    %557 = vector.broadcast %109 : f32 to vector<8x128xf32>
    %558 = arith.mulf %556, %557 : vector<8x128xf32>
    %559 = arith.addf %548, %558 : vector<8x128xf32>
    %560 = vector.broadcast %136 : f32 to vector<8x128xf32>
    %561 = arith.mulf %556, %560 : vector<8x128xf32>
    %562 = arith.addf %551, %561 : vector<8x128xf32>
    %563 = vector.broadcast %163 : f32 to vector<8x128xf32>
    %564 = arith.mulf %556, %563 : vector<8x128xf32>
    %565 = arith.addf %554, %564 : vector<8x128xf32>
    %c0_199 = arith.constant 0 : index
    %c17_200 = arith.constant 17 : index
    %c0_201 = arith.constant 0 : index
    %566 = vector.load %arg8[%c0_199, %c17_200, %c0_201] : memref<3x32x128xf32, #tpu.memory_space<vmem>>, vector<1x8x128xf32>
    %567 = vector.shape_cast %566 : vector<1x8x128xf32> to vector<8x128xf32>
    %568 = vector.broadcast %110 : f32 to vector<8x128xf32>
    %569 = arith.mulf %567, %568 : vector<8x128xf32>
    %570 = arith.addf %559, %569 : vector<8x128xf32>
    %571 = vector.broadcast %137 : f32 to vector<8x128xf32>
    %572 = arith.mulf %567, %571 : vector<8x128xf32>
    %573 = arith.addf %562, %572 : vector<8x128xf32>
    %574 = vector.broadcast %164 : f32 to vector<8x128xf32>
    %575 = arith.mulf %567, %574 : vector<8x128xf32>
    %576 = arith.addf %565, %575 : vector<8x128xf32>
    %c0_202 = arith.constant 0 : index
    %c17_203 = arith.constant 17 : index
    %c0_204 = arith.constant 0 : index
    %577 = vector.load %arg9[%c0_202, %c17_203, %c0_204] : memref<3x32x128xf32, #tpu.memory_space<vmem>>, vector<1x8x128xf32>
    %578 = vector.shape_cast %577 : vector<1x8x128xf32> to vector<8x128xf32>
    %579 = vector.broadcast %111 : f32 to vector<8x128xf32>
    %580 = arith.mulf %578, %579 : vector<8x128xf32>
    %581 = arith.addf %570, %580 : vector<8x128xf32>
    %582 = vector.broadcast %138 : f32 to vector<8x128xf32>
    %583 = arith.mulf %578, %582 : vector<8x128xf32>
    %584 = arith.addf %573, %583 : vector<8x128xf32>
    %585 = vector.broadcast %165 : f32 to vector<8x128xf32>
    %586 = arith.mulf %578, %585 : vector<8x128xf32>
    %587 = arith.addf %576, %586 : vector<8x128xf32>
    %c0_205 = arith.constant 0 : index
    %c17_206 = arith.constant 17 : index
    %c0_207 = arith.constant 0 : index
    %588 = vector.load %arg10[%c0_205, %c17_206, %c0_207] : memref<3x32x128xf32, #tpu.memory_space<vmem>>, vector<1x8x128xf32>
    %589 = vector.shape_cast %588 : vector<1x8x128xf32> to vector<8x128xf32>
    %590 = vector.broadcast %112 : f32 to vector<8x128xf32>
    %591 = arith.mulf %589, %590 : vector<8x128xf32>
    %592 = arith.addf %581, %591 : vector<8x128xf32>
    %593 = vector.broadcast %139 : f32 to vector<8x128xf32>
    %594 = arith.mulf %589, %593 : vector<8x128xf32>
    %595 = arith.addf %584, %594 : vector<8x128xf32>
    %596 = vector.broadcast %166 : f32 to vector<8x128xf32>
    %597 = arith.mulf %589, %596 : vector<8x128xf32>
    %598 = arith.addf %587, %597 : vector<8x128xf32>
    %c1_208 = arith.constant 1 : index
    %c15_209 = arith.constant 15 : index
    %c0_210 = arith.constant 0 : index
    %599 = vector.load %arg8[%c1_208, %c15_209, %c0_210] : memref<3x32x128xf32, #tpu.memory_space<vmem>>, vector<1x8x128xf32>
    %600 = vector.shape_cast %599 : vector<1x8x128xf32> to vector<8x128xf32>
    %601 = vector.broadcast %113 : f32 to vector<8x128xf32>
    %602 = arith.mulf %600, %601 : vector<8x128xf32>
    %603 = arith.addf %592, %602 : vector<8x128xf32>
    %604 = vector.broadcast %140 : f32 to vector<8x128xf32>
    %605 = arith.mulf %600, %604 : vector<8x128xf32>
    %606 = arith.addf %595, %605 : vector<8x128xf32>
    %607 = vector.broadcast %167 : f32 to vector<8x128xf32>
    %608 = arith.mulf %600, %607 : vector<8x128xf32>
    %609 = arith.addf %598, %608 : vector<8x128xf32>
    %c1_211 = arith.constant 1 : index
    %c15_212 = arith.constant 15 : index
    %c0_213 = arith.constant 0 : index
    %610 = vector.load %arg9[%c1_211, %c15_212, %c0_213] : memref<3x32x128xf32, #tpu.memory_space<vmem>>, vector<1x8x128xf32>
    %611 = vector.shape_cast %610 : vector<1x8x128xf32> to vector<8x128xf32>
    %612 = vector.broadcast %114 : f32 to vector<8x128xf32>
    %613 = arith.mulf %611, %612 : vector<8x128xf32>
    %614 = arith.addf %603, %613 : vector<8x128xf32>
    %615 = vector.broadcast %141 : f32 to vector<8x128xf32>
    %616 = arith.mulf %611, %615 : vector<8x128xf32>
    %617 = arith.addf %606, %616 : vector<8x128xf32>
    %618 = vector.broadcast %168 : f32 to vector<8x128xf32>
    %619 = arith.mulf %611, %618 : vector<8x128xf32>
    %620 = arith.addf %609, %619 : vector<8x128xf32>
    %c1_214 = arith.constant 1 : index
    %c15_215 = arith.constant 15 : index
    %c0_216 = arith.constant 0 : index
    %621 = vector.load %arg10[%c1_214, %c15_215, %c0_216] : memref<3x32x128xf32, #tpu.memory_space<vmem>>, vector<1x8x128xf32>
    %622 = vector.shape_cast %621 : vector<1x8x128xf32> to vector<8x128xf32>
    %623 = vector.broadcast %115 : f32 to vector<8x128xf32>
    %624 = arith.mulf %622, %623 : vector<8x128xf32>
    %625 = arith.addf %614, %624 : vector<8x128xf32>
    %626 = vector.broadcast %142 : f32 to vector<8x128xf32>
    %627 = arith.mulf %622, %626 : vector<8x128xf32>
    %628 = arith.addf %617, %627 : vector<8x128xf32>
    %629 = vector.broadcast %169 : f32 to vector<8x128xf32>
    %630 = arith.mulf %622, %629 : vector<8x128xf32>
    %631 = arith.addf %620, %630 : vector<8x128xf32>
    %c1_217 = arith.constant 1 : index
    %c16_218 = arith.constant 16 : index
    %c0_219 = arith.constant 0 : index
    %632 = vector.load %arg8[%c1_217, %c16_218, %c0_219] : memref<3x32x128xf32, #tpu.memory_space<vmem>>, vector<1x8x128xf32>
    %633 = vector.shape_cast %632 : vector<1x8x128xf32> to vector<8x128xf32>
    %634 = vector.broadcast %116 : f32 to vector<8x128xf32>
    %635 = arith.mulf %633, %634 : vector<8x128xf32>
    %636 = arith.addf %625, %635 : vector<8x128xf32>
    %637 = vector.broadcast %143 : f32 to vector<8x128xf32>
    %638 = arith.mulf %633, %637 : vector<8x128xf32>
    %639 = arith.addf %628, %638 : vector<8x128xf32>
    %640 = vector.broadcast %170 : f32 to vector<8x128xf32>
    %641 = arith.mulf %633, %640 : vector<8x128xf32>
    %642 = arith.addf %631, %641 : vector<8x128xf32>
    %c1_220 = arith.constant 1 : index
    %c16_221 = arith.constant 16 : index
    %c0_222 = arith.constant 0 : index
    %643 = vector.load %arg9[%c1_220, %c16_221, %c0_222] : memref<3x32x128xf32, #tpu.memory_space<vmem>>, vector<1x8x128xf32>
    %644 = vector.shape_cast %643 : vector<1x8x128xf32> to vector<8x128xf32>
    %645 = vector.broadcast %117 : f32 to vector<8x128xf32>
    %646 = arith.mulf %644, %645 : vector<8x128xf32>
    %647 = arith.addf %636, %646 : vector<8x128xf32>
    %648 = vector.broadcast %144 : f32 to vector<8x128xf32>
    %649 = arith.mulf %644, %648 : vector<8x128xf32>
    %650 = arith.addf %639, %649 : vector<8x128xf32>
    %651 = vector.broadcast %171 : f32 to vector<8x128xf32>
    %652 = arith.mulf %644, %651 : vector<8x128xf32>
    %653 = arith.addf %642, %652 : vector<8x128xf32>
    %c1_223 = arith.constant 1 : index
    %c16_224 = arith.constant 16 : index
    %c0_225 = arith.constant 0 : index
    %654 = vector.load %arg10[%c1_223, %c16_224, %c0_225] : memref<3x32x128xf32, #tpu.memory_space<vmem>>, vector<1x8x128xf32>
    %655 = vector.shape_cast %654 : vector<1x8x128xf32> to vector<8x128xf32>
    %656 = vector.broadcast %118 : f32 to vector<8x128xf32>
    %657 = arith.mulf %655, %656 : vector<8x128xf32>
    %658 = arith.addf %647, %657 : vector<8x128xf32>
    %659 = vector.broadcast %145 : f32 to vector<8x128xf32>
    %660 = arith.mulf %655, %659 : vector<8x128xf32>
    %661 = arith.addf %650, %660 : vector<8x128xf32>
    %662 = vector.broadcast %172 : f32 to vector<8x128xf32>
    %663 = arith.mulf %655, %662 : vector<8x128xf32>
    %664 = arith.addf %653, %663 : vector<8x128xf32>
    %c1_226 = arith.constant 1 : index
    %c17_227 = arith.constant 17 : index
    %c0_228 = arith.constant 0 : index
    %665 = vector.load %arg8[%c1_226, %c17_227, %c0_228] : memref<3x32x128xf32, #tpu.memory_space<vmem>>, vector<1x8x128xf32>
    %666 = vector.shape_cast %665 : vector<1x8x128xf32> to vector<8x128xf32>
    %667 = vector.broadcast %119 : f32 to vector<8x128xf32>
    %668 = arith.mulf %666, %667 : vector<8x128xf32>
    %669 = arith.addf %658, %668 : vector<8x128xf32>
    %670 = vector.broadcast %146 : f32 to vector<8x128xf32>
    %671 = arith.mulf %666, %670 : vector<8x128xf32>
    %672 = arith.addf %661, %671 : vector<8x128xf32>
    %673 = vector.broadcast %173 : f32 to vector<8x128xf32>
    %674 = arith.mulf %666, %673 : vector<8x128xf32>
    %675 = arith.addf %664, %674 : vector<8x128xf32>
    %c1_229 = arith.constant 1 : index
    %c17_230 = arith.constant 17 : index
    %c0_231 = arith.constant 0 : index
    %676 = vector.load %arg9[%c1_229, %c17_230, %c0_231] : memref<3x32x128xf32, #tpu.memory_space<vmem>>, vector<1x8x128xf32>
    %677 = vector.shape_cast %676 : vector<1x8x128xf32> to vector<8x128xf32>
    %678 = vector.broadcast %120 : f32 to vector<8x128xf32>
    %679 = arith.mulf %677, %678 : vector<8x128xf32>
    %680 = arith.addf %669, %679 : vector<8x128xf32>
    %681 = vector.broadcast %147 : f32 to vector<8x128xf32>
    %682 = arith.mulf %677, %681 : vector<8x128xf32>
    %683 = arith.addf %672, %682 : vector<8x128xf32>
    %684 = vector.broadcast %174 : f32 to vector<8x128xf32>
    %685 = arith.mulf %677, %684 : vector<8x128xf32>
    %686 = arith.addf %675, %685 : vector<8x128xf32>
    %c1_232 = arith.constant 1 : index
    %c17_233 = arith.constant 17 : index
    %c0_234 = arith.constant 0 : index
    %687 = vector.load %arg10[%c1_232, %c17_233, %c0_234] : memref<3x32x128xf32, #tpu.memory_space<vmem>>, vector<1x8x128xf32>
    %688 = vector.shape_cast %687 : vector<1x8x128xf32> to vector<8x128xf32>
    %689 = vector.broadcast %121 : f32 to vector<8x128xf32>
    %690 = arith.mulf %688, %689 : vector<8x128xf32>
    %691 = arith.addf %680, %690 : vector<8x128xf32>
    %692 = vector.broadcast %148 : f32 to vector<8x128xf32>
    %693 = arith.mulf %688, %692 : vector<8x128xf32>
    %694 = arith.addf %683, %693 : vector<8x128xf32>
    %695 = vector.broadcast %175 : f32 to vector<8x128xf32>
    %696 = arith.mulf %688, %695 : vector<8x128xf32>
    %697 = arith.addf %686, %696 : vector<8x128xf32>
    %c2_235 = arith.constant 2 : index
    %c15_236 = arith.constant 15 : index
    %c0_237 = arith.constant 0 : index
    %698 = vector.load %arg8[%c2_235, %c15_236, %c0_237] : memref<3x32x128xf32, #tpu.memory_space<vmem>>, vector<1x8x128xf32>
    %699 = vector.shape_cast %698 : vector<1x8x128xf32> to vector<8x128xf32>
    %700 = vector.broadcast %122 : f32 to vector<8x128xf32>
    %701 = arith.mulf %699, %700 : vector<8x128xf32>
    %702 = arith.addf %691, %701 : vector<8x128xf32>
    %703 = vector.broadcast %149 : f32 to vector<8x128xf32>
    %704 = arith.mulf %699, %703 : vector<8x128xf32>
    %705 = arith.addf %694, %704 : vector<8x128xf32>
    %706 = vector.broadcast %176 : f32 to vector<8x128xf32>
    %707 = arith.mulf %699, %706 : vector<8x128xf32>
    %708 = arith.addf %697, %707 : vector<8x128xf32>
    %c2_238 = arith.constant 2 : index
    %c15_239 = arith.constant 15 : index
    %c0_240 = arith.constant 0 : index
    %709 = vector.load %arg9[%c2_238, %c15_239, %c0_240] : memref<3x32x128xf32, #tpu.memory_space<vmem>>, vector<1x8x128xf32>
    %710 = vector.shape_cast %709 : vector<1x8x128xf32> to vector<8x128xf32>
    %711 = vector.broadcast %123 : f32 to vector<8x128xf32>
    %712 = arith.mulf %710, %711 : vector<8x128xf32>
    %713 = arith.addf %702, %712 : vector<8x128xf32>
    %714 = vector.broadcast %150 : f32 to vector<8x128xf32>
    %715 = arith.mulf %710, %714 : vector<8x128xf32>
    %716 = arith.addf %705, %715 : vector<8x128xf32>
    %717 = vector.broadcast %177 : f32 to vector<8x128xf32>
    %718 = arith.mulf %710, %717 : vector<8x128xf32>
    %719 = arith.addf %708, %718 : vector<8x128xf32>
    %c2_241 = arith.constant 2 : index
    %c15_242 = arith.constant 15 : index
    %c0_243 = arith.constant 0 : index
    %720 = vector.load %arg10[%c2_241, %c15_242, %c0_243] : memref<3x32x128xf32, #tpu.memory_space<vmem>>, vector<1x8x128xf32>
    %721 = vector.shape_cast %720 : vector<1x8x128xf32> to vector<8x128xf32>
    %722 = vector.broadcast %124 : f32 to vector<8x128xf32>
    %723 = arith.mulf %721, %722 : vector<8x128xf32>
    %724 = arith.addf %713, %723 : vector<8x128xf32>
    %725 = vector.broadcast %151 : f32 to vector<8x128xf32>
    %726 = arith.mulf %721, %725 : vector<8x128xf32>
    %727 = arith.addf %716, %726 : vector<8x128xf32>
    %728 = vector.broadcast %178 : f32 to vector<8x128xf32>
    %729 = arith.mulf %721, %728 : vector<8x128xf32>
    %730 = arith.addf %719, %729 : vector<8x128xf32>
    %c2_244 = arith.constant 2 : index
    %c16_245 = arith.constant 16 : index
    %c0_246 = arith.constant 0 : index
    %731 = vector.load %arg8[%c2_244, %c16_245, %c0_246] : memref<3x32x128xf32, #tpu.memory_space<vmem>>, vector<1x8x128xf32>
    %732 = vector.shape_cast %731 : vector<1x8x128xf32> to vector<8x128xf32>
    %733 = vector.broadcast %125 : f32 to vector<8x128xf32>
    %734 = arith.mulf %732, %733 : vector<8x128xf32>
    %735 = arith.addf %724, %734 : vector<8x128xf32>
    %736 = vector.broadcast %152 : f32 to vector<8x128xf32>
    %737 = arith.mulf %732, %736 : vector<8x128xf32>
    %738 = arith.addf %727, %737 : vector<8x128xf32>
    %739 = vector.broadcast %179 : f32 to vector<8x128xf32>
    %740 = arith.mulf %732, %739 : vector<8x128xf32>
    %741 = arith.addf %730, %740 : vector<8x128xf32>
    %c2_247 = arith.constant 2 : index
    %c16_248 = arith.constant 16 : index
    %c0_249 = arith.constant 0 : index
    %742 = vector.load %arg9[%c2_247, %c16_248, %c0_249] : memref<3x32x128xf32, #tpu.memory_space<vmem>>, vector<1x8x128xf32>
    %743 = vector.shape_cast %742 : vector<1x8x128xf32> to vector<8x128xf32>
    %744 = vector.broadcast %126 : f32 to vector<8x128xf32>
    %745 = arith.mulf %743, %744 : vector<8x128xf32>
    %746 = arith.addf %735, %745 : vector<8x128xf32>
    %747 = vector.broadcast %153 : f32 to vector<8x128xf32>
    %748 = arith.mulf %743, %747 : vector<8x128xf32>
    %749 = arith.addf %738, %748 : vector<8x128xf32>
    %750 = vector.broadcast %180 : f32 to vector<8x128xf32>
    %751 = arith.mulf %743, %750 : vector<8x128xf32>
    %752 = arith.addf %741, %751 : vector<8x128xf32>
    %c2_250 = arith.constant 2 : index
    %c16_251 = arith.constant 16 : index
    %c0_252 = arith.constant 0 : index
    %753 = vector.load %arg10[%c2_250, %c16_251, %c0_252] : memref<3x32x128xf32, #tpu.memory_space<vmem>>, vector<1x8x128xf32>
    %754 = vector.shape_cast %753 : vector<1x8x128xf32> to vector<8x128xf32>
    %755 = vector.broadcast %127 : f32 to vector<8x128xf32>
    %756 = arith.mulf %754, %755 : vector<8x128xf32>
    %757 = arith.addf %746, %756 : vector<8x128xf32>
    %758 = vector.broadcast %154 : f32 to vector<8x128xf32>
    %759 = arith.mulf %754, %758 : vector<8x128xf32>
    %760 = arith.addf %749, %759 : vector<8x128xf32>
    %761 = vector.broadcast %181 : f32 to vector<8x128xf32>
    %762 = arith.mulf %754, %761 : vector<8x128xf32>
    %763 = arith.addf %752, %762 : vector<8x128xf32>
    %c2_253 = arith.constant 2 : index
    %c17_254 = arith.constant 17 : index
    %c0_255 = arith.constant 0 : index
    %764 = vector.load %arg8[%c2_253, %c17_254, %c0_255] : memref<3x32x128xf32, #tpu.memory_space<vmem>>, vector<1x8x128xf32>
    %765 = vector.shape_cast %764 : vector<1x8x128xf32> to vector<8x128xf32>
    %766 = vector.broadcast %128 : f32 to vector<8x128xf32>
    %767 = arith.mulf %765, %766 : vector<8x128xf32>
    %768 = arith.addf %757, %767 : vector<8x128xf32>
    %769 = vector.broadcast %155 : f32 to vector<8x128xf32>
    %770 = arith.mulf %765, %769 : vector<8x128xf32>
    %771 = arith.addf %760, %770 : vector<8x128xf32>
    %772 = vector.broadcast %182 : f32 to vector<8x128xf32>
    %773 = arith.mulf %765, %772 : vector<8x128xf32>
    %774 = arith.addf %763, %773 : vector<8x128xf32>
    %c2_256 = arith.constant 2 : index
    %c17_257 = arith.constant 17 : index
    %c0_258 = arith.constant 0 : index
    %775 = vector.load %arg9[%c2_256, %c17_257, %c0_258] : memref<3x32x128xf32, #tpu.memory_space<vmem>>, vector<1x8x128xf32>
    %776 = vector.shape_cast %775 : vector<1x8x128xf32> to vector<8x128xf32>
    %777 = vector.broadcast %129 : f32 to vector<8x128xf32>
    %778 = arith.mulf %776, %777 : vector<8x128xf32>
    %779 = arith.addf %768, %778 : vector<8x128xf32>
    %780 = vector.broadcast %156 : f32 to vector<8x128xf32>
    %781 = arith.mulf %776, %780 : vector<8x128xf32>
    %782 = arith.addf %771, %781 : vector<8x128xf32>
    %783 = vector.broadcast %183 : f32 to vector<8x128xf32>
    %784 = arith.mulf %776, %783 : vector<8x128xf32>
    %785 = arith.addf %774, %784 : vector<8x128xf32>
    %c2_259 = arith.constant 2 : index
    %c17_260 = arith.constant 17 : index
    %c0_261 = arith.constant 0 : index
    %786 = vector.load %arg10[%c2_259, %c17_260, %c0_261] : memref<3x32x128xf32, #tpu.memory_space<vmem>>, vector<1x8x128xf32>
    %787 = vector.shape_cast %786 : vector<1x8x128xf32> to vector<8x128xf32>
    %788 = vector.broadcast %130 : f32 to vector<8x128xf32>
    %789 = arith.mulf %787, %788 : vector<8x128xf32>
    %790 = arith.addf %779, %789 : vector<8x128xf32>
    %791 = vector.broadcast %157 : f32 to vector<8x128xf32>
    %792 = arith.mulf %787, %791 : vector<8x128xf32>
    %793 = arith.addf %782, %792 : vector<8x128xf32>
    %794 = vector.broadcast %184 : f32 to vector<8x128xf32>
    %795 = arith.mulf %787, %794 : vector<8x128xf32>
    %796 = arith.addf %785, %795 : vector<8x128xf32>
    %797 = math.tanh %790 : vector<8x128xf32>
    %c0_262 = arith.constant 0 : index
    %c0_263 = arith.constant 0 : index
    %c8_264 = arith.constant 8 : index
    %c0_265 = arith.constant 0 : index
    %798 = vector.load %arg7[%c0_262, %c0_263, %c8_264, %c0_265] : memref<1x3x16x128xf32, #tpu.memory_space<vmem>>, vector<1x1x8x128xf32>
    %799 = vector.shape_cast %798 : vector<1x1x8x128xf32> to vector<8x128xf32>
    %800 = vector.shape_cast %797 : vector<8x128xf32> to vector<1x1x8x128xf32>
    tpu.vector_store %arg7[%c0_262, %c0_263, %c8_264, %c0_265], %800 {strides = array<i32>} : memref<1x3x16x128xf32, #tpu.memory_space<vmem>>, vector<1x1x8x128xf32>,
    %801 = math.tanh %793 : vector<8x128xf32>
    %c0_266 = arith.constant 0 : index
    %c1_267 = arith.constant 1 : index
    %c8_268 = arith.constant 8 : index
    %c0_269 = arith.constant 0 : index
    %802 = vector.load %arg7[%c0_266, %c1_267, %c8_268, %c0_269] : memref<1x3x16x128xf32, #tpu.memory_space<vmem>>, vector<1x1x8x128xf32>
    %803 = vector.shape_cast %802 : vector<1x1x8x128xf32> to vector<8x128xf32>
    %804 = vector.shape_cast %801 : vector<8x128xf32> to vector<1x1x8x128xf32>
    tpu.vector_store %arg7[%c0_266, %c1_267, %c8_268, %c0_269], %804 {strides = array<i32>} : memref<1x3x16x128xf32, #tpu.memory_space<vmem>>, vector<1x1x8x128xf32>,
    %805 = math.tanh %796 : vector<8x128xf32>
    %c0_270 = arith.constant 0 : index
    %c2_271 = arith.constant 2 : index
    %c8_272 = arith.constant 8 : index
    %c0_273 = arith.constant 0 : index
    %806 = vector.load %arg7[%c0_270, %c2_271, %c8_272, %c0_273] : memref<1x3x16x128xf32, #tpu.memory_space<vmem>>, vector<1x1x8x128xf32>
    %807 = vector.shape_cast %806 : vector<1x1x8x128xf32> to vector<8x128xf32>
    %808 = vector.shape_cast %805 : vector<8x128xf32> to vector<1x1x8x128xf32>
    tpu.vector_store %arg7[%c0_270, %c2_271, %c8_272, %c0_273], %808 {strides = array<i32>} : memref<1x3x16x128xf32, #tpu.memory_space<vmem>>, vector<1x1x8x128xf32>,
    return
  }
  func.func @transform_0(%arg0: i32, %arg1: i32) -> i32 {
    %c0_i32 = arith.constant 0 : i32
    %c0_i32_0 = arith.constant 0 : i32
    return %c0_i32 : i32
  }
  func.func @transform_1(%arg0: i32, %arg1: i32) -> i32 {
    %c0_i32 = arith.constant 0 : i32
    %c0_i32_0 = arith.constant 0 : i32
    return %c0_i32 : i32
  }
  func.func @transform_2(%arg0: i32, %arg1: i32) -> (i32, i32, i32, i32) {
    %c0_i32 = arith.constant 0 : i32
    %c0_i32_0 = arith.constant 0 : i32
    %c0_i32_1 = arith.constant 0 : i32
    return %arg0, %c0_i32, %arg1, %c0_i32_0 : i32, i32, i32, i32
  }
  func.func @transform_3(%arg0: i32, %arg1: i32) -> (i32, i32, i32, i32) {
    %c2_i32 = arith.constant 2 : i32
    %0 = arith.muli %arg1, %c2_i32 : i32
    %c1_i32 = arith.constant 1 : i32
    %1 = arith.subi %0, %c1_i32 : i32
    %c0_i32 = arith.constant 0 : i32
    %2 = arith.maxsi %1, %c0_i32 : i32
    %c0_i32_0 = arith.constant 0 : i32
    %c0_i32_1 = arith.constant 0 : i32
    %c0_i32_2 = arith.constant 0 : i32
    return %arg0, %c0_i32_0, %2, %c0_i32_1 : i32, i32, i32, i32
  }
  func.func @transform_4(%arg0: i32, %arg1: i32) -> (i32, i32, i32, i32) {
    %c1_i32 = arith.constant 1 : i32
    %0 = arith.addi %arg1, %c1_i32 : i32
    %c2_i32 = arith.constant 2 : i32
    %1 = arith.muli %0, %c2_i32 : i32
    %c3_i32 = arith.constant 3 : i32
    %2 = arith.minsi %1, %c3_i32 : i32
    %c0_i32 = arith.constant 0 : i32
    %c0_i32_0 = arith.constant 0 : i32
    %c0_i32_1 = arith.constant 0 : i32
    return %arg0, %c0_i32, %2, %c0_i32_0 : i32, i32, i32, i32
  }
  func.func @transform_5(%arg0: i32, %arg1: i32) -> (i32, i32, i32, i32) {
    %c0_i32 = arith.constant 0 : i32
    %c0_i32_0 = arith.constant 0 : i32
    %c0_i32_1 = arith.constant 0 : i32
    return %arg0, %c0_i32, %arg1, %c0_i32_0 : i32, i32, i32, i32
  }
}

</mosaic_0001>

<llo_original>
// kernel: tpu_custom_call.1
$region0: #{tpu_custom_call.1}
  #allocation0 [shape = 'u32[]', space=smem, size = 0x4, offset = 0x4, fixed_abs, tag = 'smem constant byte address 0x4 - core index']
  #allocation1 [shape = 'u32[144,128]{1,0:T(1,128)}', space=vmem, size = 0x12000, scoped, tag = 'internal scratch']
  #allocation2 [shape = 'f32[3,32,128]{2,1,0:T(8,128)}', space=vmem, size = 0xc000, scoped, tag = 'scratch operand']
  #allocation3 [shape = 'f32[3,32,128]{2,1,0:T(8,128)}', space=vmem, size = 0xc000, scoped, tag = 'scratch operand']
  #allocation4 [shape = 'f32[3,32,128]{2,1,0:T(8,128)}', space=vmem, size = 0xc000, scoped, tag = 'scratch operand']
  #allocation16 [shape = 's32[]', space=sflag, size = 0x4, offset = 0, fixed_abs, tag = 'sflag constant byte address 0x0 - dummy sync flag']
  #allocation18 [shape = 's32[]', space=sflag, size = 0x4, offset = 0, fixed_abs, tag = 'sflag constant byte address 0x0 - dummy sync flag']
  %s0 = inlined_call_operand.hbm [shape: f32[81], index: 0, kind: input, shape index: {}]
  %s1 = inlined_call_operand.vmem [shape: f32[3], index: 1, kind: input, shape index: {}]
  %s2 = inlined_call_operand.hbm [shape: f32[2,3,32,128], index: 2, kind: input, shape index: {}]
  %s3 = inlined_call_operand.hbm [shape: f32[2,3,32,128], index: 3, kind: input, shape index: {}]
  %s4 = inlined_call_operand.hbm [shape: f32[2,3,32,128], index: 4, kind: input, shape index: {}]
  %s5 = inlined_call_operand.hbm [shape: f32[2,3,32,128], index: 5, kind: output, shape index: {}]
  %s6 = sld [smem:[#allocation0]]
  $region89: #{tpu_custom_call.1} parent=0
    _
  %s8 = ssub.s32 1, %s6
  %s9 = scalar_select 0, %s8, %s6
  $region1: #{tpu_custom_call.1} parent=0
    #allocation5 [shape = 'u8[512]{0}', space=smem, size = 0x200, scoped, tag = 'input window, operand 0, single buffered']
    #allocation6 [shape = 's32[2]{0}', space=sflag, size = 0x8, scoped, tag = 'scoped memory for tpu_custom_call.1']
    #allocation7 [shape = 's32[2]{0}', space=sflag, size = 0x8, scoped, tag = 'scoped memory for tpu_custom_call.1']
    #allocation8 [shape = 's32[2]{0}', space=sflag, size = 0x8, scoped, tag = 'scoped memory for tpu_custom_call.1']
    #allocation9 [shape = 's32[2]{0}', space=sflag, size = 0x8, scoped, tag = 'scoped memory for tpu_custom_call.1']
    #allocation10 [shape = 'u8[512]{0}', space=smem, size = 0x200, scoped, tag = 'input window, operand 1, single buffered']
    #allocation11 [shape = 'u8[49152]{0}', space=vmem, size = 0xc000, scoped, tag = 'input window, operand 2']
    #allocation12 [shape = 'u8[24576]{0}', space=vmem, size = 0x6000, scoped, tag = 'input window, operand 3']
    #allocation13 [shape = 's32[2]{0}', space=sflag, size = 0x8, scoped, tag = 'scoped memory for tpu_custom_call.1']
    #allocation14 [shape = 'u8[24576]{0}', space=vmem, size = 0x6000, scoped, tag = 'input window, operand 4']
    #allocation15 [shape = 'u8[49152]{0}', space=vmem, size = 0xc000, scoped, tag = 'output window, operand 0']
    %10 = vsyncpa [#allocation8], 0
    %11 = vsyncpa [#allocation9], 0
    %12 = vsyncpa [#allocation6], 0
    %s13 = scalar_lea.sflag [#allocation6], 1
    %14 = vsyncpa %s13, 0
    %15 = vsyncpa [#allocation13], 0
    %s16 = scalar_lea.sflag [#allocation13], 1
    %17 = vsyncpa %s16, 0
    %18 = vsyncpa [#allocation7], 0
    %s19 = scalar_lea.sflag [#allocation7], 1
    %20 = vsyncpa %s19, 0
    loop: start=0, step=1, limit=6
    $region2: #{tpu_custom_call.1} parent=1 // loop_pre_header
      _
    $region3: #{tpu_custom_call.1} parent=1 // loop_header
      %s22 = sphi 0, %s26
      %p23 = scmp.ge.s32.totalorder %s22, 6
      %s29 = sphi 0, %s41
      %s30 = sphi 0, %s37
      %s31 = sphi 0, %s29
      %s32 = sphi 0, %s30
      %s33 = sphi 0, %s31
      %s34 = sphi 0, %s32
      %s42 = sphi 0, %s42
      %s44 = sphi 0, %s42
      %s45 = sphi 0, %s44
      %s59 = sphi 0, %s45
      %s63 = sphi 0, %s63
      %s65 = sphi 0, %s63
      %s66 = sphi 0, %s65
      %s80 = sphi 0, %s66
      %s88 = sphi 0, %s90
      %s91 = sphi 0, %s88
      %s92 = sphi 0, %s91
      %s108 = sphi 0, %s92
      %s124 = sphi 0, %s126
      %s127 = sphi 0, %s124
      %s128 = sphi 0, %s127
      %s144 = sphi 0, %s128
      %s160 = sphi 0, %s162
      %s163 = sphi 0, %s160
      %s164 = sphi 0, %s163
      %s180 = sphi 0, %s164
      %s188 = sphi 0, %s190
      %s191 = sphi 0, %s188
      %s192 = sphi 0, %s191
      %s208 = sphi 0, %s192
    $region4: #{tpu_custom_call.1} parent=1 // loop_header_branch
      %25 = sbr.rel (%p23) target = $region8
    $region5: #{tpu_custom_call.1} parent=1 // loop_body
      %s27 = ssub.s32 %s22, 1
      %s28 = ssub.s32 %s22, 2
      %s35 = sadd.s32 1, %s30
      %p36 = scmp.ge.s32.totalorder %s35, 2
      %s37 = scalar_select %p36, 0, %s35
      %s38 = sadd.s32 1, %s29
      %s39 = scalar_select %p36, %s38, %s29
      %p40 = scmp.ge.s32.totalorder %s39, 2
      %s41 = scalar_select %p40, 0, %s39
      %s43 = sadd.s32 %s42, 1
      %p46 = scmp.eq.s32.totalorder %s22, 3
      %p47 = scmp.ne.s32.totalorder %s42, %s44
      %p48 = scmp.eq.s32.totalorder %s22, 0
      %p49 = por %p47, %p48
      %p50 = scmp.ne.s32.totalorder %s42, %s44
      %p51 = scmp.eq.s32.totalorder %s27, 3
      %p52 = por %p50, %p51
      %p53 = scmp.ne.s32.totalorder %s44, %s45
      %p54 = scmp.eq.s32.totalorder %s27, 0
      %p55 = por %p53, %p54
      %p56 = scmp.ne.s32.totalorder %s44, %s45
      %p57 = scmp.eq.s32.totalorder %s28, 3
      %p58 = por %p56, %p57
      %p60 = scmp.ne.s32.totalorder %s45, %s59
      %p61 = scmp.eq.s32.totalorder %s28, 0
      %p62 = por %p60, %p61
      %s64 = sadd.s32 %s63, 1
      %p67 = scmp.eq.s32.totalorder %s22, 3
      %p68 = scmp.ne.s32.totalorder %s63, %s65
      %p69 = scmp.eq.s32.totalorder %s22, 0
      %p70 = por %p68, %p69
      %p71 = scmp.ne.s32.totalorder %s63, %s65
      %p72 = scmp.eq.s32.totalorder %s27, 3
      %p73 = por %p71, %p72
      %p74 = scmp.ne.s32.totalorder %s65, %s66
      %p75 = scmp.eq.s32.totalorder %s27, 0
      %p76 = por %p74, %p75
      %p77 = scmp.ne.s32.totalorder %s65, %s66
      %p78 = scmp.eq.s32.totalorder %s28, 3
      %p79 = por %p77, %p78
      %p81 = scmp.ne.s32.totalorder %s66, %s80
      %p82 = scmp.eq.s32.totalorder %s28, 0
      %p83 = por %p81, %p82
      %s84 = ssub.s32 %s29, %s41
      %s85 = ssub.s32 %s30, %s37
      %s86 = sor.u32 %s84, %s85
      %p87 = scmp.eq.s32.totalorder %s86, 0
      %s89 = sadd.s32 %s88, 1
      %s90 = scalar_select %p87, %s88, %s89
      %p93 = pneg %p87
      %p94 = scmp.eq.s32.totalorder %s22, 3
      %p95 = por %p93, %p94
      %p96 = scmp.ne.s32.totalorder %s88, %s91
      %p97 = scmp.eq.s32.totalorder %s22, 0
      %p98 = por %p96, %p97
      %p99 = scmp.ne.s32.totalorder %s88, %s91
      %p100 = scmp.eq.s32.totalorder %s27, 3
      %p101 = por %p99, %p100
      %p102 = scmp.ne.s32.totalorder %s91, %s92
      %p103 = scmp.eq.s32.totalorder %s27, 0
      %p104 = por %p102, %p103
      %p105 = scmp.ne.s32.totalorder %s91, %s92
      %p106 = scmp.eq.s32.totalorder %s28, 3
      %p107 = por %p105, %p106
      %p109 = scmp.ne.s32.totalorder %s92, %s108
      %p110 = scmp.eq.s32.totalorder %s28, 0
      %p111 = por %p109, %p110
      %s112 = smul.u32 %s30, 2
      %s113 = ssub.s32 %s112, 1
      %p114 = scmp.gt.s32.totalorder %s113, 0
      %s115 = scalar_select %p114, %s113, 0
      %s116 = smul.u32 %s37, 2
      %s117 = ssub.s32 %s116, 1
      %p118 = scmp.gt.s32.totalorder %s117, 0
      %s119 = scalar_select %p118, %s117, 0
      %s120 = ssub.s32 %s29, %s41
      %s121 = ssub.s32 %s115, %s119
      %s122 = sor.u32 %s120, %s121
      %p123 = scmp.eq.s32.totalorder %s122, 0
      %s125 = sadd.s32 %s124, 1
      %s126 = scalar_select %p123, %s124, %s125
      %p129 = pneg %p123
      %p130 = scmp.eq.s32.totalorder %s22, 3
      %p131 = por %p129, %p130
      %p132 = scmp.ne.s32.totalorder %s124, %s127
      %p133 = scmp.eq.s32.totalorder %s22, 0
      %p134 = por %p132, %p133
      %p135 = scmp.ne.s32.totalorder %s124, %s127
      %p136 = scmp.eq.s32.totalorder %s27, 3
      %p137 = por %p135, %p136
      %p138 = scmp.ne.s32.totalorder %s127, %s128
      %p139 = scmp.eq.s32.totalorder %s27, 0
      %p140 = por %p138, %p139
      %p141 = scmp.ne.s32.totalorder %s127, %s128
      %p142 = scmp.eq.s32.totalorder %s28, 3
      %p143 = por %p141, %p142
      %p145 = scmp.ne.s32.totalorder %s128, %s144
      %p146 = scmp.eq.s32.totalorder %s28, 0
      %p147 = por %p145, %p146
      %s148 = sadd.s32 %s30, 1
      %s149 = smul.u32 %s148, 2
      %p150 = scmp.lt.s32.totalorder %s149, 3
      %s151 = scalar_select %p150, %s149, 3
      %s152 = sadd.s32 %s37, 1
      %s153 = smul.u32 %s152, 2
      %p154 = scmp.lt.s32.totalorder %s153, 3
      %s155 = scalar_select %p154, %s153, 3
      %s156 = ssub.s32 %s29, %s41
      %s157 = ssub.s32 %s151, %s155
      %s158 = sor.u32 %s156, %s157
      %p159 = scmp.eq.s32.totalorder %s158, 0
      %s161 = sadd.s32 %s160, 1
      %s162 = scalar_select %p159, %s160, %s161
      %p165 = pneg %p159
      %p166 = scmp.eq.s32.totalorder %s22, 3
      %p167 = por %p165, %p166
      %p168 = scmp.ne.s32.totalorder %s160, %s163
      %p169 = scmp.eq.s32.totalorder %s22, 0
      %p170 = por %p168, %p169
      %p171 = scmp.ne.s32.totalorder %s160, %s163
      %p172 = scmp.eq.s32.totalorder %s27, 3
      %p173 = por %p171, %p172
      %p174 = scmp.ne.s32.totalorder %s163, %s164
      %p175 = scmp.eq.s32.totalorder %s27, 0
      %p176 = por %p174, %p175
      %p177 = scmp.ne.s32.totalorder %s163, %s164
      %p178 = scmp.eq.s32.totalorder %s28, 3
      %p179 = por %p177, %p178
      %p181 = scmp.ne.s32.totalorder %s164, %s180
      %p182 = scmp.eq.s32.totalorder %s28, 0
      %p183 = por %p181, %p182
      %s184 = ssub.s32 %s29, %s41
      %s185 = ssub.s32 %s30, %s37
      %s186 = sor.u32 %s184, %s185
      %p187 = scmp.eq.s32.totalorder %s186, 0
      %s189 = sadd.s32 %s188, 1
      %s190 = scalar_select %p187, %s188, %s189
      %p193 = pneg %p187
      %p194 = scmp.eq.s32.totalorder %s22, 3
      %p195 = por %p193, %p194
      %p196 = scmp.ne.s32.totalorder %s188, %s191
      %p197 = scmp.eq.s32.totalorder %s22, 0
      %p198 = por %p196, %p197
      %p199 = scmp.ne.s32.totalorder %s188, %s191
      %p200 = scmp.eq.s32.totalorder %s27, 3
      %p201 = por %p199, %p200
      %p202 = scmp.ne.s32.totalorder %s191, %s192
      %p203 = scmp.eq.s32.totalorder %s27, 0
      %p204 = por %p202, %p203
      %p205 = scmp.ne.s32.totalorder %s191, %s192
      %p206 = scmp.eq.s32.totalorder %s28, 3
      %p207 = por %p205, %p206
      %p209 = scmp.ne.s32.totalorder %s192, %s208
      %p210 = scmp.eq.s32.totalorder %s28, 0
      %p211 = por %p209, %p210
      %p212 = scmp.le.s32.totalorder 1, %s22
      %p213 = scmp.lt.s32.totalorder %s22, 5
      %p214 = pnand %p212, %p213
      %p215 = pneg %p214
      // Predicated region
      $region9: #{tpu_custom_call.1} parent=5 // pred_check
        _
      $region10: #{tpu_custom_call.1} parent=5 // pred_check_branch
        %217 = sbr.rel (%p214) target = $region12
      $region11: #{tpu_custom_call.1} parent=5 // pred_region
        %s218 = ssub.s32 %s22, 1
        // Predicated region
        $region13: #{tpu_custom_call.1} parent=11 // pred_check
          %p219 = pneg %p55
        $region14: #{tpu_custom_call.1} parent=11 // pred_check_branch
          %221 = sbr.rel (%p219) target = $region16
        $region15: #{tpu_custom_call.1} parent=11 // pred_region
          %s223 = ssub.s32 16, 16
          %224 = vsyncadd [#allocation8], %s223
          %227 = dma.hbm_to_smem %s0, 16, [#allocation5], [#allocation8]
        $region16: #{tpu_custom_call.1} parent=11 // pred_fallthru
          _
        // Predicated region
        $region17: #{tpu_custom_call.1} parent=11 // pred_check
          %p228 = pneg %p76
        $region18: #{tpu_custom_call.1} parent=11 // pred_check_branch
          %230 = sbr.rel (%p228) target = $region20
        $region19: #{tpu_custom_call.1} parent=11 // pred_region
          %s232 = ssub.s32 16, 16
          %233 = vsyncadd [#allocation9], %s232
          %s235 = sshll.u32 %s1, 4
          %s236 = int_to_ptr.vmem [resolvable:$true] %s235
          %238 = dma.vmem_to_smem %s236, 16, [#allocation10], [#allocation9]
        $region20: #{tpu_custom_call.1} parent=11 // pred_fallthru
          _
      $region12: #{tpu_custom_call.1} parent=5 // pred_fallthru
        _
      %p239 = scmp.lt.s32.totalorder %s22, 4
      // Predicated region
      $region21: #{tpu_custom_call.1} parent=5 // pred_check
        %p240 = pneg %p239
      $region22: #{tpu_custom_call.1} parent=5 // pred_check_branch
        %242 = sbr.rel (%p240) target = $region24
      $region23: #{tpu_custom_call.1} parent=5 // pred_region
        // Predicated region
        $region25: #{tpu_custom_call.1} parent=23 // pred_check
          %p243 = pneg %p98
        $region26: #{tpu_custom_call.1} parent=23 // pred_check_branch
          %245 = sbr.rel (%p243) target = $region28
        $region27: #{tpu_custom_call.1} parent=23 // pred_region
          #allocation17 [shape = 'u32[6]{0}', space=smem, size = 0x18, scoped, tag = 'DMA stride descriptor']
          %s246 = sand.u32 %s88, 1
          %s247 = scalar_lea.sflag [#allocation6], %s246
          %s248 = sand.u32 %s88, 1
          %s249 = smul.addr %s248, 48
          %s250 = scalar_lea.vmem [#allocation11], %s249
          %s251 = smul.u32 2, %s30
          %s253 = ssub.s32 768, 768
          %254 = vsyncadd %s247, %s253
          %s255 = smul.addr %s29, 12
          %s256 = sadd.s32 %s251, %s255
          %s257 = smul.addr %s256, 128
          %s258 = scalar_lea.hbm %s2, %s257
          %s260 = sshll.u32 1, 14
          %s261 = sxor.u32 4294967295, %s260
          %s263 = sld [smem:[#allocation0]]
          %s264 = sadd.s32 2, %s263
          %s266 = sshll.u32 7, 26
          %s267 = sxor.u32 4294967295, %s266
          %s268 = sand.u32 0, %s267
          %s269 = sshll.u32 %s264, 26
          %s270 = sor.u32 %s268, %s269
          %s271 = sshll.u32 %s250, 4
          %s272 = int_to_ptr.vmem [resolvable:$true] %s271
          %278 = sst [smem:[#allocation17]] 512
          %s279 = scalar_lea.smem [#allocation17], 1
          %280 = sst [smem:[%s279]] 256
          %s281 = scalar_lea.smem [#allocation17], 2
          %282 = sst [smem:[%s281]] 2
          %s283 = scalar_lea.smem [#allocation17], 3
          %284 = sst [smem:[%s283]] 128
          %s285 = scalar_lea.smem [#allocation17], 4
          %286 = sst [smem:[%s285]] 128
          %s287 = scalar_lea.smem [#allocation17], 5
          %288 = sst [smem:[%s287]] 8
          %290 = dma.general %s258, 768, %s272, %s247, [#allocation16], [#allocation17], %s270, 0
        $region28: #{tpu_custom_call.1} parent=23 // pred_fallthru
          _
        // Predicated region
        $region29: #{tpu_custom_call.1} parent=23 // pred_check
          %p291 = pneg %p134
        $region30: #{tpu_custom_call.1} parent=23 // pred_check_branch
          %293 = sbr.rel (%p291) target = $region32
        $region31: #{tpu_custom_call.1} parent=23 // pred_region
          %s294 = sand.u32 %s22, 1
          %s295 = scalar_lea.sflag [#allocation13], %s294
          %s296 = sand.u32 %s124, 1
          %s297 = smul.addr %s296, 24
          %s298 = scalar_lea.vmem [#allocation12], %s297
          %s299 = smul.u32 %s30, 2
          %s300 = ssub.s32 %s299, 1
          %p301 = scmp.gt.s32.totalorder %s300, 0
          %s302 = scalar_select %p301, %s300, 0
          %s304 = ssub.s32 384, 384
          %305 = vsyncadd %s295, %s304
          %s306 = smul.addr %s29, 12
          %s307 = sadd.s32 %s302, %s306
          %s308 = smul.addr %s307, 128
          %s309 = scalar_lea.hbm %s3, %s308
          %s310 = sshll.u32 %s298, 4
          %s311 = int_to_ptr.vmem [resolvable:$true] %s310
          %316 = dma.hbm_to_vmem [thread:$0]  %s309, 384, %s311, %s295, 512, 128, 8
        $region32: #{tpu_custom_call.1} parent=23 // pred_fallthru
          _
        // Predicated region
        $region33: #{tpu_custom_call.1} parent=23 // pred_check
          %p317 = pneg %p170
        $region34: #{tpu_custom_call.1} parent=23 // pred_check_branch
          %319 = sbr.rel (%p317) target = $region36
        $region35: #{tpu_custom_call.1} parent=23 // pred_region
          %s320 = sand.u32 %s22, 1
          %s321 = scalar_lea.sflag [#allocation13], %s320
          %s322 = sand.u32 %s160, 1
          %s323 = smul.addr %s322, 24
          %s324 = scalar_lea.vmem [#allocation14], %s323
          %s325 = sadd.s32 %s30, 1
          %s326 = smul.u32 %s325, 2
          %p327 = scmp.lt.s32.totalorder %s326, 3
          %s328 = scalar_select %p327, %s326, 3
          %s330 = ssub.s32 384, 384
          %331 = vsyncadd %s321, %s330
          %s332 = smul.addr %s29, 12
          %s333 = sadd.s32 %s328, %s332
          %s334 = smul.addr %s333, 128
          %s335 = scalar_lea.hbm %s4, %s334
          %s336 = sshll.u32 %s324, 4
          %s337 = int_to_ptr.vmem [resolvable:$true] %s336
          %342 = dma.hbm_to_vmem [thread:$0]  %s335, 384, %s337, %s321, 512, 128, 8
        $region36: #{tpu_custom_call.1} parent=23 // pred_fallthru
          _
      $region24: #{tpu_custom_call.1} parent=5 // pred_fallthru
        _
      %p343 = scmp.le.s32.totalorder 1, %s22
      %p344 = scmp.lt.s32.totalorder %s22, 5
      %p345 = pnand %p343, %p344
      %p346 = pneg %p345
      // Predicated region
      $region37: #{tpu_custom_call.1} parent=5 // pred_check
        _
      $region38: #{tpu_custom_call.1} parent=5 // pred_check_branch
        %348 = sbr.rel (%p345) target = $region40
      $region39: #{tpu_custom_call.1} parent=5 // pred_region
        %s349 = ssub.s32 %s22, 1
        // Predicated region
        $region41: #{tpu_custom_call.1} parent=39 // pred_check
          %p350 = pneg %p55
        $region42: #{tpu_custom_call.1} parent=39 // pred_check_branch
          %352 = sbr.rel (%p350) target = $region44
        $region43: #{tpu_custom_call.1} parent=39 // pred_region
          %353 = dma.done [#allocation8], 16
        $region44: #{tpu_custom_call.1} parent=39 // pred_fallthru
          _
        // Predicated region
        $region45: #{tpu_custom_call.1} parent=39 // pred_check
          %p354 = pneg %p76
        $region46: #{tpu_custom_call.1} parent=39 // pred_check_branch
          %356 = sbr.rel (%p354) target = $region48
        $region47: #{tpu_custom_call.1} parent=39 // pred_region
          %357 = dma.done [#allocation9], 16
        $region48: #{tpu_custom_call.1} parent=39 // pred_fallthru
          _
        %s358 = sand.u32 %s91, 1
        %s359 = scalar_lea.sflag [#allocation6], %s358
        %s360 = sand.u32 %s91, 1
        %s361 = smul.addr %s360, 48
        %s362 = scalar_lea.vmem [#allocation11], %s361
        // Predicated region
        $region49: #{tpu_custom_call.1} parent=39 // pred_check
          %p363 = pneg %p104
        $region50: #{tpu_custom_call.1} parent=39 // pred_check_branch
          %365 = sbr.rel (%p363) target = $region52
        $region51: #{tpu_custom_call.1} parent=39 // pred_region
          %366 = dma.done %s359, 768
        $region52: #{tpu_custom_call.1} parent=39 // pred_fallthru
          _
        %s367 = sand.u32 %s27, 1
        %s368 = scalar_lea.sflag [#allocation13], %s367
        %s369 = sand.u32 %s127, 1
        %s370 = smul.addr %s369, 24
        %s371 = scalar_lea.vmem [#allocation12], %s370
        // Predicated region
        $region53: #{tpu_custom_call.1} parent=39 // pred_check
          %p372 = pneg %p140
        $region54: #{tpu_custom_call.1} parent=39 // pred_check_branch
          %374 = sbr.rel (%p372) target = $region56
        $region55: #{tpu_custom_call.1} parent=39 // pred_region
          %375 = dma.done %s368, 384
        $region56: #{tpu_custom_call.1} parent=39 // pred_fallthru
          _
        %s376 = sand.u32 %s27, 1
        %s377 = scalar_lea.sflag [#allocation13], %s376
        %s378 = sand.u32 %s163, 1
        %s379 = smul.addr %s378, 24
        %s380 = scalar_lea.vmem [#allocation14], %s379
        // Predicated region
        $region57: #{tpu_custom_call.1} parent=39 // pred_check
          %p381 = pneg %p176
        $region58: #{tpu_custom_call.1} parent=39 // pred_check_branch
          %383 = sbr.rel (%p381) target = $region60
        $region59: #{tpu_custom_call.1} parent=39 // pred_region
          %384 = dma.done %s377, 384
        $region60: #{tpu_custom_call.1} parent=39 // pred_fallthru
          _
        %385 = sfence
        %p386 = pneg %p55
        %p387 = pneg %p52
        %p388 = pneg %p76
        %p389 = pneg %p73
        %s390 = sand.u32 %s91, 1
        %s391 = scalar_lea.sflag [#allocation6], %s390
        %s392 = sand.u32 %s91, 1
        %s393 = smul.addr %s392, 48
        %s394 = scalar_lea.vmem [#allocation11], %s393
        %p395 = pneg %p104
        %p396 = pneg %p101
        %s397 = sand.u32 %s27, 1
        %s398 = scalar_lea.sflag [#allocation13], %s397
        %s399 = sand.u32 %s127, 1
        %s400 = smul.addr %s399, 24
        %s401 = scalar_lea.vmem [#allocation12], %s400
        %p402 = pneg %p140
        %p403 = pneg %p137
        %s404 = sand.u32 %s27, 1
        %s405 = scalar_lea.sflag [#allocation13], %s404
        %s406 = sand.u32 %s163, 1
        %s407 = smul.addr %s406, 24
        %s408 = scalar_lea.vmem [#allocation14], %s407
        %p409 = pneg %p176
        %p410 = pneg %p173
        %p411 = pneg %p204
        %p412 = pneg %p201
        %s413 = sand.u32 %s191, 1
        %s414 = scalar_lea.sflag [#allocation7], %s413
        %s415 = sand.u32 %s191, 1
        %s416 = smul.addr %s415, 48
        %s417 = scalar_lea.vmem [#allocation15], %s416
        %s418 = smul.u32 2, %s32
        %s419 = smul.u32 %s32, 2
        %s420 = ssub.s32 %s419, 1
        %p421 = scmp.gt.s32.totalorder %s420, 0
        %s422 = scalar_select %p421, %s420, 0
        %s423 = sadd.s32 %s32, 1
        %s424 = smul.u32 %s423, 2
        %p425 = scmp.lt.s32.totalorder %s424, 3
        %s426 = scalar_select %p425, %s424, 3
        %s427 = smul.u32 2, %s32
        %v428 = vld [vmem:[%s362] sm:$0xff]
        %430 = vrot.lane.b32.xlu0 %v428, 1
        %v431 = vpop.permute.xlu0 %430
        %vm433 = vcmask 7168
        %v434 = vsel %vm433, 0.0, %v431
        %435 = vrot.lane.b32.xlu0 %v428, 127
        %v436 = vpop.permute.xlu0 %435
        %vm438 = vcmask 1039360
        %v439 = vsel %vm438, %v436, 0.0
        %440 = vst [vmem:[#allocation3 + $0x8] sm:$0xff] %v428
        %441 = vst [vmem:[#allocation2 + $0x8] sm:$0xff] %v434
        %442 = vst [vmem:[#allocation4 + $0x8] sm:$0xff] %v439
        %s443 = scalar_lea.vmem %s362, 16 [#allocation11]
        %v444 = vld [vmem:[%s443] sm:$0xff]
        %446 = vrot.lane.b32.xlu0 %v444, 1
        %v447 = vpop.permute.xlu0 %446
        %v449 = vsel %vm433, 0.0, %v447
        %450 = vrot.lane.b32.xlu0 %v444, 127
        %v451 = vpop.permute.xlu0 %450
        %v453 = vsel %vm438, %v451, 0.0
        %s454 = scalar_lea.vmem [#allocation3], 32
        %455 = vst [vmem:[%s454 + $0x8] sm:$0xff] %v444
        %s456 = scalar_lea.vmem [#allocation2], 32
        %457 = vst [vmem:[%s456 + $0x8] sm:$0xff] %v449
        %s458 = scalar_lea.vmem [#allocation4], 32
        %459 = vst [vmem:[%s458 + $0x8] sm:$0xff] %v453
        %s460 = scalar_lea.vmem %s362, 32 [#allocation11]
        %v461 = vld [vmem:[%s460] sm:$0xff]
        %463 = vrot.lane.b32.xlu0 %v461, 1
        %v464 = vpop.permute.xlu0 %463
        %v466 = vsel %vm433, 0.0, %v464
        %467 = vrot.lane.b32.xlu0 %v461, 127
        %v468 = vpop.permute.xlu0 %467
        %v470 = vsel %vm438, %v468, 0.0
        %s471 = scalar_lea.vmem [#allocation3], 64
        %472 = vst [vmem:[%s471 + $0x8] sm:$0xff] %v461
        %s473 = scalar_lea.vmem [#allocation2], 64
        %474 = vst [vmem:[%s473 + $0x8] sm:$0xff] %v466
        %s475 = scalar_lea.vmem [#allocation4], 64
        %476 = vst [vmem:[%s475 + $0x8] sm:$0xff] %v470
        %v477 = vld [vmem:[%s362 + $0x8] sm:$0xff]
        %479 = vrot.lane.b32.xlu0 %v477, 1
        %v480 = vpop.permute.xlu0 %479
        %v482 = vsel %vm433, 0.0, %v480
        %483 = vrot.lane.b32.xlu0 %v477, 127
        %v484 = vpop.permute.xlu0 %483
        %v486 = vsel %vm438, %v484, 0.0
        %487 = vst [vmem:[#allocation3 + $0x10] sm:$0xff] %v477
        %488 = vst [vmem:[#allocation2 + $0x10] sm:$0xff] %v482
        %489 = vst [vmem:[#allocation4 + $0x10] sm:$0xff] %v486
        %v490 = vld [vmem:[%s443 + $0x8] sm:$0xff]
        %492 = vrot.lane.b32.xlu0 %v490, 1
        %v493 = vpop.permute.xlu0 %492
        %v495 = vsel %vm433, 0.0, %v493
        %496 = vrot.lane.b32.xlu0 %v490, 127
        %v497 = vpop.permute.xlu0 %496
        %v499 = vsel %vm438, %v497, 0.0
        %500 = vst [vmem:[%s454 + $0x10] sm:$0xff] %v490
        %501 = vst [vmem:[%s456 + $0x10] sm:$0xff] %v495
        %502 = vst [vmem:[%s458 + $0x10] sm:$0xff] %v499
        %v503 = vld [vmem:[%s460 + $0x8] sm:$0xff]
        %505 = vrot.lane.b32.xlu0 %v503, 1
        %v506 = vpop.permute.xlu0 %505
        %v508 = vsel %vm433, 0.0, %v506
        %509 = vrot.lane.b32.xlu0 %v503, 127
        %v510 = vpop.permute.xlu0 %509
        %v512 = vsel %vm438, %v510, 0.0
        %513 = vst [vmem:[%s471 + $0x10] sm:$0xff] %v503
        %514 = vst [vmem:[%s473 + $0x10] sm:$0xff] %v508
        %515 = vst [vmem:[%s475 + $0x10] sm:$0xff] %v512
        %p516 = scmp.gt.s32.totalorder %s32, 0
        // Predicated region
        $region61: #{tpu_custom_call.1} parent=39 // pred_check
          %p517 = pneg %p516
        $region62: #{tpu_custom_call.1} parent=39 // pred_check_branch
          %519 = sbr.rel (%p517) target = $region64
        $region63: #{tpu_custom_call.1} parent=39 // pred_region
          %v520 = vld [vmem:[%s371 + $0x7] sm:$0x1]
          %522 = vrot.lane.b32.xlu0 %v520, 1
          %v523 = vpop.permute.xlu0 %522
          %v525 = vsel %vm433, 0.0, %v523
          %526 = vrot.lane.b32.xlu0 %v520, 127
          %v527 = vpop.permute.xlu0 %526
          %v529 = vsel %vm438, %v527, 0.0
          %530 = vst [vmem:[#allocation3 + $0x7] sm:$0x1] %v520
          %531 = vst [vmem:[#allocation2 + $0x7] sm:$0x1] %v525
          %532 = vst [vmem:[#allocation4 + $0x7] sm:$0x1] %v529
          %s533 = scalar_lea.vmem %s371, 8 [#allocation12]
          %v534 = vld [vmem:[%s533 + $0x7] sm:$0x1]
          %536 = vrot.lane.b32.xlu0 %v534, 1
          %v537 = vpop.permute.xlu0 %536
          %v539 = vsel %vm433, 0.0, %v537
          %540 = vrot.lane.b32.xlu0 %v534, 127
          %v541 = vpop.permute.xlu0 %540
          %v543 = vsel %vm438, %v541, 0.0
          %544 = vst [vmem:[%s454 + $0x7] sm:$0x1] %v534
          %545 = vst [vmem:[%s456 + $0x7] sm:$0x1] %v539
          %546 = vst [vmem:[%s458 + $0x7] sm:$0x1] %v543
          %s547 = scalar_lea.vmem %s371, 16 [#allocation12]
          %v548 = vld [vmem:[%s547 + $0x7] sm:$0x1]
          %550 = vrot.lane.b32.xlu0 %v548, 1
          %v551 = vpop.permute.xlu0 %550
          %v553 = vsel %vm433, 0.0, %v551
          %554 = vrot.lane.b32.xlu0 %v548, 127
          %v555 = vpop.permute.xlu0 %554
          %v557 = vsel %vm438, %v555, 0.0
          %558 = vst [vmem:[%s471 + $0x7] sm:$0x1] %v548
          %559 = vst [vmem:[%s473 + $0x7] sm:$0x1] %v553
          %560 = vst [vmem:[%s475 + $0x7] sm:$0x1] %v557
        $region64: #{tpu_custom_call.1} parent=39 // pred_fallthru
          _
        %p561 = scmp.eq.s32.totalorder %s32, 0
        // Predicated region
        $region65: #{tpu_custom_call.1} parent=39 // pred_check
          %p562 = pneg %p561
        $region66: #{tpu_custom_call.1} parent=39 // pred_check_branch
          %564 = sbr.rel (%p562) target = $region68
        $region67: #{tpu_custom_call.1} parent=39 // pred_region
          %565 = vst [vmem:[#allocation3 + $0x7] sm:$0x1] 0.0
          %566 = vst [vmem:[#allocation3 + $0x27] sm:$0x1] 0.0
          %567 = vst [vmem:[#allocation3 + $0x47] sm:$0x1] 0.0
          %568 = vst [vmem:[#allocation2 + $0x7] sm:$0x1] 0.0
          %569 = vst [vmem:[#allocation2 + $0x27] sm:$0x1] 0.0
          %570 = vst [vmem:[#allocation2 + $0x47] sm:$0x1] 0.0
          %571 = vst [vmem:[#allocation4 + $0x7] sm:$0x1] 0.0
          %572 = vst [vmem:[#allocation4 + $0x27] sm:$0x1] 0.0
          %573 = vst [vmem:[#allocation4 + $0x47] sm:$0x1] 0.0
        $region68: #{tpu_custom_call.1} parent=39 // pred_fallthru
          _
        %p574 = scmp.lt.s32.totalorder %s32, 1
        // Predicated region
        $region69: #{tpu_custom_call.1} parent=39 // pred_check
          %p575 = pneg %p574
        $region70: #{tpu_custom_call.1} parent=39 // pred_check_branch
          %577 = sbr.rel (%p575) target = $region72
        $region71: #{tpu_custom_call.1} parent=39 // pred_region
          %v578 = vld [vmem:[%s380] sm:$0x1]
          %580 = vrot.lane.b32.xlu0 %v578, 1
          %v581 = vpop.permute.xlu0 %580
          %v583 = vsel %vm433, 0.0, %v581
          %584 = vrot.lane.b32.xlu0 %v578, 127
          %v585 = vpop.permute.xlu0 %584
          %v587 = vsel %vm438, %v585, 0.0
          %588 = vst [vmem:[#allocation3 + $0x18] sm:$0x1] %v578
          %589 = vst [vmem:[#allocation2 + $0x18] sm:$0x1] %v583
          %590 = vst [vmem:[#allocation4 + $0x18] sm:$0x1] %v587
          %s591 = scalar_lea.vmem %s380, 8 [#allocation14]
          %v592 = vld [vmem:[%s591] sm:$0x1]
          %594 = vrot.lane.b32.xlu0 %v592, 1
          %v595 = vpop.permute.xlu0 %594
          %v597 = vsel %vm433, 0.0, %v595
          %598 = vrot.lane.b32.xlu0 %v592, 127
          %v599 = vpop.permute.xlu0 %598
          %v601 = vsel %vm438, %v599, 0.0
          %602 = vst [vmem:[%s454 + $0x18] sm:$0x1] %v592
          %603 = vst [vmem:[%s456 + $0x18] sm:$0x1] %v597
          %604 = vst [vmem:[%s458 + $0x18] sm:$0x1] %v601
          %s605 = scalar_lea.vmem %s380, 16 [#allocation14]
          %v606 = vld [vmem:[%s605] sm:$0x1]
          %608 = vrot.lane.b32.xlu0 %v606, 1
          %v609 = vpop.permute.xlu0 %608
          %v611 = vsel %vm433, 0.0, %v609
          %612 = vrot.lane.b32.xlu0 %v606, 127
          %v613 = vpop.permute.xlu0 %612
          %v615 = vsel %vm438, %v613, 0.0
          %616 = vst [vmem:[%s471 + $0x18] sm:$0x1] %v606
          %617 = vst [vmem:[%s473 + $0x18] sm:$0x1] %v611
          %618 = vst [vmem:[%s475 + $0x18] sm:$0x1] %v615
        $region72: #{tpu_custom_call.1} parent=39 // pred_fallthru
          _
        %p619 = scmp.eq.s32.totalorder %s32, 1
        // Predicated region
        $region73: #{tpu_custom_call.1} parent=39 // pred_check
          %p620 = pneg %p619
        $region74: #{tpu_custom_call.1} parent=39 // pred_check_branch
          %622 = sbr.rel (%p620) target = $region76
        $region75: #{tpu_custom_call.1} parent=39 // pred_region
          %623 = vst [vmem:[#allocation3 + $0x18] sm:$0x1] 0.0
          %624 = vst [vmem:[#allocation3 + $0x38] sm:$0x1] 0.0
          %625 = vst [vmem:[#allocation3 + $0x58] sm:$0x1] 0.0
          %626 = vst [vmem:[#allocation2 + $0x18] sm:$0x1] 0.0
          %627 = vst [vmem:[#allocation2 + $0x38] sm:$0x1] 0.0
          %628 = vst [vmem:[#allocation2 + $0x58] sm:$0x1] 0.0
          %629 = vst [vmem:[#allocation4 + $0x18] sm:$0x1] 0.0
          %630 = vst [vmem:[#allocation4 + $0x38] sm:$0x1] 0.0
          %631 = vst [vmem:[#allocation4 + $0x58] sm:$0x1] 0.0
        $region76: #{tpu_custom_call.1} parent=39 // pred_fallthru
          _
        %s632 = sld [smem:[#allocation5]]
        %s633 = sld [smem:[#allocation5 + $0x1]]
        %s634 = sld [smem:[#allocation5 + $0x2]]
        %s635 = sld [smem:[#allocation5 + $0x3]]
        %s636 = sld [smem:[#allocation5 + $0x4]]
        %s637 = sld [smem:[#allocation5 + $0x5]]
        %s638 = sld [smem:[#allocation5 + $0x6]]
        %s639 = sld [smem:[#allocation5 + $0x7]]
        %s640 = sld [smem:[#allocation5 + $0x8]]
        %s641 = sld [smem:[#allocation5 + $0x9]]
        %s642 = sld [smem:[#allocation5 + $0xa]]
        %s643 = sld [smem:[#allocation5 + $0xb]]
        %s644 = sld [smem:[#allocation5 + $0xc]]
        %s645 = sld [smem:[#allocation5 + $0xd]]
        %s646 = sld [smem:[#allocation5 + $0xe]]
        %s647 = sld [smem:[#allocation5 + $0xf]]
        %s648 = sld [smem:[#allocation5 + $0x10]]
        %s649 = sld [smem:[#allocation5 + $0x11]]
        %s650 = sld [smem:[#allocation5 + $0x12]]
        %s651 = sld [smem:[#allocation5 + $0x13]]
        %s652 = sld [smem:[#allocation5 + $0x14]]
        %s653 = sld [smem:[#allocation5 + $0x15]]
        %s654 = sld [smem:[#allocation5 + $0x16]]
        %s655 = sld [smem:[#allocation5 + $0x17]]
        %s656 = sld [smem:[#allocation5 + $0x18]]
        %s657 = sld [smem:[#allocation5 + $0x19]]
        %s658 = sld [smem:[#allocation5 + $0x1a]]
        %s659 = sld [smem:[#allocation5 + $0x1b]]
        %s660 = sld [smem:[#allocation5 + $0x1c]]
        %s661 = sld [smem:[#allocation5 + $0x1d]]
        %s662 = sld [smem:[#allocation5 + $0x1e]]
        %s663 = sld [smem:[#allocation5 + $0x1f]]
        %s664 = sld [smem:[#allocation5 + $0x20]]
        %s665 = sld [smem:[#allocation5 + $0x21]]
        %s666 = sld [smem:[#allocation5 + $0x22]]
        %s667 = sld [smem:[#allocation5 + $0x23]]
        %s668 = sld [smem:[#allocation5 + $0x24]]
        %s669 = sld [smem:[#allocation5 + $0x25]]
        %s670 = sld [smem:[#allocation5 + $0x26]]
        %s671 = sld [smem:[#allocation5 + $0x27]]
        %s672 = sld [smem:[#allocation5 + $0x28]]
        %s673 = sld [smem:[#allocation5 + $0x29]]
        %s674 = sld [smem:[#allocation5 + $0x2a]]
        %s675 = sld [smem:[#allocation5 + $0x2b]]
        %s676 = sld [smem:[#allocation5 + $0x2c]]
        %s677 = sld [smem:[#allocation5 + $0x2d]]
        %s678 = sld [smem:[#allocation5 + $0x2e]]
        %s679 = sld [smem:[#allocation5 + $0x2f]]
        %s680 = sld [smem:[#allocation5 + $0x30]]
        %s681 = sld [smem:[#allocation5 + $0x31]]
        %s682 = sld [smem:[#allocation5 + $0x32]]
        %s683 = sld [smem:[#allocation5 + $0x33]]
        %s684 = sld [smem:[#allocation5 + $0x34]]
        %s685 = sld [smem:[#allocation5 + $0x35]]
        %s686 = sld [smem:[#allocation5 + $0x36]]
        %s687 = sld [smem:[#allocation5 + $0x37]]
        %s688 = sld [smem:[#allocation5 + $0x38]]
        %s689 = sld [smem:[#allocation5 + $0x39]]
        %s690 = sld [smem:[#allocation5 + $0x3a]]
        %s691 = sld [smem:[#allocation5 + $0x3b]]
        %s692 = sld [smem:[#allocation5 + $0x3c]]
        %s693 = sld [smem:[#allocation5 + $0x3d]]
        %s694 = sld [smem:[#allocation5 + $0x3e]]
        %s695 = sld [smem:[#allocation5 + $0x3f]]
        %s696 = sld [smem:[#allocation5 + $0x40]]
        %s697 = sld [smem:[#allocation5 + $0x41]]
        %s698 = sld [smem:[#allocation5 + $0x42]]
        %s699 = sld [smem:[#allocation5 + $0x43]]
        %s700 = sld [smem:[#allocation5 + $0x44]]
        %s701 = sld [smem:[#allocation5 + $0x45]]
        %s702 = sld [smem:[#allocation5 + $0x46]]
        %s703 = sld [smem:[#allocation5 + $0x47]]
        %s704 = sld [smem:[#allocation5 + $0x48]]
        %s705 = sld [smem:[#allocation5 + $0x49]]
        %s706 = sld [smem:[#allocation5 + $0x4a]]
        %s707 = sld [smem:[#allocation5 + $0x4b]]
        %s708 = sld [smem:[#allocation5 + $0x4c]]
        %s709 = sld [smem:[#allocation5 + $0x4d]]
        %s710 = sld [smem:[#allocation5 + $0x4e]]
        %s711 = sld [smem:[#allocation5 + $0x4f]]
        %s712 = sld [smem:[#allocation5 + $0x50]]
        %s713 = sld [smem:[#allocation10]]
        %v714 = vstv %s713
        %s715 = sld [smem:[#allocation10 + $0x1]]
        %v716 = vstv %s715
        %s717 = sld [smem:[#allocation10 + $0x2]]
        %v718 = vstv %s717
        %v719 = vld [vmem:[#allocation2 + $0x7] sm:$0xff]
        %v720 = vstv %s632
        %v721 = vmul.f32 %v719, %v720
        %v722 = vadd.f32 %v714, %v721
        %v723 = vstv %s659
        %v724 = vmul.f32 %v719, %v723
        %v725 = vadd.f32 %v716, %v724
        %v726 = vstv %s686
        %v727 = vmul.f32 %v719, %v726
        %v728 = vadd.f32 %v718, %v727
        %v729 = vld [vmem:[#allocation3 + $0x7] sm:$0xff]
        %v730 = vstv %s633
        %v731 = vmul.f32 %v729, %v730
        %v732 = vadd.f32 %v722, %v731
        %v733 = vstv %s660
        %v734 = vmul.f32 %v729, %v733
        %v735 = vadd.f32 %v725, %v734
        %v736 = vstv %s687
        %v737 = vmul.f32 %v729, %v736
        %v738 = vadd.f32 %v728, %v737
        %v739 = vld [vmem:[#allocation4 + $0x7] sm:$0xff]
        %v740 = vstv %s634
        %v741 = vmul.f32 %v739, %v740
        %v742 = vadd.f32 %v732, %v741
        %v743 = vstv %s661
        %v744 = vmul.f32 %v739, %v743
        %v745 = vadd.f32 %v735, %v744
        %v746 = vstv %s688
        %v747 = vmul.f32 %v739, %v746
        %v748 = vadd.f32 %v738, %v747
        %v749 = vld [vmem:[#allocation2 + $0x8] sm:$0xff]
        %v750 = vstv %s635
        %v751 = vmul.f32 %v749, %v750
        %v752 = vadd.f32 %v742, %v751
        %v753 = vstv %s662
        %v754 = vmul.f32 %v749, %v753
        %v755 = vadd.f32 %v745, %v754
        %v756 = vstv %s689
        %v757 = vmul.f32 %v749, %v756
        %v758 = vadd.f32 %v748, %v757
        %v759 = vld [vmem:[#allocation3 + $0x8] sm:$0xff]
        %v760 = vstv %s636
        %v761 = vmul.f32 %v759, %v760
        %v762 = vadd.f32 %v752, %v761
        %v763 = vstv %s663
        %v764 = vmul.f32 %v759, %v763
        %v765 = vadd.f32 %v755, %v764
        %v766 = vstv %s690
        %v767 = vmul.f32 %v759, %v766
        %v768 = vadd.f32 %v758, %v767
        %v769 = vld [vmem:[#allocation4 + $0x8] sm:$0xff]
        %v770 = vstv %s637
        %v771 = vmul.f32 %v769, %v770
        %v772 = vadd.f32 %v762, %v771
        %v773 = vstv %s664
        %v774 = vmul.f32 %v769, %v773
        %v775 = vadd.f32 %v765, %v774
        %v776 = vstv %s691
        %v777 = vmul.f32 %v769, %v776
        %v778 = vadd.f32 %v768, %v777
        %v779 = vld [vmem:[#allocation2 + $0x9] sm:$0xff]
        %v780 = vstv %s638
        %v781 = vmul.f32 %v779, %v780
        %v782 = vadd.f32 %v772, %v781
        %v783 = vstv %s665
        %v784 = vmul.f32 %v779, %v783
        %v785 = vadd.f32 %v775, %v784
        %v786 = vstv %s692
        %v787 = vmul.f32 %v779, %v786
        %v788 = vadd.f32 %v778, %v787
        %v789 = vld [vmem:[#allocation3 + $0x9] sm:$0xff]
        %v790 = vstv %s639
        %v791 = vmul.f32 %v789, %v790
        %v792 = vadd.f32 %v782, %v791
        %v793 = vstv %s666
        %v794 = vmul.f32 %v789, %v793
        %v795 = vadd.f32 %v785, %v794
        %v796 = vstv %s693
        %v797 = vmul.f32 %v789, %v796
        %v798 = vadd.f32 %v788, %v797
        %v799 = vld [vmem:[#allocation4 + $0x9] sm:$0xff]
        %v800 = vstv %s640
        %v801 = vmul.f32 %v799, %v800
        %v802 = vadd.f32 %v792, %v801
        %v803 = vstv %s667
        %v804 = vmul.f32 %v799, %v803
        %v805 = vadd.f32 %v795, %v804
        %v806 = vstv %s694
        %v807 = vmul.f32 %v799, %v806
        %v808 = vadd.f32 %v798, %v807
        %v809 = vld [vmem:[%s456 + $0x7] sm:$0xff]
        %v810 = vstv %s641
        %v811 = vmul.f32 %v809, %v810
        %v812 = vadd.f32 %v802, %v811
        %v813 = vstv %s668
        %v814 = vmul.f32 %v809, %v813
        %v815 = vadd.f32 %v805, %v814
        %v816 = vstv %s695
        %v817 = vmul.f32 %v809, %v816
        %v818 = vadd.f32 %v808, %v817
        %v819 = vld [vmem:[%s454 + $0x7] sm:$0xff]
        %v820 = vstv %s642
        %v821 = vmul.f32 %v819, %v820
        %v822 = vadd.f32 %v812, %v821
        %v823 = vstv %s669
        %v824 = vmul.f32 %v819, %v823
        %v825 = vadd.f32 %v815, %v824
        %v826 = vstv %s696
        %v827 = vmul.f32 %v819, %v826
        %v828 = vadd.f32 %v818, %v827
        %v829 = vld [vmem:[%s458 + $0x7] sm:$0xff]
        %v830 = vstv %s643
        %v831 = vmul.f32 %v829, %v830
        %v832 = vadd.f32 %v822, %v831
        %v833 = vstv %s670
        %v834 = vmul.f32 %v829, %v833
        %v835 = vadd.f32 %v825, %v834
        %v836 = vstv %s697
        %v837 = vmul.f32 %v829, %v836
        %v838 = vadd.f32 %v828, %v837
        %v839 = vld [vmem:[%s456 + $0x8] sm:$0xff]
        %v840 = vstv %s644
        %v841 = vmul.f32 %v839, %v840
        %v842 = vadd.f32 %v832, %v841
        %v843 = vstv %s671
        %v844 = vmul.f32 %v839, %v843
        %v845 = vadd.f32 %v835, %v844
        %v846 = vstv %s698
        %v847 = vmul.f32 %v839, %v846
        %v848 = vadd.f32 %v838, %v847
        %v849 = vld [vmem:[%s454 + $0x8] sm:$0xff]
        %v850 = vstv %s645
        %v851 = vmul.f32 %v849, %v850
        %v852 = vadd.f32 %v842, %v851
        %v853 = vstv %s672
        %v854 = vmul.f32 %v849, %v853
        %v855 = vadd.f32 %v845, %v854
        %v856 = vstv %s699
        %v857 = vmul.f32 %v849, %v856
        %v858 = vadd.f32 %v848, %v857
        %v859 = vld [vmem:[%s458 + $0x8] sm:$0xff]
        %v860 = vstv %s646
        %v861 = vmul.f32 %v859, %v860
        %v862 = vadd.f32 %v852, %v861
        %v863 = vstv %s673
        %v864 = vmul.f32 %v859, %v863
        %v865 = vadd.f32 %v855, %v864
        %v866 = vstv %s700
        %v867 = vmul.f32 %v859, %v866
        %v868 = vadd.f32 %v858, %v867
        %v869 = vld [vmem:[%s456 + $0x9] sm:$0xff]
        %v870 = vstv %s647
        %v871 = vmul.f32 %v869, %v870
        %v872 = vadd.f32 %v862, %v871
        %v873 = vstv %s674
        %v874 = vmul.f32 %v869, %v873
        %v875 = vadd.f32 %v865, %v874
        %v876 = vstv %s701
        %v877 = vmul.f32 %v869, %v876
        %v878 = vadd.f32 %v868, %v877
        %v879 = vld [vmem:[%s454 + $0x9] sm:$0xff]
        %v880 = vstv %s648
        %v881 = vmul.f32 %v879, %v880
        %v882 = vadd.f32 %v872, %v881
        %v883 = vstv %s675
        %v884 = vmul.f32 %v879, %v883
        %v885 = vadd.f32 %v875, %v884
        %v886 = vstv %s702
        %v887 = vmul.f32 %v879, %v886
        %v888 = vadd.f32 %v878, %v887
        %v889 = vld [vmem:[%s458 + $0x9] sm:$0xff]
        %v890 = vstv %s649
        %v891 = vmul.f32 %v889, %v890
        %v892 = vadd.f32 %v882, %v891
        %v893 = vstv %s676
        %v894 = vmul.f32 %v889, %v893
        %v895 = vadd.f32 %v885, %v894
        %v896 = vstv %s703
        %v897 = vmul.f32 %v889, %v896
        %v898 = vadd.f32 %v888, %v897
        %v899 = vld [vmem:[%s473 + $0x7] sm:$0xff]
        %v900 = vstv %s650
        %v901 = vmul.f32 %v899, %v900
        %v902 = vadd.f32 %v892, %v901
        %v903 = vstv %s677
        %v904 = vmul.f32 %v899, %v903
        %v905 = vadd.f32 %v895, %v904
        %v906 = vstv %s704
        %v907 = vmul.f32 %v899, %v906
        %v908 = vadd.f32 %v898, %v907
        %v909 = vld [vmem:[%s471 + $0x7] sm:$0xff]
        %v910 = vstv %s651
        %v911 = vmul.f32 %v909, %v910
        %v912 = vadd.f32 %v902, %v911
        %v913 = vstv %s678
        %v914 = vmul.f32 %v909, %v913
        %v915 = vadd.f32 %v905, %v914
        %v916 = vstv %s705
        %v917 = vmul.f32 %v909, %v916
        %v918 = vadd.f32 %v908, %v917
        %v919 = vld [vmem:[%s475 + $0x7] sm:$0xff]
        %v920 = vstv %s652
        %v921 = vmul.f32 %v919, %v920
        %v922 = vadd.f32 %v912, %v921
        %v923 = vstv %s679
        %v924 = vmul.f32 %v919, %v923
        %v925 = vadd.f32 %v915, %v924
        %v926 = vstv %s706
        %v927 = vmul.f32 %v919, %v926
        %v928 = vadd.f32 %v918, %v927
        %v929 = vld [vmem:[%s473 + $0x8] sm:$0xff]
        %v930 = vstv %s653
        %v931 = vmul.f32 %v929, %v930
        %v932 = vadd.f32 %v922, %v931
        %v933 = vstv %s680
        %v934 = vmul.f32 %v929, %v933
        %v935 = vadd.f32 %v925, %v934
        %v936 = vstv %s707
        %v937 = vmul.f32 %v929, %v936
        %v938 = vadd.f32 %v928, %v937
        %v939 = vld [vmem:[%s471 + $0x8] sm:$0xff]
        %v940 = vstv %s654
        %v941 = vmul.f32 %v939, %v940
        %v942 = vadd.f32 %v932, %v941
        %v943 = vstv %s681
        %v944 = vmul.f32 %v939, %v943
        %v945 = vadd.f32 %v935, %v944
        %v946 = vstv %s708
        %v947 = vmul.f32 %v939, %v946
        %v948 = vadd.f32 %v938, %v947
        %v949 = vld [vmem:[%s475 + $0x8] sm:$0xff]
        %v950 = vstv %s655
        %v951 = vmul.f32 %v949, %v950
        %v952 = vadd.f32 %v942, %v951
        %v953 = vstv %s682
        %v954 = vmul.f32 %v949, %v953
        %v955 = vadd.f32 %v945, %v954
        %v956 = vstv %s709
        %v957 = vmul.f32 %v949, %v956
        %v958 = vadd.f32 %v948, %v957
        %v959 = vld [vmem:[%s473 + $0x9] sm:$0xff]
        %v960 = vstv %s656
        %v961 = vmul.f32 %v959, %v960
        %v962 = vadd.f32 %v952, %v961
        %v963 = vstv %s683
        %v964 = vmul.f32 %v959, %v963
        %v965 = vadd.f32 %v955, %v964
        %v966 = vstv %s710
        %v967 = vmul.f32 %v959, %v966
        %v968 = vadd.f32 %v958, %v967
        %v969 = vld [vmem:[%s471 + $0x9] sm:$0xff]
        %v970 = vstv %s657
        %v971 = vmul.f32 %v969, %v970
        %v972 = vadd.f32 %v962, %v971
        %v973 = vstv %s684
        %v974 = vmul.f32 %v969, %v973
        %v975 = vadd.f32 %v965, %v974
        %v976 = vstv %s711
        %v977 = vmul.f32 %v969, %v976
        %v978 = vadd.f32 %v968, %v977
        %v979 = vld [vmem:[%s475 + $0x9] sm:$0xff]
        %v980 = vstv %s658
        %v981 = vmul.f32 %v979, %v980
        %v982 = vadd.f32 %v972, %v981
        %v983 = vstv %s685
        %v984 = vmul.f32 %v979, %v983
        %v985 = vadd.f32 %v975, %v984
        %v986 = vstv %s712
        %v987 = vmul.f32 %v979, %v986
        %v988 = vadd.f32 %v978, %v987
        %v989 = vtanh.pop %v982
        %990 = vst [vmem:[%s417] sm:$0xff] %v989
        %v991 = vtanh.pop %v985
        %s992 = scalar_lea.vmem %s417, 16 [#allocation15]
        %993 = vst [vmem:[%s992] sm:$0xff] %v991
        %v994 = vtanh.pop %v988
        %s995 = scalar_lea.vmem %s417, 32 [#allocation15]
        %996 = vst [vmem:[%s995] sm:$0xff] %v994
        %v997 = vld [vmem:[#allocation2 + $0xf] sm:$0xff]
        %v998 = vmul.f32 %v997, %v720
        %v999 = vadd.f32 %v714, %v998
        %v1000 = vmul.f32 %v997, %v723
        %v1001 = vadd.f32 %v716, %v1000
        %v1002 = vmul.f32 %v997, %v726
        %v1003 = vadd.f32 %v718, %v1002
        %v1004 = vld [vmem:[#allocation3 + $0xf] sm:$0xff]
        %v1005 = vmul.f32 %v1004, %v730
        %v1006 = vadd.f32 %v999, %v1005
        %v1007 = vmul.f32 %v1004, %v733
        %v1008 = vadd.f32 %v1001, %v1007
        %v1009 = vmul.f32 %v1004, %v736
        %v1010 = vadd.f32 %v1003, %v1009
        %v1011 = vld [vmem:[#allocation4 + $0xf] sm:$0xff]
        %v1012 = vmul.f32 %v1011, %v740
        %v1013 = vadd.f32 %v1006, %v1012
        %v1014 = vmul.f32 %v1011, %v743
        %v1015 = vadd.f32 %v1008, %v1014
        %v1016 = vmul.f32 %v1011, %v746
        %v1017 = vadd.f32 %v1010, %v1016
        %v1018 = vld [vmem:[#allocation2 + $0x10] sm:$0xff]
        %v1019 = vmul.f32 %v1018, %v750
        %v1020 = vadd.f32 %v1013, %v1019
        %v1021 = vmul.f32 %v1018, %v753
        %v1022 = vadd.f32 %v1015, %v1021
        %v1023 = vmul.f32 %v1018, %v756
        %v1024 = vadd.f32 %v1017, %v1023
        %v1025 = vld [vmem:[#allocation3 + $0x10] sm:$0xff]
        %v1026 = vmul.f32 %v1025, %v760
        %v1027 = vadd.f32 %v1020, %v1026
        %v1028 = vmul.f32 %v1025, %v763
        %v1029 = vadd.f32 %v1022, %v1028
        %v1030 = vmul.f32 %v1025, %v766
        %v1031 = vadd.f32 %v1024, %v1030
        %v1032 = vld [vmem:[#allocation4 + $0x10] sm:$0xff]
        %v1033 = vmul.f32 %v1032, %v770
        %v1034 = vadd.f32 %v1027, %v1033
        %v1035 = vmul.f32 %v1032, %v773
        %v1036 = vadd.f32 %v1029, %v1035
        %v1037 = vmul.f32 %v1032, %v776
        %v1038 = vadd.f32 %v1031, %v1037
        %v1039 = vld [vmem:[#allocation2 + $0x11] sm:$0xff]
        %v1040 = vmul.f32 %v1039, %v780
        %v1041 = vadd.f32 %v1034, %v1040
        %v1042 = vmul.f32 %v1039, %v783
        %v1043 = vadd.f32 %v1036, %v1042
        %v1044 = vmul.f32 %v1039, %v786
        %v1045 = vadd.f32 %v1038, %v1044
        %v1046 = vld [vmem:[#allocation3 + $0x11] sm:$0xff]
        %v1047 = vmul.f32 %v1046, %v790
        %v1048 = vadd.f32 %v1041, %v1047
        %v1049 = vmul.f32 %v1046, %v793
        %v1050 = vadd.f32 %v1043, %v1049
        %v1051 = vmul.f32 %v1046, %v796
        %v1052 = vadd.f32 %v1045, %v1051
        %v1053 = vld [vmem:[#allocation4 + $0x11] sm:$0xff]
        %v1054 = vmul.f32 %v1053, %v800
        %v1055 = vadd.f32 %v1048, %v1054
        %v1056 = vmul.f32 %v1053, %v803
        %v1057 = vadd.f32 %v1050, %v1056
        %v1058 = vmul.f32 %v1053, %v806
        %v1059 = vadd.f32 %v1052, %v1058
        %v1060 = vld [vmem:[%s456 + $0xf] sm:$0xff]
        %v1061 = vmul.f32 %v1060, %v810
        %v1062 = vadd.f32 %v1055, %v1061
        %v1063 = vmul.f32 %v1060, %v813
        %v1064 = vadd.f32 %v1057, %v1063
        %v1065 = vmul.f32 %v1060, %v816
        %v1066 = vadd.f32 %v1059, %v1065
        %v1067 = vld [vmem:[%s454 + $0xf] sm:$0xff]
        %v1068 = vmul.f32 %v1067, %v820
        %v1069 = vadd.f32 %v1062, %v1068
        %v1070 = vmul.f32 %v1067, %v823
        %v1071 = vadd.f32 %v1064, %v1070
        %v1072 = vmul.f32 %v1067, %v826
        %v1073 = vadd.f32 %v1066, %v1072
        %v1074 = vld [vmem:[%s458 + $0xf] sm:$0xff]
        %v1075 = vmul.f32 %v1074, %v830
        %v1076 = vadd.f32 %v1069, %v1075
        %v1077 = vmul.f32 %v1074, %v833
        %v1078 = vadd.f32 %v1071, %v1077
        %v1079 = vmul.f32 %v1074, %v836
        %v1080 = vadd.f32 %v1073, %v1079
        %v1081 = vld [vmem:[%s456 + $0x10] sm:$0xff]
        %v1082 = vmul.f32 %v1081, %v840
        %v1083 = vadd.f32 %v1076, %v1082
        %v1084 = vmul.f32 %v1081, %v843
        %v1085 = vadd.f32 %v1078, %v1084
        %v1086 = vmul.f32 %v1081, %v846
        %v1087 = vadd.f32 %v1080, %v1086
        %v1088 = vld [vmem:[%s454 + $0x10] sm:$0xff]
        %v1089 = vmul.f32 %v1088, %v850
        %v1090 = vadd.f32 %v1083, %v1089
        %v1091 = vmul.f32 %v1088, %v853
        %v1092 = vadd.f32 %v1085, %v1091
        %v1093 = vmul.f32 %v1088, %v856
        %v1094 = vadd.f32 %v1087, %v1093
        %v1095 = vld [vmem:[%s458 + $0x10] sm:$0xff]
        %v1096 = vmul.f32 %v1095, %v860
        %v1097 = vadd.f32 %v1090, %v1096
        %v1098 = vmul.f32 %v1095, %v863
        %v1099 = vadd.f32 %v1092, %v1098
        %v1100 = vmul.f32 %v1095, %v866
        %v1101 = vadd.f32 %v1094, %v1100
        %v1102 = vld [vmem:[%s456 + $0x11] sm:$0xff]
        %v1103 = vmul.f32 %v1102, %v870
        %v1104 = vadd.f32 %v1097, %v1103
        %v1105 = vmul.f32 %v1102, %v873
        %v1106 = vadd.f32 %v1099, %v1105
        %v1107 = vmul.f32 %v1102, %v876
        %v1108 = vadd.f32 %v1101, %v1107
        %v1109 = vld [vmem:[%s454 + $0x11] sm:$0xff]
        %v1110 = vmul.f32 %v1109, %v880
        %v1111 = vadd.f32 %v1104, %v1110
        %v1112 = vmul.f32 %v1109, %v883
        %v1113 = vadd.f32 %v1106, %v1112
        %v1114 = vmul.f32 %v1109, %v886
        %v1115 = vadd.f32 %v1108, %v1114
        %v1116 = vld [vmem:[%s458 + $0x11] sm:$0xff]
        %v1117 = vmul.f32 %v1116, %v890
        %v1118 = vadd.f32 %v1111, %v1117
        %v1119 = vmul.f32 %v1116, %v893
        %v1120 = vadd.f32 %v1113, %v1119
        %v1121 = vmul.f32 %v1116, %v896
        %v1122 = vadd.f32 %v1115, %v1121
        %v1123 = vld [vmem:[%s473 + $0xf] sm:$0xff]
        %v1124 = vmul.f32 %v1123, %v900
        %v1125 = vadd.f32 %v1118, %v1124
        %v1126 = vmul.f32 %v1123, %v903
        %v1127 = vadd.f32 %v1120, %v1126
        %v1128 = vmul.f32 %v1123, %v906
        %v1129 = vadd.f32 %v1122, %v1128
        %v1130 = vld [vmem:[%s471 + $0xf] sm:$0xff]
        %v1131 = vmul.f32 %v1130, %v910
        %v1132 = vadd.f32 %v1125, %v1131
        %v1133 = vmul.f32 %v1130, %v913
        %v1134 = vadd.f32 %v1127, %v1133
        %v1135 = vmul.f32 %v1130, %v916
        %v1136 = vadd.f32 %v1129, %v1135
        %v1137 = vld [vmem:[%s475 + $0xf] sm:$0xff]
        %v1138 = vmul.f32 %v1137, %v920
        %v1139 = vadd.f32 %v1132, %v1138
        %v1140 = vmul.f32 %v1137, %v923
        %v1141 = vadd.f32 %v1134, %v1140
        %v1142 = vmul.f32 %v1137, %v926
        %v1143 = vadd.f32 %v1136, %v1142
        %v1144 = vld [vmem:[%s473 + $0x10] sm:$0xff]
        %v1145 = vmul.f32 %v1144, %v930
        %v1146 = vadd.f32 %v1139, %v1145
        %v1147 = vmul.f32 %v1144, %v933
        %v1148 = vadd.f32 %v1141, %v1147
        %v1149 = vmul.f32 %v1144, %v936
        %v1150 = vadd.f32 %v1143, %v1149
        %v1151 = vld [vmem:[%s471 + $0x10] sm:$0xff]
        %v1152 = vmul.f32 %v1151, %v940
        %v1153 = vadd.f32 %v1146, %v1152
        %v1154 = vmul.f32 %v1151, %v943
        %v1155 = vadd.f32 %v1148, %v1154
        %v1156 = vmul.f32 %v1151, %v946
        %v1157 = vadd.f32 %v1150, %v1156
        %v1158 = vld [vmem:[%s475 + $0x10] sm:$0xff]
        %v1159 = vmul.f32 %v1158, %v950
        %v1160 = vadd.f32 %v1153, %v1159
        %v1161 = vmul.f32 %v1158, %v953
        %v1162 = vadd.f32 %v1155, %v1161
        %v1163 = vmul.f32 %v1158, %v956
        %v1164 = vadd.f32 %v1157, %v1163
        %v1165 = vld [vmem:[%s473 + $0x11] sm:$0xff]
        %v1166 = vmul.f32 %v1165, %v960
        %v1167 = vadd.f32 %v1160, %v1166
        %v1168 = vmul.f32 %v1165, %v963
        %v1169 = vadd.f32 %v1162, %v1168
        %v1170 = vmul.f32 %v1165, %v966
        %v1171 = vadd.f32 %v1164, %v1170
        %v1172 = vld [vmem:[%s471 + $0x11] sm:$0xff]
        %v1173 = vmul.f32 %v1172, %v970
        %v1174 = vadd.f32 %v1167, %v1173
        %v1175 = vmul.f32 %v1172, %v973
        %v1176 = vadd.f32 %v1169, %v1175
        %v1177 = vmul.f32 %v1172, %v976
        %v1178 = vadd.f32 %v1171, %v1177
        %v1179 = vld [vmem:[%s475 + $0x11] sm:$0xff]
        %v1180 = vmul.f32 %v1179, %v980
        %v1181 = vadd.f32 %v1174, %v1180
        %v1182 = vmul.f32 %v1179, %v983
        %v1183 = vadd.f32 %v1176, %v1182
        %v1184 = vmul.f32 %v1179, %v986
        %v1185 = vadd.f32 %v1178, %v1184
        %v1186 = vtanh.pop %v1181
        %1187 = vst [vmem:[%s417 + $0x8] sm:$0xff] %v1186
        %v1188 = vtanh.pop %v1183
        %1189 = vst [vmem:[%s992 + $0x8] sm:$0xff] %v1188
        %v1190 = vtanh.pop %v1185
        %1191 = vst [vmem:[%s995 + $0x8] sm:$0xff] %v1190
        %s1192 = sand.u32 %s191, 1
        %s1193 = scalar_lea.sflag [#allocation7], %s1192
        %s1194 = sand.u32 %s191, 1
        %s1195 = smul.addr %s1194, 48
        %s1196 = scalar_lea.vmem [#allocation15], %s1195
        // Predicated region
        $region77: #{tpu_custom_call.1} parent=39 // pred_check
          %p1197 = pneg %p201
        $region78: #{tpu_custom_call.1} parent=39 // pred_check_branch
          %1199 = sbr.rel (%p1197) target = $region80
        $region79: #{tpu_custom_call.1} parent=39 // pred_region
          #allocation19 [shape = 'u32[6]{0}', space=smem, size = 0x18, scoped, tag = 'DMA stride descriptor']
          %s1200 = smul.u32 2, %s32
          %s1202 = ssub.s32 768, 768
          %1203 = vsyncadd %s1193, %s1202
          %s1204 = smul.addr %s31, 12
          %s1205 = sadd.s32 %s1200, %s1204
          %s1206 = smul.addr %s1205, 128
          %s1207 = scalar_lea.hbm %s5, %s1206
          %s1209 = sshll.u32 1, 14
          %s1210 = sxor.u32 4294967295, %s1209
          %s1213 = sshll.u32 7, 18
          %s1214 = sxor.u32 4294967295, %s1213
          %s1215 = sand.u32 0, %s1214
          %s1217 = sor.u32 %s1215, 0
          %s1219 = sshll.u32 3, 24
          %s1220 = sxor.u32 4294967295, %s1219
          %s1221 = sand.u32 %s1217, %s1220
          %s1223 = sor.u32 %s1221, 0
          %s1224 = sshll.u32 %s1196, 4
          %s1225 = int_to_ptr.vmem [resolvable:$true] %s1224
          %1231 = sst [smem:[#allocation19]] 256
          %s1232 = scalar_lea.smem [#allocation19], 1
          %1233 = sst [smem:[%s1232]] 512
          %s1234 = scalar_lea.smem [#allocation19], 2
          %1235 = sst [smem:[%s1234]] 2
          %s1236 = scalar_lea.smem [#allocation19], 3
          %1237 = sst [smem:[%s1236]] 128
          %s1238 = scalar_lea.smem [#allocation19], 4
          %1239 = sst [smem:[%s1238]] 128
          %s1240 = scalar_lea.smem [#allocation19], 5
          %1241 = sst [smem:[%s1240]] 8
          %1243 = dma.general %s1225, 768, %s1207, %s1193, [#allocation18], [#allocation19], %s1223, 0
        $region80: #{tpu_custom_call.1} parent=39 // pred_fallthru
          _
      $region40: #{tpu_custom_call.1} parent=5 // pred_fallthru
        _
      %p1244 = scmp.le.s32.totalorder 2, %s22
      // Predicated region
      $region81: #{tpu_custom_call.1} parent=5 // pred_check
        %p1245 = pneg %p1244
      $region82: #{tpu_custom_call.1} parent=5 // pred_check_branch
        %1247 = sbr.rel (%p1245) target = $region84
      $region83: #{tpu_custom_call.1} parent=5 // pred_region
        %s1248 = ssub.s32 %s22, 2
        // Predicated region
        $region85: #{tpu_custom_call.1} parent=83 // pred_check
          %p1249 = pneg %p207
        $region86: #{tpu_custom_call.1} parent=83 // pred_check_branch
          %1251 = sbr.rel (%p1249) target = $region88
        $region87: #{tpu_custom_call.1} parent=83 // pred_region
          %s1252 = sand.u32 %s192, 1
          %s1253 = scalar_lea.sflag [#allocation7], %s1252
          %s1254 = sand.u32 %s192, 1
          %s1255 = smul.addr %s1254, 48
          %s1256 = scalar_lea.vmem [#allocation15], %s1255
          %1257 = dma.done %s1253, 768
        $region88: #{tpu_custom_call.1} parent=83 // pred_fallthru
          _
      $region84: #{tpu_custom_call.1} parent=5 // pred_fallthru
        _
    $region6: #{tpu_custom_call.1} parent=1 // loop_footer
      %s26 = sadd.s32 1, %s22
    $region7: #{tpu_custom_call.1} parent=1 // loop_footer_branch
      %21 = sbr.rel target = $region3
    $region8: #{tpu_custom_call.1} parent=1 // loop_exit
      _
    %1258 = vsyncpa [#allocation6], 1
    %s1259 = scalar_lea.sflag [#allocation6], 1
    %1260 = vsyncpa %s1259, 1
    %1261 = vsyncpa [#allocation13], 1
    %s1262 = scalar_lea.sflag [#allocation13], 1
    %1263 = vsyncpa %s1262, 1
    %1264 = vsyncpa [#allocation7], 1
    %s1265 = scalar_lea.sflag [#allocation7], 1
    %1266 = vsyncpa %s1265, 1
    %1267 = vsyncpa [#allocation8], 1
    %s1268 = scalar_lea.sflag [#allocation8], 1
    %1269 = vsyncpa %s1268, 1
    %1270 = vsyncpa [#allocation9], 1
    %s1271 = scalar_lea.sflag [#allocation9], 1
    %1272 = vsyncpa %s1271, 1

</llo_original>
